<compile_context>
chip_gen: v7x
topology: tpu7x:2x2x1
jax: 0.10.0
libtpu: 0.0.40
codegen_flags: <defaults>
</compile_context>

<pallas_src>
import numpy as np
import jax
import jax.numpy as jnp
from jax import lax
from jax.experimental import pallas as pl
from jax.experimental.pallas import tpu as pltpu


# Architecture constants fixed by the PyTorch module.
_CONV1 = (32, 8, 4)   # (out_channels, kernel, stride)
_CONV2 = (64, 4, 2)
_CONV3 = (64, 3, 1)
_FC_HIDDEN = 512


def _conv_out(n, k, s):
    return (n - k) // s + 1


def _round_up(n, m):
    return ((n + m - 1) // m) * m


# ----------------------------- fused Pallas kernel ---------------------------

def _dqn_kernel(p1_ref, w1_ref, b1_ref, w2_ref, b2_ref, w3_ref, b3_ref,
                wf1_ref, bf1_ref, wf2_ref, bf2_ref, o_ref, flat_ref):
    """Whole DQN forward in one kernel; only the padded Q-values leave VMEM."""

    def dot(a, b):
        return jnp.dot(a, b, preferred_element_type=jnp.float32)

    n_tap, _, c2 = w2_ref.shape            # 16 conv2 taps, 64 conv2 channels
    rows_pad = p1_ref.shape[0] // n_tap    # per-tap (8-aligned) row-block size
    n_pos = w3_ref.shape[0] // c2          # conv3 im2col positions (= h2*w2 = 9)
    batch = o_ref.shape[0]

    # conv1: one im2col GEMM over the tap-ordered duplicated patch rows.
    h1 = jnp.maximum(dot(p1_ref[...], w1_ref[...]) + b1_ref[...], 0.0)

    # conv2: tap-sum.  Each tap's LHS is a static, 8-aligned, contiguous row
    # block of h1 (pure addressing, no gather matmul) -- only the real
    # (rows, 32) @ (32, 64) matmuls hit the MXU.
    acc2 = jnp.zeros((rows_pad, c2), jnp.float32)
    for t in range(n_tap):                                   # static unroll
        acc2 = acc2 + dot(h1[t * rows_pad:(t + 1) * rows_pad, :], w2_ref[t])
    h2 = jnp.maximum(acc2 + b2_ref[...], 0.0)                # rows = (b, y2*W2+x2)

    # Torch NCHW flatten realized as cheap VMEM scratch stores (vst/VPU/XLU
    # slots), letting conv3 and fc1 collapse to plain dense GEMMs.
    for b in range(batch):
        for s in range(n_pos):
            flat_ref[b:b + 1, s * c2:(s + 1) * c2] = (
                h2[b * n_pos + s:b * n_pos + s + 1, :])

    # conv3 (folded with the flatten) + fc1 + fc2 (lane-padded output).
    h3 = jnp.maximum(dot(flat_ref[...], w3_ref[...]) + b3_ref[...], 0.0)
    hf = jnp.maximum(dot(h3, wf1_ref[...]) + bf1_ref[...], 0.0)
    o_ref[...] = (dot(hf, wf2_ref[...]) + bf2_ref[...]).astype(o_ref.dtype)


def _full_block(shape):
    shape = tuple(int(d) for d in shape)
    return pl.BlockSpec(shape, lambda: (0,) * len(shape))


def dqn_forward_fused(x, prep, *, num_actions):
    """x: [B, C, H, W] float32; prep: output of prepare_fused_params (same B)."""
    B = x.shape[0]
    _, k1, s1 = _CONV1

    # conv1 im2col in ONE XLA op, channel-minor output => no wrapper transpose.
    patches = lax.conv_general_dilated_patches(
        x, filter_shape=(k1, k1), window_strides=(s1, s1), padding="VALID",
        dimension_numbers=("NCHW", "OIHW", "NHWC"),
        precision=lax.Precision.HIGHEST)
    p1 = patches.reshape(-1, patches.shape[-1])          # rows = (b, y1, x1)

    # The only gather in the forward: tap-ordered, per-tap 8-row-padded
    # duplication of the conv1 patch rows.  Replaces the former 16+9 MXU
    # 0/1 "sel" matmuls; O(B) memory and work.
    p1_dup = jnp.take(p1, prep["gather_idx"], axis=0)

    args = (p1_dup, prep["w1"], prep["b1"], prep["w2"], prep["b2"],
            prep["w3"], prep["b3"], prep["wf1"], prep["bf1"],
            prep["wf2"], prep["bf2"])
    na_pad = prep["wf2"].shape[1]
    c2 = prep["w2"].shape[2]
    n_pos = prep["w3"].shape[0] // c2
    rows_pad = p1_dup.shape[0] // prep["w2"].shape[0]

    # Advisory cost estimate (helps XLA schedule around the call).
    flops = 2 * p1_dup.shape[0] * p1_dup.shape[1] * prep["w1"].shape[1]
    flops += prep["w2"].shape[0] * 2 * rows_pad * prep["w2"].shape[1] * c2
    flops += 2 * B * prep["w3"].shape[0] * prep["w3"].shape[1]
    flops += 2 * B * prep["wf1"].shape[0] * prep["wf1"].shape[1]
    flops += 2 * B * prep["wf2"].shape[0] * na_pad
    bytes_accessed = sum(int(a.size) * a.dtype.itemsize for a in args)
    bytes_accessed += B * na_pad * 4

    q_pad = pl.pallas_call(
        _dqn_kernel,
        out_shape=jax.ShapeDtypeStruct((B, na_pad), jnp.float32),
        in_specs=[_full_block(a.shape) for a in args],
        out_specs=_full_block((B, na_pad)),
        scratch_shapes=[pltpu.VMEM((B, n_pos * c2), jnp.float32)],
        cost_estimate=pl.CostEstimate(flops=int(flops), transcendentals=0,
                                      bytes_accessed=int(bytes_accessed)),
    )(*args)
    # Real actions sliced outside the kernel (store stays lane-dense inside).
    return q_pad[:, :num_actions]


# --------------------------- params & one-time prep --------------------------

def init_params(key, input_shape, num_actions):
    c, h, w = input_shape
    oc1, k1, s1 = _CONV1
    oc2, k2, s2 = _CONV2
    oc3, k3, s3 = _CONV3
    h1, w1 = _conv_out(h, k1, s1), _conv_out(w, k1, s1)
    h2, w2 = _conv_out(h1, k2, s2), _conv_out(w1, k2, s2)
    h3, w3 = _conv_out(h2, k3, s3), _conv_out(w2, k3, s3)
    conv_out_size = oc3 * h3 * w3

    ks = jax.random.split(key, 10)

    def rnd(k, shape, scale=0.05):
        return scale * jax.random.normal(k, shape, dtype=jnp.float32)

    params = {
        "conv1_w": rnd(ks[0], (oc1, c, k1, k1)), "conv1_b": rnd(ks[1], (oc1,)),
        "conv2_w": rnd(ks[2], (oc2, oc1, k2, k2)), "conv2_b": rnd(ks[3], (oc2,)),
        "conv3_w": rnd(ks[4], (oc3, oc2, k3, k3)), "conv3_b": rnd(ks[5], (oc3,)),
        # torch Linear layout: [out_features, in_features]
        "fc1_w": rnd(ks[6], (_FC_HIDDEN, conv_out_size)), "fc1_b": rnd(ks[7], (_FC_HIDDEN,)),
        "fc2_w": rnd(ks[8], (num_actions, _FC_HIDDEN)), "fc2_b": rnd(ks[9], (num_actions,)),
    }
    return params, conv_out_size


def _patch_feature_perm(c, kh, kw):
    """Feature ordering of conv_general_dilated_patches (channel-minor out),
    derived from a probe so no assumption about the internal ordering is made."""
    probe = jnp.arange(c * kh * kw, dtype=jnp.float32).reshape(1, c, kh, kw)
    out = lax.conv_general_dilated_patches(
        probe, filter_shape=(kh, kw), window_strides=(kh, kw), padding="VALID",
        dimension_numbers=("NCHW", "OIHW", "NHWC"),
        precision=lax.Precision.HIGHEST)
    return jnp.round(out.reshape(-1)).astype(jnp.int32)


def _make_gather_index(batch, h1, w1, k, stride, rows_pad):
    """Tap-ordered conv2-im2col row gather into the conv1 patch-row grid.
    Layout: [tap t = i*k + j][slot r = (b*OH + y2)*OW + x2] -> conv1 row
    (b*h1 + stride*y2 + i)*w1 + (stride*x2 + j).  Slots are padded per tap to
    `rows_pad` (multiple of 8) so every tap is an 8-aligned block in-kernel."""
    oh, ow = _conv_out(h1, k, stride), _conv_out(w1, k, stride)
    idx = np.zeros((k * k, rows_pad), np.int32)       # pad slots point at row 0
    for i in range(k):
        for j in range(k):
            t = i * k + j
            for b in range(batch):
                for y in range(oh):
                    for xx in range(ow):
                        r = (b * oh + y) * ow + xx
                        idx[t, r] = (b * h1 + y * stride + i) * w1 + (xx * stride + j)
    return jnp.asarray(idx.reshape(-1))


def prepare_fused_params(params, input_shape, batch):
    """One-time repack of torch-layout params into kernel-ready layout."""
    c, h, w = input_shape
    oc1, k1, s1 = _CONV1
    oc2, k2, s2 = _CONV2
    oc3, k3, s3 = _CONV3
    h1, w1 = _conv_out(h, k1, s1), _conv_out(w, k1, s1)
    h2, w2 = _conv_out(h1, k2, s2), _conv_out(w1, k2, s2)
    h3, w3 = _conv_out(h2, k3, s3), _conv_out(w2, k3, s3)
    assert h3 == 1 and w3 == 1, (
        "prepare_fused_params folds conv3 + the NCHW flatten into one GEMM, "
        "which assumes conv3 produces a 1x1 spatial map (true for 36x36 input)")
    rows_pad = _round_up(batch * h2 * w2, 8)

    # conv1 as an im2col weight matrix, columns permuted to match the patch op.
    perm = _patch_feature_perm(c, k1, k1)
    w1mat = jnp.take(params["conv1_w"].reshape(oc1, -1), perm, axis=1).T
    # conv2 weights as per-tap [Cin, Cout] matrices, tap = i*K + j.
    w2taps = params["conv2_w"].transpose(2, 3, 1, 0).reshape(k2 * k2, oc1, oc2)
    # conv3 folded with the flatten: row = (y2*W2 + x2)*oc2 + c_in.
    w3mat = params["conv3_w"].transpose(2, 3, 1, 0).reshape(k3 * k3 * oc2, oc3)
    wf1 = params["fc1_w"].T                       # (conv_out=64, 512)
    # fc2 padded to 128 lanes so the kernel's output store is lane-dense.
    na = params["fc2_w"].shape[0]
    na_pad = _round_up(max(na, 1), 128)
    wf2p = jnp.zeros((_FC_HIDDEN, na_pad), jnp.float32).at[:, :na].set(params["fc2_w"].T)
    bf2p = jnp.zeros((1, na_pad), jnp.float32).at[0, :na].set(params["fc2_b"])

    f32 = lambda a: jnp.asarray(a, jnp.float32)
    return {
        "gather_idx": _make_gather_index(batch, h1, w1, k2, s2, rows_pad),
        "w1": f32(w1mat), "b1": f32(params["conv1_b"].reshape(1, oc1)),
        "w2": f32(w2taps), "b2": f32(params["conv2_b"].reshape(1, oc2)),
        "w3": f32(w3mat), "b3": f32(params["conv3_b"].reshape(1, oc3)),
        "wf1": f32(wf1), "bf1": f32(params["fc1_b"].reshape(1, _FC_HIDDEN)),
        "wf2": f32(wf2p), "bf2": f32(bf2p),
    }


# ------------------------------ pure-JAX reference ---------------------------

def reference_forward(x, p):
    hp = lax.Precision.HIGHEST

    def conv(z, w, b, s):
        y = lax.conv_general_dilated(z, w, (s, s), "VALID",
                                     dimension_numbers=("NCHW", "OIHW", "NCHW"),
                                     precision=hp)
        return jnp.maximum(y + b[None, :, None, None], 0.0)

    h = conv(x, p["conv1_w"], p["conv1_b"], 4)
    h = conv(h, p["conv2_w"], p["conv2_b"], 2)
    h = conv(h, p["conv3_w"], p["conv3_b"], 1)
    f = h.reshape(h.shape[0], -1)                       # torch x.view(B, -1)
    hfc = jnp.maximum(jnp.dot(f, p["fc1_w"].T, precision=hp) + p["fc1_b"], 0.0)
    return jnp.dot(hfc, p["fc2_w"].T, precision=hp) + p["fc2_b"]


# ----------------------------------- main ------------------------------------

if __name__ == "__main__":
    # Smallest spatial size this conv stack supports: 36 -> 8 -> 3 -> 1.
    input_shape = (4, 36, 36)   # (C, H, W)
    num_actions = 6
    batch = 2

    key = jax.random.PRNGKey(0)
    k_param, k_input = jax.random.split(key)
    params, conv_out_size = init_params(k_param, input_shape, num_actions)
    prep = prepare_fused_params(params, input_shape, batch)

    x = jax.random.normal(k_input, (batch,) + input_shape, dtype=jnp.float32)

    fwd = jax.jit(dqn_forward_fused, static_argnames=("num_actions",))
    q = jax.block_until_ready(fwd(x, prep, num_actions=num_actions))

    q_ref = reference_forward(x, params)
    assert q.shape == (batch, num_actions)
    max_err = float(jnp.max(jnp.abs(q - q_ref)))
    assert jnp.allclose(q, q_ref, atol=3e-3, rtol=3e-3), (
        f"mismatch: max abs err = {max_err}")

    print("KERNEL_OK")
</pallas_src>

<mosaic_0001>
module attributes {stable_mosaic.version = 11 : i64} {
  func.func @_dqn_kernel(%arg0: memref<384x256xf32, #tpu.memory_space<vmem>>, %arg1: memref<256x32xf32, #tpu.memory_space<vmem>>, %arg2: memref<1x32xf32, #tpu.memory_space<vmem>>, %arg3: memref<16x32x64xf32, #tpu.memory_space<vmem>>, %arg4: memref<1x64xf32, #tpu.memory_space<vmem>>, %arg5: memref<576x64xf32, #tpu.memory_space<vmem>>, %arg6: memref<1x64xf32, #tpu.memory_space<vmem>>, %arg7: memref<64x512xf32, #tpu.memory_space<vmem>>, %arg8: memref<1x512xf32, #tpu.memory_space<vmem>>, %arg9: memref<512x128xf32, #tpu.memory_space<vmem>>, %arg10: memref<1x128xf32, #tpu.memory_space<vmem>>, %arg11: memref<2x128xf32, #tpu.memory_space<vmem>>, %arg12: memref<2x576xf32, #tpu.memory_space<vmem>>) attributes {dimension_semantics = [], scalar_prefetch = 0 : i64, scratch_operands = 1 : i64, tpu.core_type = #tpu.core_type<tc>} {
    %c0 = arith.constant 0 : index
    %c0_0 = arith.constant 0 : index
    %0 = vector.load %arg0[%c0, %c0_0] : memref<384x256xf32, #tpu.memory_space<vmem>>, vector<384x256xf32>
    %c0_1 = arith.constant 0 : index
    %c0_2 = arith.constant 0 : index
    %1 = vector.load %arg1[%c0_1, %c0_2] : memref<256x32xf32, #tpu.memory_space<vmem>>, vector<256x32xf32>
    %cst = arith.constant dense<0.000000e+00> : vector<384x32xf32>
    %2 = tpu.matmul %0, %1, %cst {dimension_numbers = #tpu.dot_dimension_numbers<[1], [0], [0], [1], [0, 0, 1, 1], [], []>} : vector<384x256xf32>, vector<256x32xf32>, vector<384x32xf32> -> vector<384x32xf32>
    %c0_3 = arith.constant 0 : index
    %c0_4 = arith.constant 0 : index
    %3 = vector.load %arg2[%c0_3, %c0_4] : memref<1x32xf32, #tpu.memory_space<vmem>>, vector<1x32xf32>
    %4 = vector.broadcast %3 : vector<1x32xf32> to vector<384x32xf32>
    %5 = arith.addf %2, %4 : vector<384x32xf32>
    %cst_5 = arith.constant 0.000000e+00 : f32
    %6 = vector.broadcast %cst_5 : f32 to vector<384x32xf32>
    %7 = arith.maximumf %5, %6 : vector<384x32xf32>
    %cst_6 = arith.constant 0.000000e+00 : f32
    %8 = vector.broadcast %cst_6 : f32 to vector<24x64xf32>
    %9 = vector.extract_strided_slice %7 {offsets = [0, 0], sizes = [24, 32], strides = [1, 1]} : vector<384x32xf32> to vector<24x32xf32>
    %c0_7 = arith.constant 0 : index
    %c0_8 = arith.constant 0 : index
    %c0_9 = arith.constant 0 : index
    %10 = vector.load %arg3[%c0_7, %c0_8, %c0_9] : memref<16x32x64xf32, #tpu.memory_space<vmem>>, vector<1x32x64xf32>
    %11 = vector.shape_cast %10 : vector<1x32x64xf32> to vector<32x64xf32>
    %cst_10 = arith.constant dense<0.000000e+00> : vector<24x64xf32>
    %12 = tpu.matmul %9, %11, %cst_10 {dimension_numbers = #tpu.dot_dimension_numbers<[1], [0], [0], [1], [0, 0, 1, 1], [], []>} : vector<24x32xf32>, vector<32x64xf32>, vector<24x64xf32> -> vector<24x64xf32>
    %13 = arith.addf %8, %12 : vector<24x64xf32>
    %14 = vector.extract_strided_slice %7 {offsets = [24, 0], sizes = [24, 32], strides = [1, 1]} : vector<384x32xf32> to vector<24x32xf32>
    %c1 = arith.constant 1 : index
    %c0_11 = arith.constant 0 : index
    %c0_12 = arith.constant 0 : index
    %15 = vector.load %arg3[%c1, %c0_11, %c0_12] : memref<16x32x64xf32, #tpu.memory_space<vmem>>, vector<1x32x64xf32>
    %16 = vector.shape_cast %15 : vector<1x32x64xf32> to vector<32x64xf32>
    %cst_13 = arith.constant dense<0.000000e+00> : vector<24x64xf32>
    %17 = tpu.matmul %14, %16, %cst_13 {dimension_numbers = #tpu.dot_dimension_numbers<[1], [0], [0], [1], [0, 0, 1, 1], [], []>} : vector<24x32xf32>, vector<32x64xf32>, vector<24x64xf32> -> vector<24x64xf32>
    %18 = arith.addf %13, %17 : vector<24x64xf32>
    %19 = vector.extract_strided_slice %7 {offsets = [48, 0], sizes = [24, 32], strides = [1, 1]} : vector<384x32xf32> to vector<24x32xf32>
    %c2 = arith.constant 2 : index
    %c0_14 = arith.constant 0 : index
    %c0_15 = arith.constant 0 : index
    %20 = vector.load %arg3[%c2, %c0_14, %c0_15] : memref<16x32x64xf32, #tpu.memory_space<vmem>>, vector<1x32x64xf32>
    %21 = vector.shape_cast %20 : vector<1x32x64xf32> to vector<32x64xf32>
    %cst_16 = arith.constant dense<0.000000e+00> : vector<24x64xf32>
    %22 = tpu.matmul %19, %21, %cst_16 {dimension_numbers = #tpu.dot_dimension_numbers<[1], [0], [0], [1], [0, 0, 1, 1], [], []>} : vector<24x32xf32>, vector<32x64xf32>, vector<24x64xf32> -> vector<24x64xf32>
    %23 = arith.addf %18, %22 : vector<24x64xf32>
    %24 = vector.extract_strided_slice %7 {offsets = [72, 0], sizes = [24, 32], strides = [1, 1]} : vector<384x32xf32> to vector<24x32xf32>
    %c3 = arith.constant 3 : index
    %c0_17 = arith.constant 0 : index
    %c0_18 = arith.constant 0 : index
    %25 = vector.load %arg3[%c3, %c0_17, %c0_18] : memref<16x32x64xf32, #tpu.memory_space<vmem>>, vector<1x32x64xf32>
    %26 = vector.shape_cast %25 : vector<1x32x64xf32> to vector<32x64xf32>
    %cst_19 = arith.constant dense<0.000000e+00> : vector<24x64xf32>
    %27 = tpu.matmul %24, %26, %cst_19 {dimension_numbers = #tpu.dot_dimension_numbers<[1], [0], [0], [1], [0, 0, 1, 1], [], []>} : vector<24x32xf32>, vector<32x64xf32>, vector<24x64xf32> -> vector<24x64xf32>
    %28 = arith.addf %23, %27 : vector<24x64xf32>
    %29 = vector.extract_strided_slice %7 {offsets = [96, 0], sizes = [24, 32], strides = [1, 1]} : vector<384x32xf32> to vector<24x32xf32>
    %c4 = arith.constant 4 : index
    %c0_20 = arith.constant 0 : index
    %c0_21 = arith.constant 0 : index
    %30 = vector.load %arg3[%c4, %c0_20, %c0_21] : memref<16x32x64xf32, #tpu.memory_space<vmem>>, vector<1x32x64xf32>
    %31 = vector.shape_cast %30 : vector<1x32x64xf32> to vector<32x64xf32>
    %cst_22 = arith.constant dense<0.000000e+00> : vector<24x64xf32>
    %32 = tpu.matmul %29, %31, %cst_22 {dimension_numbers = #tpu.dot_dimension_numbers<[1], [0], [0], [1], [0, 0, 1, 1], [], []>} : vector<24x32xf32>, vector<32x64xf32>, vector<24x64xf32> -> vector<24x64xf32>
    %33 = arith.addf %28, %32 : vector<24x64xf32>
    %34 = vector.extract_strided_slice %7 {offsets = [120, 0], sizes = [24, 32], strides = [1, 1]} : vector<384x32xf32> to vector<24x32xf32>
    %c5 = arith.constant 5 : index
    %c0_23 = arith.constant 0 : index
    %c0_24 = arith.constant 0 : index
    %35 = vector.load %arg3[%c5, %c0_23, %c0_24] : memref<16x32x64xf32, #tpu.memory_space<vmem>>, vector<1x32x64xf32>
    %36 = vector.shape_cast %35 : vector<1x32x64xf32> to vector<32x64xf32>
    %cst_25 = arith.constant dense<0.000000e+00> : vector<24x64xf32>
    %37 = tpu.matmul %34, %36, %cst_25 {dimension_numbers = #tpu.dot_dimension_numbers<[1], [0], [0], [1], [0, 0, 1, 1], [], []>} : vector<24x32xf32>, vector<32x64xf32>, vector<24x64xf32> -> vector<24x64xf32>
    %38 = arith.addf %33, %37 : vector<24x64xf32>
    %39 = vector.extract_strided_slice %7 {offsets = [144, 0], sizes = [24, 32], strides = [1, 1]} : vector<384x32xf32> to vector<24x32xf32>
    %c6 = arith.constant 6 : index
    %c0_26 = arith.constant 0 : index
    %c0_27 = arith.constant 0 : index
    %40 = vector.load %arg3[%c6, %c0_26, %c0_27] : memref<16x32x64xf32, #tpu.memory_space<vmem>>, vector<1x32x64xf32>
    %41 = vector.shape_cast %40 : vector<1x32x64xf32> to vector<32x64xf32>
    %cst_28 = arith.constant dense<0.000000e+00> : vector<24x64xf32>
    %42 = tpu.matmul %39, %41, %cst_28 {dimension_numbers = #tpu.dot_dimension_numbers<[1], [0], [0], [1], [0, 0, 1, 1], [], []>} : vector<24x32xf32>, vector<32x64xf32>, vector<24x64xf32> -> vector<24x64xf32>
    %43 = arith.addf %38, %42 : vector<24x64xf32>
    %44 = vector.extract_strided_slice %7 {offsets = [168, 0], sizes = [24, 32], strides = [1, 1]} : vector<384x32xf32> to vector<24x32xf32>
    %c7 = arith.constant 7 : index
    %c0_29 = arith.constant 0 : index
    %c0_30 = arith.constant 0 : index
    %45 = vector.load %arg3[%c7, %c0_29, %c0_30] : memref<16x32x64xf32, #tpu.memory_space<vmem>>, vector<1x32x64xf32>
    %46 = vector.shape_cast %45 : vector<1x32x64xf32> to vector<32x64xf32>
    %cst_31 = arith.constant dense<0.000000e+00> : vector<24x64xf32>
    %47 = tpu.matmul %44, %46, %cst_31 {dimension_numbers = #tpu.dot_dimension_numbers<[1], [0], [0], [1], [0, 0, 1, 1], [], []>} : vector<24x32xf32>, vector<32x64xf32>, vector<24x64xf32> -> vector<24x64xf32>
    %48 = arith.addf %43, %47 : vector<24x64xf32>
    %49 = vector.extract_strided_slice %7 {offsets = [192, 0], sizes = [24, 32], strides = [1, 1]} : vector<384x32xf32> to vector<24x32xf32>
    %c8 = arith.constant 8 : index
    %c0_32 = arith.constant 0 : index
    %c0_33 = arith.constant 0 : index
    %50 = vector.load %arg3[%c8, %c0_32, %c0_33] : memref<16x32x64xf32, #tpu.memory_space<vmem>>, vector<1x32x64xf32>
    %51 = vector.shape_cast %50 : vector<1x32x64xf32> to vector<32x64xf32>
    %cst_34 = arith.constant dense<0.000000e+00> : vector<24x64xf32>
    %52 = tpu.matmul %49, %51, %cst_34 {dimension_numbers = #tpu.dot_dimension_numbers<[1], [0], [0], [1], [0, 0, 1, 1], [], []>} : vector<24x32xf32>, vector<32x64xf32>, vector<24x64xf32> -> vector<24x64xf32>
    %53 = arith.addf %48, %52 : vector<24x64xf32>
    %54 = vector.extract_strided_slice %7 {offsets = [216, 0], sizes = [24, 32], strides = [1, 1]} : vector<384x32xf32> to vector<24x32xf32>
    %c9 = arith.constant 9 : index
    %c0_35 = arith.constant 0 : index
    %c0_36 = arith.constant 0 : index
    %55 = vector.load %arg3[%c9, %c0_35, %c0_36] : memref<16x32x64xf32, #tpu.memory_space<vmem>>, vector<1x32x64xf32>
    %56 = vector.shape_cast %55 : vector<1x32x64xf32> to vector<32x64xf32>
    %cst_37 = arith.constant dense<0.000000e+00> : vector<24x64xf32>
    %57 = tpu.matmul %54, %56, %cst_37 {dimension_numbers = #tpu.dot_dimension_numbers<[1], [0], [0], [1], [0, 0, 1, 1], [], []>} : vector<24x32xf32>, vector<32x64xf32>, vector<24x64xf32> -> vector<24x64xf32>
    %58 = arith.addf %53, %57 : vector<24x64xf32>
    %59 = vector.extract_strided_slice %7 {offsets = [240, 0], sizes = [24, 32], strides = [1, 1]} : vector<384x32xf32> to vector<24x32xf32>
    %c10 = arith.constant 10 : index
    %c0_38 = arith.constant 0 : index
    %c0_39 = arith.constant 0 : index
    %60 = vector.load %arg3[%c10, %c0_38, %c0_39] : memref<16x32x64xf32, #tpu.memory_space<vmem>>, vector<1x32x64xf32>
    %61 = vector.shape_cast %60 : vector<1x32x64xf32> to vector<32x64xf32>
    %cst_40 = arith.constant dense<0.000000e+00> : vector<24x64xf32>
    %62 = tpu.matmul %59, %61, %cst_40 {dimension_numbers = #tpu.dot_dimension_numbers<[1], [0], [0], [1], [0, 0, 1, 1], [], []>} : vector<24x32xf32>, vector<32x64xf32>, vector<24x64xf32> -> vector<24x64xf32>
    %63 = arith.addf %58, %62 : vector<24x64xf32>
    %64 = vector.extract_strided_slice %7 {offsets = [264, 0], sizes = [24, 32], strides = [1, 1]} : vector<384x32xf32> to vector<24x32xf32>
    %c11 = arith.constant 11 : index
    %c0_41 = arith.constant 0 : index
    %c0_42 = arith.constant 0 : index
    %65 = vector.load %arg3[%c11, %c0_41, %c0_42] : memref<16x32x64xf32, #tpu.memory_space<vmem>>, vector<1x32x64xf32>
    %66 = vector.shape_cast %65 : vector<1x32x64xf32> to vector<32x64xf32>
    %cst_43 = arith.constant dense<0.000000e+00> : vector<24x64xf32>
    %67 = tpu.matmul %64, %66, %cst_43 {dimension_numbers = #tpu.dot_dimension_numbers<[1], [0], [0], [1], [0, 0, 1, 1], [], []>} : vector<24x32xf32>, vector<32x64xf32>, vector<24x64xf32> -> vector<24x64xf32>
    %68 = arith.addf %63, %67 : vector<24x64xf32>
    %69 = vector.extract_strided_slice %7 {offsets = [288, 0], sizes = [24, 32], strides = [1, 1]} : vector<384x32xf32> to vector<24x32xf32>
    %c12 = arith.constant 12 : index
    %c0_44 = arith.constant 0 : index
    %c0_45 = arith.constant 0 : index
    %70 = vector.load %arg3[%c12, %c0_44, %c0_45] : memref<16x32x64xf32, #tpu.memory_space<vmem>>, vector<1x32x64xf32>
    %71 = vector.shape_cast %70 : vector<1x32x64xf32> to vector<32x64xf32>
    %cst_46 = arith.constant dense<0.000000e+00> : vector<24x64xf32>
    %72 = tpu.matmul %69, %71, %cst_46 {dimension_numbers = #tpu.dot_dimension_numbers<[1], [0], [0], [1], [0, 0, 1, 1], [], []>} : vector<24x32xf32>, vector<32x64xf32>, vector<24x64xf32> -> vector<24x64xf32>
    %73 = arith.addf %68, %72 : vector<24x64xf32>
    %74 = vector.extract_strided_slice %7 {offsets = [312, 0], sizes = [24, 32], strides = [1, 1]} : vector<384x32xf32> to vector<24x32xf32>
    %c13 = arith.constant 13 : index
    %c0_47 = arith.constant 0 : index
    %c0_48 = arith.constant 0 : index
    %75 = vector.load %arg3[%c13, %c0_47, %c0_48] : memref<16x32x64xf32, #tpu.memory_space<vmem>>, vector<1x32x64xf32>
    %76 = vector.shape_cast %75 : vector<1x32x64xf32> to vector<32x64xf32>
    %cst_49 = arith.constant dense<0.000000e+00> : vector<24x64xf32>
    %77 = tpu.matmul %74, %76, %cst_49 {dimension_numbers = #tpu.dot_dimension_numbers<[1], [0], [0], [1], [0, 0, 1, 1], [], []>} : vector<24x32xf32>, vector<32x64xf32>, vector<24x64xf32> -> vector<24x64xf32>
    %78 = arith.addf %73, %77 : vector<24x64xf32>
    %79 = vector.extract_strided_slice %7 {offsets = [336, 0], sizes = [24, 32], strides = [1, 1]} : vector<384x32xf32> to vector<24x32xf32>
    %c14 = arith.constant 14 : index
    %c0_50 = arith.constant 0 : index
    %c0_51 = arith.constant 0 : index
    %80 = vector.load %arg3[%c14, %c0_50, %c0_51] : memref<16x32x64xf32, #tpu.memory_space<vmem>>, vector<1x32x64xf32>
    %81 = vector.shape_cast %80 : vector<1x32x64xf32> to vector<32x64xf32>
    %cst_52 = arith.constant dense<0.000000e+00> : vector<24x64xf32>
    %82 = tpu.matmul %79, %81, %cst_52 {dimension_numbers = #tpu.dot_dimension_numbers<[1], [0], [0], [1], [0, 0, 1, 1], [], []>} : vector<24x32xf32>, vector<32x64xf32>, vector<24x64xf32> -> vector<24x64xf32>
    %83 = arith.addf %78, %82 : vector<24x64xf32>
    %84 = vector.extract_strided_slice %7 {offsets = [360, 0], sizes = [24, 32], strides = [1, 1]} : vector<384x32xf32> to vector<24x32xf32>
    %c15 = arith.constant 15 : index
    %c0_53 = arith.constant 0 : index
    %c0_54 = arith.constant 0 : index
    %85 = vector.load %arg3[%c15, %c0_53, %c0_54] : memref<16x32x64xf32, #tpu.memory_space<vmem>>, vector<1x32x64xf32>
    %86 = vector.shape_cast %85 : vector<1x32x64xf32> to vector<32x64xf32>
    %cst_55 = arith.constant dense<0.000000e+00> : vector<24x64xf32>
    %87 = tpu.matmul %84, %86, %cst_55 {dimension_numbers = #tpu.dot_dimension_numbers<[1], [0], [0], [1], [0, 0, 1, 1], [], []>} : vector<24x32xf32>, vector<32x64xf32>, vector<24x64xf32> -> vector<24x64xf32>
    %88 = arith.addf %83, %87 : vector<24x64xf32>
    %c0_56 = arith.constant 0 : index
    %c0_57 = arith.constant 0 : index
    %89 = vector.load %arg4[%c0_56, %c0_57] : memref<1x64xf32, #tpu.memory_space<vmem>>, vector<1x64xf32>
    %90 = vector.broadcast %89 : vector<1x64xf32> to vector<24x64xf32>
    %91 = arith.addf %88, %90 : vector<24x64xf32>
    %cst_58 = arith.constant 0.000000e+00 : f32
    %92 = vector.broadcast %cst_58 : f32 to vector<24x64xf32>
    %93 = arith.maximumf %91, %92 : vector<24x64xf32>
    %94 = vector.extract_strided_slice %93 {offsets = [0, 0], sizes = [1, 64], strides = [1, 1]} : vector<24x64xf32> to vector<1x64xf32>
    %c0_59 = arith.constant 0 : index
    %c0_60 = arith.constant 0 : index
    %95 = vector.load %arg12[%c0_59, %c0_60] : memref<2x576xf32, #tpu.memory_space<vmem>>, vector<1x64xf32>
    tpu.vector_store %arg12[%c0_59, %c0_60], %94 {strides = array<i32>} : memref<2x576xf32, #tpu.memory_space<vmem>>, vector<1x64xf32>,
    %96 = vector.extract_strided_slice %93 {offsets = [1, 0], sizes = [1, 64], strides = [1, 1]} : vector<24x64xf32> to vector<1x64xf32>
    %c0_61 = arith.constant 0 : index
    %c64 = arith.constant 64 : index
    %97 = vector.load %arg12[%c0_61, %c64] : memref<2x576xf32, #tpu.memory_space<vmem>>, vector<1x64xf32>
    tpu.vector_store %arg12[%c0_61, %c64], %96 {strides = array<i32>} : memref<2x576xf32, #tpu.memory_space<vmem>>, vector<1x64xf32>,
    %98 = vector.extract_strided_slice %93 {offsets = [2, 0], sizes = [1, 64], strides = [1, 1]} : vector<24x64xf32> to vector<1x64xf32>
    %c0_62 = arith.constant 0 : index
    %c128 = arith.constant 128 : index
    %99 = vector.load %arg12[%c0_62, %c128] : memref<2x576xf32, #tpu.memory_space<vmem>>, vector<1x64xf32>
    tpu.vector_store %arg12[%c0_62, %c128], %98 {strides = array<i32>} : memref<2x576xf32, #tpu.memory_space<vmem>>, vector<1x64xf32>,
    %100 = vector.extract_strided_slice %93 {offsets = [3, 0], sizes = [1, 64], strides = [1, 1]} : vector<24x64xf32> to vector<1x64xf32>
    %c0_63 = arith.constant 0 : index
    %c192 = arith.constant 192 : index
    %101 = vector.load %arg12[%c0_63, %c192] : memref<2x576xf32, #tpu.memory_space<vmem>>, vector<1x64xf32>
    tpu.vector_store %arg12[%c0_63, %c192], %100 {strides = array<i32>} : memref<2x576xf32, #tpu.memory_space<vmem>>, vector<1x64xf32>,
    %102 = vector.extract_strided_slice %93 {offsets = [4, 0], sizes = [1, 64], strides = [1, 1]} : vector<24x64xf32> to vector<1x64xf32>
    %c0_64 = arith.constant 0 : index
    %c256 = arith.constant 256 : index
    %103 = vector.load %arg12[%c0_64, %c256] : memref<2x576xf32, #tpu.memory_space<vmem>>, vector<1x64xf32>
    tpu.vector_store %arg12[%c0_64, %c256], %102 {strides = array<i32>} : memref<2x576xf32, #tpu.memory_space<vmem>>, vector<1x64xf32>,
    %104 = vector.extract_strided_slice %93 {offsets = [5, 0], sizes = [1, 64], strides = [1, 1]} : vector<24x64xf32> to vector<1x64xf32>
    %c0_65 = arith.constant 0 : index
    %c320 = arith.constant 320 : index
    %105 = vector.load %arg12[%c0_65, %c320] : memref<2x576xf32, #tpu.memory_space<vmem>>, vector<1x64xf32>
    tpu.vector_store %arg12[%c0_65, %c320], %104 {strides = array<i32>} : memref<2x576xf32, #tpu.memory_space<vmem>>, vector<1x64xf32>,
    %106 = vector.extract_strided_slice %93 {offsets = [6, 0], sizes = [1, 64], strides = [1, 1]} : vector<24x64xf32> to vector<1x64xf32>
    %c0_66 = arith.constant 0 : index
    %c384 = arith.constant 384 : index
    %107 = vector.load %arg12[%c0_66, %c384] : memref<2x576xf32, #tpu.memory_space<vmem>>, vector<1x64xf32>
    tpu.vector_store %arg12[%c0_66, %c384], %106 {strides = array<i32>} : memref<2x576xf32, #tpu.memory_space<vmem>>, vector<1x64xf32>,
    %108 = vector.extract_strided_slice %93 {offsets = [7, 0], sizes = [1, 64], strides = [1, 1]} : vector<24x64xf32> to vector<1x64xf32>
    %c0_67 = arith.constant 0 : index
    %c448 = arith.constant 448 : index
    %109 = vector.load %arg12[%c0_67, %c448] : memref<2x576xf32, #tpu.memory_space<vmem>>, vector<1x64xf32>
    tpu.vector_store %arg12[%c0_67, %c448], %108 {strides = array<i32>} : memref<2x576xf32, #tpu.memory_space<vmem>>, vector<1x64xf32>,
    %110 = vector.extract_strided_slice %93 {offsets = [8, 0], sizes = [1, 64], strides = [1, 1]} : vector<24x64xf32> to vector<1x64xf32>
    %c0_68 = arith.constant 0 : index
    %c512 = arith.constant 512 : index
    %111 = vector.load %arg12[%c0_68, %c512] : memref<2x576xf32, #tpu.memory_space<vmem>>, vector<1x64xf32>
    tpu.vector_store %arg12[%c0_68, %c512], %110 {strides = array<i32>} : memref<2x576xf32, #tpu.memory_space<vmem>>, vector<1x64xf32>,
    %112 = vector.extract_strided_slice %93 {offsets = [9, 0], sizes = [1, 64], strides = [1, 1]} : vector<24x64xf32> to vector<1x64xf32>
    %c1_69 = arith.constant 1 : index
    %c0_70 = arith.constant 0 : index
    %113 = vector.load %arg12[%c1_69, %c0_70] : memref<2x576xf32, #tpu.memory_space<vmem>>, vector<1x64xf32>
    tpu.vector_store %arg12[%c1_69, %c0_70], %112 {strides = array<i32>} : memref<2x576xf32, #tpu.memory_space<vmem>>, vector<1x64xf32>,
    %114 = vector.extract_strided_slice %93 {offsets = [10, 0], sizes = [1, 64], strides = [1, 1]} : vector<24x64xf32> to vector<1x64xf32>
    %c1_71 = arith.constant 1 : index
    %c64_72 = arith.constant 64 : index
    %115 = vector.load %arg12[%c1_71, %c64_72] : memref<2x576xf32, #tpu.memory_space<vmem>>, vector<1x64xf32>
    tpu.vector_store %arg12[%c1_71, %c64_72], %114 {strides = array<i32>} : memref<2x576xf32, #tpu.memory_space<vmem>>, vector<1x64xf32>,
    %116 = vector.extract_strided_slice %93 {offsets = [11, 0], sizes = [1, 64], strides = [1, 1]} : vector<24x64xf32> to vector<1x64xf32>
    %c1_73 = arith.constant 1 : index
    %c128_74 = arith.constant 128 : index
    %117 = vector.load %arg12[%c1_73, %c128_74] : memref<2x576xf32, #tpu.memory_space<vmem>>, vector<1x64xf32>
    tpu.vector_store %arg12[%c1_73, %c128_74], %116 {strides = array<i32>} : memref<2x576xf32, #tpu.memory_space<vmem>>, vector<1x64xf32>,
    %118 = vector.extract_strided_slice %93 {offsets = [12, 0], sizes = [1, 64], strides = [1, 1]} : vector<24x64xf32> to vector<1x64xf32>
    %c1_75 = arith.constant 1 : index
    %c192_76 = arith.constant 192 : index
    %119 = vector.load %arg12[%c1_75, %c192_76] : memref<2x576xf32, #tpu.memory_space<vmem>>, vector<1x64xf32>
    tpu.vector_store %arg12[%c1_75, %c192_76], %118 {strides = array<i32>} : memref<2x576xf32, #tpu.memory_space<vmem>>, vector<1x64xf32>,
    %120 = vector.extract_strided_slice %93 {offsets = [13, 0], sizes = [1, 64], strides = [1, 1]} : vector<24x64xf32> to vector<1x64xf32>
    %c1_77 = arith.constant 1 : index
    %c256_78 = arith.constant 256 : index
    %121 = vector.load %arg12[%c1_77, %c256_78] : memref<2x576xf32, #tpu.memory_space<vmem>>, vector<1x64xf32>
    tpu.vector_store %arg12[%c1_77, %c256_78], %120 {strides = array<i32>} : memref<2x576xf32, #tpu.memory_space<vmem>>, vector<1x64xf32>,
    %122 = vector.extract_strided_slice %93 {offsets = [14, 0], sizes = [1, 64], strides = [1, 1]} : vector<24x64xf32> to vector<1x64xf32>
    %c1_79 = arith.constant 1 : index
    %c320_80 = arith.constant 320 : index
    %123 = vector.load %arg12[%c1_79, %c320_80] : memref<2x576xf32, #tpu.memory_space<vmem>>, vector<1x64xf32>
    tpu.vector_store %arg12[%c1_79, %c320_80], %122 {strides = array<i32>} : memref<2x576xf32, #tpu.memory_space<vmem>>, vector<1x64xf32>,
    %124 = vector.extract_strided_slice %93 {offsets = [15, 0], sizes = [1, 64], strides = [1, 1]} : vector<24x64xf32> to vector<1x64xf32>
    %c1_81 = arith.constant 1 : index
    %c384_82 = arith.constant 384 : index
    %125 = vector.load %arg12[%c1_81, %c384_82] : memref<2x576xf32, #tpu.memory_space<vmem>>, vector<1x64xf32>
    tpu.vector_store %arg12[%c1_81, %c384_82], %124 {strides = array<i32>} : memref<2x576xf32, #tpu.memory_space<vmem>>, vector<1x64xf32>,
    %126 = vector.extract_strided_slice %93 {offsets = [16, 0], sizes = [1, 64], strides = [1, 1]} : vector<24x64xf32> to vector<1x64xf32>
    %c1_83 = arith.constant 1 : index
    %c448_84 = arith.constant 448 : index
    %127 = vector.load %arg12[%c1_83, %c448_84] : memref<2x576xf32, #tpu.memory_space<vmem>>, vector<1x64xf32>
    tpu.vector_store %arg12[%c1_83, %c448_84], %126 {strides = array<i32>} : memref<2x576xf32, #tpu.memory_space<vmem>>, vector<1x64xf32>,
    %128 = vector.extract_strided_slice %93 {offsets = [17, 0], sizes = [1, 64], strides = [1, 1]} : vector<24x64xf32> to vector<1x64xf32>
    %c1_85 = arith.constant 1 : index
    %c512_86 = arith.constant 512 : index
    %129 = vector.load %arg12[%c1_85, %c512_86] : memref<2x576xf32, #tpu.memory_space<vmem>>, vector<1x64xf32>
    tpu.vector_store %arg12[%c1_85, %c512_86], %128 {strides = array<i32>} : memref<2x576xf32, #tpu.memory_space<vmem>>, vector<1x64xf32>,
    %c0_87 = arith.constant 0 : index
    %c0_88 = arith.constant 0 : index
    %130 = vector.load %arg12[%c0_87, %c0_88] : memref<2x576xf32, #tpu.memory_space<vmem>>, vector<2x576xf32>
    %c0_89 = arith.constant 0 : index
    %c0_90 = arith.constant 0 : index
    %131 = vector.load %arg5[%c0_89, %c0_90] : memref<576x64xf32, #tpu.memory_space<vmem>>, vector<576x64xf32>
    %cst_91 = arith.constant dense<0.000000e+00> : vector<2x64xf32>
    %132 = tpu.matmul %130, %131, %cst_91 {dimension_numbers = #tpu.dot_dimension_numbers<[1], [0], [0], [1], [0, 0, 1, 1], [], []>} : vector<2x576xf32>, vector<576x64xf32>, vector<2x64xf32> -> vector<2x64xf32>
    %c0_92 = arith.constant 0 : index
    %c0_93 = arith.constant 0 : index
    %133 = vector.load %arg6[%c0_92, %c0_93] : memref<1x64xf32, #tpu.memory_space<vmem>>, vector<1x64xf32>
    %134 = vector.broadcast %133 : vector<1x64xf32> to vector<2x64xf32>
    %135 = arith.addf %132, %134 : vector<2x64xf32>
    %cst_94 = arith.constant 0.000000e+00 : f32
    %136 = vector.broadcast %cst_94 : f32 to vector<2x64xf32>
    %137 = arith.maximumf %135, %136 : vector<2x64xf32>
    %c0_95 = arith.constant 0 : index
    %c0_96 = arith.constant 0 : index
    %138 = vector.load %arg7[%c0_95, %c0_96] : memref<64x512xf32, #tpu.memory_space<vmem>>, vector<64x512xf32>
    %cst_97 = arith.constant dense<0.000000e+00> : vector<2x512xf32>
    %139 = tpu.matmul %137, %138, %cst_97 {dimension_numbers = #tpu.dot_dimension_numbers<[1], [0], [0], [1], [0, 0, 1, 1], [], []>} : vector<2x64xf32>, vector<64x512xf32>, vector<2x512xf32> -> vector<2x512xf32>
    %c0_98 = arith.constant 0 : index
    %c0_99 = arith.constant 0 : index
    %140 = vector.load %arg8[%c0_98, %c0_99] : memref<1x512xf32, #tpu.memory_space<vmem>>, vector<1x512xf32>
    %141 = vector.broadcast %140 : vector<1x512xf32> to vector<2x512xf32>
    %142 = arith.addf %139, %141 : vector<2x512xf32>
    %cst_100 = arith.constant 0.000000e+00 : f32
    %143 = vector.broadcast %cst_100 : f32 to vector<2x512xf32>
    %144 = arith.maximumf %142, %143 : vector<2x512xf32>
    %c0_101 = arith.constant 0 : index
    %c0_102 = arith.constant 0 : index
    %145 = vector.load %arg9[%c0_101, %c0_102] : memref<512x128xf32, #tpu.memory_space<vmem>>, vector<512x128xf32>
    %cst_103 = arith.constant dense<0.000000e+00> : vector<2x128xf32>
    %146 = tpu.matmul %144, %145, %cst_103 {dimension_numbers = #tpu.dot_dimension_numbers<[1], [0], [0], [1], [0, 0, 1, 1], [], []>} : vector<2x512xf32>, vector<512x128xf32>, vector<2x128xf32> -> vector<2x128xf32>
    %c0_104 = arith.constant 0 : index
    %c0_105 = arith.constant 0 : index
    %147 = vector.load %arg10[%c0_104, %c0_105] : memref<1x128xf32, #tpu.memory_space<vmem>>, vector<1x128xf32>
    %148 = vector.broadcast %147 : vector<1x128xf32> to vector<2x128xf32>
    %149 = arith.addf %146, %148 : vector<2x128xf32>
    %c0_106 = arith.constant 0 : index
    %c0_107 = arith.constant 0 : index
    %150 = vector.load %arg11[%c0_106, %c0_107] : memref<2x128xf32, #tpu.memory_space<vmem>>, vector<2x128xf32>
    tpu.vector_store %arg11[%c0_106, %c0_107], %149 {strides = array<i32>} : memref<2x128xf32, #tpu.memory_space<vmem>>, vector<2x128xf32>,
    return
  }
}

</mosaic_0001>

<llo_original>
// kernel: dqn_forward_fused.1
$region0: #{dqn_forward_fused.1}
  #allocation0 [shape = 'u32[]', space=smem, size = 0x4, offset = 0x4, fixed_abs, tag = 'smem constant byte address 0x4 - core index']
  #allocation1 [shape = 'u32[144,128]{1,0:T(1,128)}', space=vmem, size = 0x12000, scoped, tag = 'internal scratch']
  #allocation2 [shape = 'f32[2,576]{1,0:T(2,128)}', space=vmem, size = 0x1400, scoped, tag = 'scratch operand']
  %s0 = inlined_call_operand.vmem [shape: f32[384,256], index: 0, kind: input, shape index: {}]
  %s1 = inlined_call_operand.vmem [shape: f32[256,32], index: 1, kind: input, shape index: {}]
  %s2 = inlined_call_operand.vmem [shape: f32[1,32], index: 2, kind: input, shape index: {}]
  %s3 = inlined_call_operand.vmem [shape: f32[16,32,64], index: 3, kind: input, shape index: {}]
  %s4 = inlined_call_operand.vmem [shape: f32[1,64], index: 4, kind: input, shape index: {}]
  %s5 = inlined_call_operand.vmem [shape: f32[576,64], index: 5, kind: input, shape index: {}]
  %s6 = inlined_call_operand.vmem [shape: f32[1,64], index: 6, kind: input, shape index: {}]
  %s7 = inlined_call_operand.vmem [shape: f32[64,512], index: 7, kind: input, shape index: {}]
  %s8 = inlined_call_operand.vmem [shape: f32[1,512], index: 8, kind: input, shape index: {}]
  %s9 = inlined_call_operand.vmem [shape: f32[512,128], index: 9, kind: input, shape index: {}]
  %s10 = inlined_call_operand.vmem [shape: f32[1,128], index: 10, kind: input, shape index: {}]
  %s11 = inlined_call_operand.hbm [shape: f32[2,128], index: 11, kind: output, shape index: {}]
  %s12 = sld [smem:[#allocation0]]
  $region54: #{dqn_forward_fused.1} parent=0
    _
  %s14 = ssub.s32 1, %s12
  %s15 = scalar_select 0, %s14, %s12
  $region1: #{dqn_forward_fused.1} parent=0
    #allocation3 [shape = 'u8[1024]{0}', space=vmem, size = 0x400, scoped, tag = 'output window, operand 0, single buffered']
    #allocation4 [shape = 's32[1]{0}', space=sflag, size = 0x4, scoped, tag = 'scoped memory for dqn_forward_fused.1']
    %16 = vsyncpa [#allocation4], 0
    // Predicated region
    $region2: #{dqn_forward_fused.1} parent=1 // pred_check
      _
    $region3: #{dqn_forward_fused.1} parent=1 // pred_check_branch
      %18 = sbr.rel (0) target = $region5
    $region4: #{dqn_forward_fused.1} parent=1 // pred_region
      _
    $region5: #{dqn_forward_fused.1} parent=1 // pred_fallthru
      _
    // Predicated region
    $region6: #{dqn_forward_fused.1} parent=1 // pred_check
      _
    $region7: #{dqn_forward_fused.1} parent=1 // pred_check_branch
      %20 = sbr.rel (0) target = $region9
    $region8: #{dqn_forward_fused.1} parent=1 // pred_region
      _
    $region9: #{dqn_forward_fused.1} parent=1 // pred_fallthru
      _
    // Predicated region
    $region10: #{dqn_forward_fused.1} parent=1 // pred_check
      _
    $region11: #{dqn_forward_fused.1} parent=1 // pred_check_branch
      %22 = sbr.rel (0) target = $region13
    $region12: #{dqn_forward_fused.1} parent=1 // pred_region
      _
    $region13: #{dqn_forward_fused.1} parent=1 // pred_fallthru
      _
    // Predicated region
    $region14: #{dqn_forward_fused.1} parent=1 // pred_check
      _
    $region15: #{dqn_forward_fused.1} parent=1 // pred_check_branch
      %24 = sbr.rel (0) target = $region17
    $region16: #{dqn_forward_fused.1} parent=1 // pred_region
      _
    $region17: #{dqn_forward_fused.1} parent=1 // pred_fallthru
      _
    // Predicated region
    $region18: #{dqn_forward_fused.1} parent=1 // pred_check
      _
    $region19: #{dqn_forward_fused.1} parent=1 // pred_check_branch
      %26 = sbr.rel (0) target = $region21
    $region20: #{dqn_forward_fused.1} parent=1 // pred_region
      _
    $region21: #{dqn_forward_fused.1} parent=1 // pred_fallthru
      _
    // Predicated region
    $region22: #{dqn_forward_fused.1} parent=1 // pred_check
      _
    $region23: #{dqn_forward_fused.1} parent=1 // pred_check_branch
      %28 = sbr.rel (0) target = $region25
    $region24: #{dqn_forward_fused.1} parent=1 // pred_region
      _
    $region25: #{dqn_forward_fused.1} parent=1 // pred_fallthru
      _
    // Predicated region
    $region26: #{dqn_forward_fused.1} parent=1 // pred_check
      _
    $region27: #{dqn_forward_fused.1} parent=1 // pred_check_branch
      %30 = sbr.rel (0) target = $region29
    $region28: #{dqn_forward_fused.1} parent=1 // pred_region
      _
    $region29: #{dqn_forward_fused.1} parent=1 // pred_fallthru
      _
    // Predicated region
    $region30: #{dqn_forward_fused.1} parent=1 // pred_check
      _
    $region31: #{dqn_forward_fused.1} parent=1 // pred_check_branch
      %32 = sbr.rel (0) target = $region33
    $region32: #{dqn_forward_fused.1} parent=1 // pred_region
      _
    $region33: #{dqn_forward_fused.1} parent=1 // pred_fallthru
      _
    // Predicated region
    $region34: #{dqn_forward_fused.1} parent=1 // pred_check
      _
    $region35: #{dqn_forward_fused.1} parent=1 // pred_check_branch
      %34 = sbr.rel (0) target = $region37
    $region36: #{dqn_forward_fused.1} parent=1 // pred_region
      _
    $region37: #{dqn_forward_fused.1} parent=1 // pred_fallthru
      _
    // Predicated region
    $region38: #{dqn_forward_fused.1} parent=1 // pred_check
      _
    $region39: #{dqn_forward_fused.1} parent=1 // pred_check_branch
      %36 = sbr.rel (0) target = $region41
    $region40: #{dqn_forward_fused.1} parent=1 // pred_region
      _
    $region41: #{dqn_forward_fused.1} parent=1 // pred_fallthru
      _
    // Predicated region
    $region42: #{dqn_forward_fused.1} parent=1 // pred_check
      _
    $region43: #{dqn_forward_fused.1} parent=1 // pred_check_branch
      %38 = sbr.rel (0) target = $region45
    $region44: #{dqn_forward_fused.1} parent=1 // pred_region
      _
    $region45: #{dqn_forward_fused.1} parent=1 // pred_fallthru
      _
    %v39 = vld [vmem:[%s0] sm:$0xff]
    %v40 = vld [vmem:[%s0 + $0x8] sm:$0xff]
    %v41 = vld [vmem:[%s0 + $0x10] sm:$0xff]
    %v42 = vld [vmem:[%s0 + $0x18] sm:$0xff]
    %v43 = vld [vmem:[%s0 + $0x20] sm:$0xff]
    %v44 = vld [vmem:[%s0 + $0x28] sm:$0xff]
    %v45 = vld [vmem:[%s0 + $0x30] sm:$0xff]
    %v46 = vld [vmem:[%s0 + $0x38] sm:$0xff]
    %v47 = vld [vmem:[%s0 + $0x40] sm:$0xff]
    %v48 = vld [vmem:[%s0 + $0x48] sm:$0xff]
    %v49 = vld [vmem:[%s0 + $0x50] sm:$0xff]
    %v50 = vld [vmem:[%s0 + $0x58] sm:$0xff]
    %v51 = vld [vmem:[%s0 + $0x60] sm:$0xff]
    %v52 = vld [vmem:[%s0 + $0x68] sm:$0xff]
    %v53 = vld [vmem:[%s0 + $0x70] sm:$0xff]
    %v54 = vld [vmem:[%s0 + $0x78] sm:$0xff]
    %v55 = vld [vmem:[%s0 + $0x80] sm:$0xff]
    %v56 = vld [vmem:[%s0 + $0x88] sm:$0xff]
    %v57 = vld [vmem:[%s0 + $0x90] sm:$0xff]
    %v58 = vld [vmem:[%s0 + $0x98] sm:$0xff]
    %v59 = vld [vmem:[%s0 + $0xa0] sm:$0xff]
    %v60 = vld [vmem:[%s0 + $0xa8] sm:$0xff]
    %v61 = vld [vmem:[%s0 + $0xb0] sm:$0xff]
    %v62 = vld [vmem:[%s0 + $0xb8] sm:$0xff]
    %v63 = vld [vmem:[%s0 + $0xc0] sm:$0xff]
    %v64 = vld [vmem:[%s0 + $0xc8] sm:$0xff]
    %v65 = vld [vmem:[%s0 + $0xd0] sm:$0xff]
    %v66 = vld [vmem:[%s0 + $0xd8] sm:$0xff]
    %v67 = vld [vmem:[%s0 + $0xe0] sm:$0xff]
    %v68 = vld [vmem:[%s0 + $0xe8] sm:$0xff]
    %v69 = vld [vmem:[%s0 + $0xf0] sm:$0xff]
    %v70 = vld [vmem:[%s0 + $0xf8] sm:$0xff]
    %v71 = vld [vmem:[%s0 + $0x100] sm:$0xff]
    %v72 = vld [vmem:[%s0 + $0x108] sm:$0xff]
    %v73 = vld [vmem:[%s0 + $0x110] sm:$0xff]
    %v74 = vld [vmem:[%s0 + $0x118] sm:$0xff]
    %v75 = vld [vmem:[%s0 + $0x120] sm:$0xff]
    %v76 = vld [vmem:[%s0 + $0x128] sm:$0xff]
    %v77 = vld [vmem:[%s0 + $0x130] sm:$0xff]
    %v78 = vld [vmem:[%s0 + $0x138] sm:$0xff]
    %v79 = vld [vmem:[%s0 + $0x140] sm:$0xff]
    %v80 = vld [vmem:[%s0 + $0x148] sm:$0xff]
    %v81 = vld [vmem:[%s0 + $0x150] sm:$0xff]
    %v82 = vld [vmem:[%s0 + $0x158] sm:$0xff]
    %v83 = vld [vmem:[%s0 + $0x160] sm:$0xff]
    %v84 = vld [vmem:[%s0 + $0x168] sm:$0xff]
    %v85 = vld [vmem:[%s0 + $0x170] sm:$0xff]
    %v86 = vld [vmem:[%s0 + $0x178] sm:$0xff]
    %v87 = vld [vmem:[%s0 + $0x180] sm:$0xff]
    %v88 = vld [vmem:[%s0 + $0x188] sm:$0xff]
    %v89 = vld [vmem:[%s0 + $0x190] sm:$0xff]
    %v90 = vld [vmem:[%s0 + $0x198] sm:$0xff]
    %v91 = vld [vmem:[%s0 + $0x1a0] sm:$0xff]
    %v92 = vld [vmem:[%s0 + $0x1a8] sm:$0xff]
    %v93 = vld [vmem:[%s0 + $0x1b0] sm:$0xff]
    %v94 = vld [vmem:[%s0 + $0x1b8] sm:$0xff]
    %v95 = vld [vmem:[%s0 + $0x1c0] sm:$0xff]
    %v96 = vld [vmem:[%s0 + $0x1c8] sm:$0xff]
    %v97 = vld [vmem:[%s0 + $0x1d0] sm:$0xff]
    %v98 = vld [vmem:[%s0 + $0x1d8] sm:$0xff]
    %v99 = vld [vmem:[%s0 + $0x1e0] sm:$0xff]
    %v100 = vld [vmem:[%s0 + $0x1e8] sm:$0xff]
    %v101 = vld [vmem:[%s0 + $0x1f0] sm:$0xff]
    %v102 = vld [vmem:[%s0 + $0x1f8] sm:$0xff]
    %v103 = vld [vmem:[%s0 + $0x200] sm:$0xff]
    %v104 = vld [vmem:[%s0 + $0x208] sm:$0xff]
    %v105 = vld [vmem:[%s0 + $0x210] sm:$0xff]
    %v106 = vld [vmem:[%s0 + $0x218] sm:$0xff]
    %v107 = vld [vmem:[%s0 + $0x220] sm:$0xff]
    %v108 = vld [vmem:[%s0 + $0x228] sm:$0xff]
    %v109 = vld [vmem:[%s0 + $0x230] sm:$0xff]
    %v110 = vld [vmem:[%s0 + $0x238] sm:$0xff]
    %v111 = vld [vmem:[%s0 + $0x240] sm:$0xff]
    %v112 = vld [vmem:[%s0 + $0x248] sm:$0xff]
    %v113 = vld [vmem:[%s0 + $0x250] sm:$0xff]
    %v114 = vld [vmem:[%s0 + $0x258] sm:$0xff]
    %v115 = vld [vmem:[%s0 + $0x260] sm:$0xff]
    %v116 = vld [vmem:[%s0 + $0x268] sm:$0xff]
    %v117 = vld [vmem:[%s0 + $0x270] sm:$0xff]
    %v118 = vld [vmem:[%s0 + $0x278] sm:$0xff]
    %v119 = vld [vmem:[%s0 + $0x280] sm:$0xff]
    %v120 = vld [vmem:[%s0 + $0x288] sm:$0xff]
    %v121 = vld [vmem:[%s0 + $0x290] sm:$0xff]
    %v122 = vld [vmem:[%s0 + $0x298] sm:$0xff]
    %v123 = vld [vmem:[%s0 + $0x2a0] sm:$0xff]
    %v124 = vld [vmem:[%s0 + $0x2a8] sm:$0xff]
    %v125 = vld [vmem:[%s0 + $0x2b0] sm:$0xff]
    %v126 = vld [vmem:[%s0 + $0x2b8] sm:$0xff]
    %v127 = vld [vmem:[%s0 + $0x2c0] sm:$0xff]
    %v128 = vld [vmem:[%s0 + $0x2c8] sm:$0xff]
    %v129 = vld [vmem:[%s0 + $0x2d0] sm:$0xff]
    %v130 = vld [vmem:[%s0 + $0x2d8] sm:$0xff]
    %v131 = vld [vmem:[%s0 + $0x2e0] sm:$0xff]
    %v132 = vld [vmem:[%s0 + $0x2e8] sm:$0xff]
    %v133 = vld [vmem:[%s0 + $0x2f0] sm:$0xff]
    %v134 = vld [vmem:[%s0 + $0x2f8] sm:$0xff]
    %v135 = vld [vmem:[%s1] sm:$0xff]
    %v136 = vld [vmem:[%s1 + $0x8] sm:$0xff]
    %v137 = vld [vmem:[%s1 + $0x10] sm:$0xff]
    %v138 = vld [vmem:[%s1 + $0x18] sm:$0xff]
    %v139 = vld [vmem:[%s1 + $0x20] sm:$0xff]
    %v140 = vld [vmem:[%s1 + $0x28] sm:$0xff]
    %v141 = vld [vmem:[%s1 + $0x30] sm:$0xff]
    %v142 = vld [vmem:[%s1 + $0x38] sm:$0xff]
    %v143 = vld [vmem:[%s1 + $0x40] sm:$0xff]
    %v144 = vld [vmem:[%s1 + $0x48] sm:$0xff]
    %v145 = vld [vmem:[%s1 + $0x50] sm:$0xff]
    %v146 = vld [vmem:[%s1 + $0x58] sm:$0xff]
    %v147 = vld [vmem:[%s1 + $0x60] sm:$0xff]
    %v148 = vld [vmem:[%s1 + $0x68] sm:$0xff]
    %v149 = vld [vmem:[%s1 + $0x70] sm:$0xff]
    %v150 = vld [vmem:[%s1 + $0x78] sm:$0xff]
    %v151 = vld [vmem:[%s1 + $0x80] sm:$0xff]
    %v152 = vld [vmem:[%s1 + $0x88] sm:$0xff]
    %v153 = vld [vmem:[%s1 + $0x90] sm:$0xff]
    %v154 = vld [vmem:[%s1 + $0x98] sm:$0xff]
    %v155 = vld [vmem:[%s1 + $0xa0] sm:$0xff]
    %v156 = vld [vmem:[%s1 + $0xa8] sm:$0xff]
    %v157 = vld [vmem:[%s1 + $0xb0] sm:$0xff]
    %v158 = vld [vmem:[%s1 + $0xb8] sm:$0xff]
    %v159 = vld [vmem:[%s1 + $0xc0] sm:$0xff]
    %v160 = vld [vmem:[%s1 + $0xc8] sm:$0xff]
    %v161 = vld [vmem:[%s1 + $0xd0] sm:$0xff]
    %v162 = vld [vmem:[%s1 + $0xd8] sm:$0xff]
    %v163 = vld [vmem:[%s1 + $0xe0] sm:$0xff]
    %v164 = vld [vmem:[%s1 + $0xe8] sm:$0xff]
    %v165 = vld [vmem:[%s1 + $0xf0] sm:$0xff]
    %v166 = vld [vmem:[%s1 + $0xf8] sm:$0xff]
    %v167 = vld [vmem:[%s2] sm:$0x1]
    %v169 = vlaneseq
    %v170 = vshrl.u32 %v169, 7
    %v171 = vsub.s32 0, %v170
    %v172 = vrot.slane %v167, %v171
    %174 = vmatprep.subr.mxu0 0.0
    %175 = vmatpush1.msra.mxu0 %v135
    %176 = vmatprep.subr.mxu0 0.0
    %177 = vmatpush1.msra.mxu0 %v136
    %178 = vmatprep.subr.mxu0 0.0
    %179 = vmatpush1.msra.mxu0 %v137
    %180 = vmatprep.subr.mxu0 0.0
    %181 = vmatpush1.msra.mxu0 %v138
    %182 = vmatprep.subr.mxu0 0.0
    %183 = vmatpush1.msra.mxu0 %v139
    %184 = vmatprep.subr.mxu0 0.0
    %185 = vmatpush1.msra.mxu0 %v140
    %186 = vmatprep.subr.mxu0 0.0
    %187 = vmatpush1.msra.mxu0 %v141
    %188 = vmatprep.subr.mxu0 0.0
    %189 = vmatpush1.msra.mxu0 %v142
    %190 = vmatprep.subr.mxu0 0.0
    %191 = vmatpush1.msra.mxu0 %v143
    %192 = vmatprep.subr.mxu0 0.0
    %193 = vmatpush1.msra.mxu0 %v144
    %194 = vmatprep.subr.mxu0 0.0
    %195 = vmatpush1.msra.mxu0 %v145
    %196 = vmatprep.subr.mxu0 0.0
    %197 = vmatpush1.msra.mxu0 %v146
    %198 = vmatprep.subr.mxu0 0.0
    %199 = vmatpush1.msra.mxu0 %v147
    %200 = vmatprep.subr.mxu0 0.0
    %201 = vmatpush1.msra.mxu0 %v148
    %202 = vmatprep.subr.mxu0 0.0
    %203 = vmatpush1.msra.mxu0 %v149
    %204 = vmatprep.subr.mxu0 0.0
    %205 = vmatpush1.msra.mxu0 %v150
    %206 = vmatprep.subr.mxu0 0.0
    %207 = vmatpush1.msra.mxu0 %v151
    %208 = vmatprep.subr.mxu0 0.0
    %209 = vmatpush1.msra.mxu0 %v152
    %210 = vmatprep.subr.mxu0 0.0
    %211 = vmatpush1.msra.mxu0 %v153
    %212 = vmatprep.subr.mxu0 0.0
    %213 = vmatpush1.msra.mxu0 %v154
    %214 = vmatprep.subr.mxu0 0.0
    %215 = vmatpush1.msra.mxu0 %v155
    %216 = vmatprep.subr.mxu0 0.0
    %217 = vmatpush1.msra.mxu0 %v156
    %218 = vmatprep.subr.mxu0 0.0
    %219 = vmatpush1.msra.mxu0 %v157
    %220 = vmatprep.subr.mxu0 0.0
    %221 = vmatpush1.msra.mxu0 %v158
    %222 = vmatprep.subr.mxu0 0.0
    %223 = vmatpush1.msra.mxu0 %v159
    %224 = vmatprep.subr.mxu0 0.0
    %225 = vmatpush1.msra.mxu0 %v160
    %226 = vmatprep.subr.mxu0 0.0
    %227 = vmatpush1.msra.mxu0 %v161
    %228 = vmatprep.subr.mxu0 0.0
    %229 = vmatpush1.msra.mxu0 %v162
    %230 = vmatprep.subr.mxu0 0.0
    %231 = vmatpush1.msra.mxu0 %v163
    %232 = vmatprep.subr.mxu0 0.0
    %233 = vmatpush1.msra.mxu0 %v164
    %234 = vmatprep.subr.mxu0 0.0
    %235 = vmatpush1.msra.mxu0 %v165
    %236 = vmatprep.subr.mxu0 0.0
    %237 = vmatpush1.msra.mxu0 %v166
    %238 = vmatprep.mubr.f32.mxu0 %v40
    %239 = vmatmul.mubr.f32.gmra.mrb[0].mxu0 %v39
    %v240 = vpop.f32.mrb[0].mxu0
    %v241 = vadd.f32 %v172, %v240
    %v242 = vpop.f32.mrb[0].mxu0
    %243 = vmatprep.mubr.f32.mxu0 %v42
    %244 = vmatmul.mubr.f32.gmra.mrb[0].mxu0 %v41
    %v245 = vpop.f32.mrb[0].mxu0
    %v246 = vadd.f32 %v172, %v245
    %v247 = vpop.f32.mrb[0].mxu0
    %248 = vmatprep.mubr.f32.mxu0 %v44
    %249 = vmatmul.mubr.f32.gmra.mrb[0].mxu0 %v43
    %v250 = vpop.f32.mrb[0].mxu0
    %v251 = vadd.f32 %v172, %v250
    %v252 = vpop.f32.mrb[0].mxu0
    %253 = vmatprep.mubr.f32.mxu0 %v46
    %254 = vmatmul.mubr.f32.gmra.mrb[0].mxu0 %v45
    %v255 = vpop.f32.mrb[0].mxu0
    %v256 = vadd.f32 %v172, %v255
    %v257 = vpop.f32.mrb[0].mxu0
    %258 = vmatprep.mubr.f32.mxu0 %v48
    %259 = vmatmul.mubr.f32.gmra.mrb[0].mxu0 %v47
    %v260 = vpop.f32.mrb[0].mxu0
    %v261 = vadd.f32 %v172, %v260
    %v262 = vpop.f32.mrb[0].mxu0
    %263 = vmatprep.mubr.f32.mxu0 %v50
    %264 = vmatmul.mubr.f32.gmra.mrb[0].mxu0 %v49
    %v265 = vpop.f32.mrb[0].mxu0
    %v266 = vadd.f32 %v172, %v265
    %v267 = vpop.f32.mrb[0].mxu0
    %268 = vmatprep.mubr.f32.mxu0 %v52
    %269 = vmatmul.mubr.f32.gmra.mrb[0].mxu0 %v51
    %v270 = vpop.f32.mrb[0].mxu0
    %v271 = vadd.f32 %v172, %v270
    %v272 = vpop.f32.mrb[0].mxu0
    %273 = vmatprep.mubr.f32.mxu0 %v54
    %274 = vmatmul.mubr.f32.gmra.mrb[0].mxu0 %v53
    %v275 = vpop.f32.mrb[0].mxu0
    %v276 = vadd.f32 %v172, %v275
    %v277 = vpop.f32.mrb[0].mxu0
    %278 = vmatprep.mubr.f32.mxu0 %v56
    %279 = vmatmul.mubr.f32.gmra.mrb[0].mxu0 %v55
    %v280 = vpop.f32.mrb[0].mxu0
    %v281 = vadd.f32 %v172, %v280
    %v282 = vpop.f32.mrb[0].mxu0
    %283 = vmatprep.mubr.f32.mxu0 %v58
    %284 = vmatmul.mubr.f32.gmra.mrb[0].mxu0 %v57
    %v285 = vpop.f32.mrb[0].mxu0
    %v286 = vadd.f32 %v172, %v285
    %v287 = vpop.f32.mrb[0].mxu0
    %288 = vmatprep.mubr.f32.mxu0 %v60
    %289 = vmatmul.mubr.f32.gmra.mrb[0].mxu0 %v59
    %v290 = vpop.f32.mrb[0].mxu0
    %v291 = vadd.f32 %v172, %v290
    %v292 = vpop.f32.mrb[0].mxu0
    %293 = vmatprep.mubr.f32.mxu0 %v62
    %294 = vmatmul.mubr.f32.gmra.mrb[0].mxu0 %v61
    %v295 = vpop.f32.mrb[0].mxu0
    %v296 = vadd.f32 %v172, %v295
    %v297 = vpop.f32.mrb[0].mxu0
    %298 = vmatprep.mubr.f32.mxu0 %v64
    %299 = vmatmul.mubr.f32.gmra.mrb[0].mxu0 %v63
    %v300 = vpop.f32.mrb[0].mxu0
    %v301 = vadd.f32 %v172, %v300
    %v302 = vpop.f32.mrb[0].mxu0
    %303 = vmatprep.mubr.f32.mxu0 %v66
    %304 = vmatmul.mubr.f32.gmra.mrb[0].mxu0 %v65
    %v305 = vpop.f32.mrb[0].mxu0
    %v306 = vadd.f32 %v172, %v305
    %v307 = vpop.f32.mrb[0].mxu0
    %308 = vmatprep.mubr.f32.mxu0 %v68
    %309 = vmatmul.mubr.f32.gmra.mrb[0].mxu0 %v67
    %v310 = vpop.f32.mrb[0].mxu0
    %v311 = vadd.f32 %v172, %v310
    %v312 = vpop.f32.mrb[0].mxu0
    %313 = vmatprep.mubr.f32.mxu0 %v70
    %314 = vmatmul.mubr.f32.gmra.mrb[0].mxu0 %v69
    %v315 = vpop.f32.mrb[0].mxu0
    %v316 = vadd.f32 %v172, %v315
    %v317 = vpop.f32.mrb[0].mxu0
    %318 = vmatprep.mubr.f32.mxu0 %v72
    %319 = vmatmul.mubr.f32.gmra.mrb[0].mxu0 %v71
    %v320 = vpop.f32.mrb[0].mxu0
    %v321 = vadd.f32 %v172, %v320
    %v322 = vpop.f32.mrb[0].mxu0
    %323 = vmatprep.mubr.f32.mxu0 %v74
    %324 = vmatmul.mubr.f32.gmra.mrb[0].mxu0 %v73
    %v325 = vpop.f32.mrb[0].mxu0
    %v326 = vadd.f32 %v172, %v325
    %v327 = vpop.f32.mrb[0].mxu0
    %328 = vmatprep.mubr.f32.mxu0 %v76
    %329 = vmatmul.mubr.f32.gmra.mrb[0].mxu0 %v75
    %v330 = vpop.f32.mrb[0].mxu0
    %v331 = vadd.f32 %v172, %v330
    %v332 = vpop.f32.mrb[0].mxu0
    %333 = vmatprep.mubr.f32.mxu0 %v78
    %334 = vmatmul.mubr.f32.gmra.mrb[0].mxu0 %v77
    %v335 = vpop.f32.mrb[0].mxu0
    %v336 = vadd.f32 %v172, %v335
    %v337 = vpop.f32.mrb[0].mxu0
    %338 = vmatprep.mubr.f32.mxu0 %v80
    %339 = vmatmul.mubr.f32.gmra.mrb[0].mxu0 %v79
    %v340 = vpop.f32.mrb[0].mxu0
    %v341 = vadd.f32 %v172, %v340
    %v342 = vpop.f32.mrb[0].mxu0
    %343 = vmatprep.mubr.f32.mxu0 %v82
    %344 = vmatmul.mubr.f32.gmra.mrb[0].mxu0 %v81
    %v345 = vpop.f32.mrb[0].mxu0
    %v346 = vadd.f32 %v172, %v345
    %v347 = vpop.f32.mrb[0].mxu0
    %348 = vmatprep.mubr.f32.mxu0 %v84
    %349 = vmatmul.mubr.f32.gmra.mrb[0].mxu0 %v83
    %v350 = vpop.f32.mrb[0].mxu0
    %v351 = vadd.f32 %v172, %v350
    %v352 = vpop.f32.mrb[0].mxu0
    %353 = vmatprep.mubr.f32.mxu0 %v86
    %354 = vmatmul.mubr.f32.gmra.mrb[0].mxu0 %v85
    %v355 = vpop.f32.mrb[0].mxu0
    %v356 = vadd.f32 %v172, %v355
    %v357 = vpop.f32.mrb[0].mxu0
    %358 = vmatprep.mubr.f32.mxu0 %v88
    %359 = vmatmul.mubr.f32.gmra.mrb[0].mxu0 %v87
    %v360 = vpop.f32.mrb[0].mxu0
    %v361 = vadd.f32 %v172, %v360
    %v362 = vpop.f32.mrb[0].mxu0
    %363 = vmatprep.mubr.f32.mxu0 %v90
    %364 = vmatmul.mubr.f32.gmra.mrb[0].mxu0 %v89
    %v365 = vpop.f32.mrb[0].mxu0
    %v366 = vadd.f32 %v172, %v365
    %v367 = vpop.f32.mrb[0].mxu0
    %368 = vmatprep.mubr.f32.mxu0 %v92
    %369 = vmatmul.mubr.f32.gmra.mrb[0].mxu0 %v91
    %v370 = vpop.f32.mrb[0].mxu0
    %v371 = vadd.f32 %v172, %v370
    %v372 = vpop.f32.mrb[0].mxu0
    %373 = vmatprep.mubr.f32.mxu0 %v94
    %374 = vmatmul.mubr.f32.gmra.mrb[0].mxu0 %v93
    %v375 = vpop.f32.mrb[0].mxu0
    %v376 = vadd.f32 %v172, %v375
    %v377 = vpop.f32.mrb[0].mxu0
    %378 = vmatprep.mubr.f32.mxu0 %v96
    %379 = vmatmul.mubr.f32.gmra.mrb[0].mxu0 %v95
    %v380 = vpop.f32.mrb[0].mxu0
    %v381 = vadd.f32 %v172, %v380
    %v382 = vpop.f32.mrb[0].mxu0
    %383 = vmatprep.mubr.f32.mxu0 %v98
    %384 = vmatmul.mubr.f32.gmra.mrb[0].mxu0 %v97
    %v385 = vpop.f32.mrb[0].mxu0
    %v386 = vadd.f32 %v172, %v385
    %v387 = vpop.f32.mrb[0].mxu0
    %388 = vmatprep.mubr.f32.mxu0 %v100
    %389 = vmatmul.mubr.f32.gmra.mrb[0].mxu0 %v99
    %v390 = vpop.f32.mrb[0].mxu0
    %v391 = vadd.f32 %v172, %v390
    %v392 = vpop.f32.mrb[0].mxu0
    %393 = vmatprep.mubr.f32.mxu0 %v102
    %394 = vmatmul.mubr.f32.gmra.mrb[0].mxu0 %v101
    %v395 = vpop.f32.mrb[0].mxu0
    %v396 = vadd.f32 %v172, %v395
    %v397 = vpop.f32.mrb[0].mxu0
    %398 = vmatprep.mubr.f32.mxu0 %v104
    %399 = vmatmul.mubr.f32.gmra.mrb[0].mxu0 %v103
    %v400 = vpop.f32.mrb[0].mxu0
    %v401 = vadd.f32 %v172, %v400
    %v402 = vpop.f32.mrb[0].mxu0
    %403 = vmatprep.mubr.f32.mxu0 %v106
    %404 = vmatmul.mubr.f32.gmra.mrb[0].mxu0 %v105
    %v405 = vpop.f32.mrb[0].mxu0
    %v406 = vadd.f32 %v172, %v405
    %v407 = vpop.f32.mrb[0].mxu0
    %408 = vmatprep.mubr.f32.mxu0 %v108
    %409 = vmatmul.mubr.f32.gmra.mrb[0].mxu0 %v107
    %v410 = vpop.f32.mrb[0].mxu0
    %v411 = vadd.f32 %v172, %v410
    %v412 = vpop.f32.mrb[0].mxu0
    %413 = vmatprep.mubr.f32.mxu0 %v110
    %414 = vmatmul.mubr.f32.gmra.mrb[0].mxu0 %v109
    %v415 = vpop.f32.mrb[0].mxu0
    %v416 = vadd.f32 %v172, %v415
    %v417 = vpop.f32.mrb[0].mxu0
    %418 = vmatprep.mubr.f32.mxu0 %v112
    %419 = vmatmul.mubr.f32.gmra.mrb[0].mxu0 %v111
    %v420 = vpop.f32.mrb[0].mxu0
    %v421 = vadd.f32 %v172, %v420
    %v422 = vpop.f32.mrb[0].mxu0
    %423 = vmatprep.mubr.f32.mxu0 %v114
    %424 = vmatmul.mubr.f32.gmra.mrb[0].mxu0 %v113
    %v425 = vpop.f32.mrb[0].mxu0
    %v426 = vadd.f32 %v172, %v425
    %v427 = vpop.f32.mrb[0].mxu0
    %428 = vmatprep.mubr.f32.mxu0 %v116
    %429 = vmatmul.mubr.f32.gmra.mrb[0].mxu0 %v115
    %v430 = vpop.f32.mrb[0].mxu0
    %v431 = vadd.f32 %v172, %v430
    %v432 = vpop.f32.mrb[0].mxu0
    %433 = vmatprep.mubr.f32.mxu0 %v118
    %434 = vmatmul.mubr.f32.gmra.mrb[0].mxu0 %v117
    %v435 = vpop.f32.mrb[0].mxu0
    %v436 = vadd.f32 %v172, %v435
    %v437 = vpop.f32.mrb[0].mxu0
    %438 = vmatprep.mubr.f32.mxu0 %v120
    %439 = vmatmul.mubr.f32.gmra.mrb[0].mxu0 %v119
    %v440 = vpop.f32.mrb[0].mxu0
    %v441 = vadd.f32 %v172, %v440
    %v442 = vpop.f32.mrb[0].mxu0
    %443 = vmatprep.mubr.f32.mxu0 %v122
    %444 = vmatmul.mubr.f32.gmra.mrb[0].mxu0 %v121
    %v445 = vpop.f32.mrb[0].mxu0
    %v446 = vadd.f32 %v172, %v445
    %v447 = vpop.f32.mrb[0].mxu0
    %448 = vmatprep.mubr.f32.mxu0 %v124
    %449 = vmatmul.mubr.f32.gmra.mrb[0].mxu0 %v123
    %v450 = vpop.f32.mrb[0].mxu0
    %v451 = vadd.f32 %v172, %v450
    %v452 = vpop.f32.mrb[0].mxu0
    %453 = vmatprep.mubr.f32.mxu0 %v126
    %454 = vmatmul.mubr.f32.gmra.mrb[0].mxu0 %v125
    %v455 = vpop.f32.mrb[0].mxu0
    %v456 = vadd.f32 %v172, %v455
    %v457 = vpop.f32.mrb[0].mxu0
    %458 = vmatprep.mubr.f32.mxu0 %v128
    %459 = vmatmul.mubr.f32.gmra.mrb[0].mxu0 %v127
    %v460 = vpop.f32.mrb[0].mxu0
    %v461 = vadd.f32 %v172, %v460
    %v462 = vpop.f32.mrb[0].mxu0
    %463 = vmatprep.mubr.f32.mxu0 %v130
    %464 = vmatmul.mubr.f32.gmra.mrb[0].mxu0 %v129
    %v465 = vpop.f32.mrb[0].mxu0
    %v466 = vadd.f32 %v172, %v465
    %v467 = vpop.f32.mrb[0].mxu0
    %468 = vmatprep.mubr.f32.mxu0 %v132
    %469 = vmatmul.mubr.f32.gmra.mrb[0].mxu0 %v131
    %v470 = vpop.f32.mrb[0].mxu0
    %v471 = vadd.f32 %v172, %v470
    %v472 = vpop.f32.mrb[0].mxu0
    %473 = vmatprep.mubr.f32.mxu0 %v134
    %474 = vmatmul.mubr.f32.gmra.mrb[0].mxu0 %v133
    %v475 = vpop.f32.mrb[0].mxu0
    %v476 = vadd.f32 %v172, %v475
    %v477 = vpop.f32.mrb[0].mxu0
    %478 = vdwg.mxu0
    %v479 = vmax.f32 %v241, 0.0
    %v480 = vmax.f32 %v246, 0.0
    %v481 = vmax.f32 %v251, 0.0
    %v482 = vmax.f32 %v256, 0.0
    %v483 = vmax.f32 %v261, 0.0
    %v484 = vmax.f32 %v266, 0.0
    %v485 = vmax.f32 %v271, 0.0
    %v486 = vmax.f32 %v276, 0.0
    %v487 = vmax.f32 %v281, 0.0
    %v488 = vmax.f32 %v286, 0.0
    %v489 = vmax.f32 %v291, 0.0
    %v490 = vmax.f32 %v296, 0.0
    %v491 = vmax.f32 %v301, 0.0
    %v492 = vmax.f32 %v306, 0.0
    %v493 = vmax.f32 %v311, 0.0
    %v494 = vmax.f32 %v316, 0.0
    %v495 = vmax.f32 %v321, 0.0
    %v496 = vmax.f32 %v326, 0.0
    %v497 = vmax.f32 %v331, 0.0
    %v498 = vmax.f32 %v336, 0.0
    %v499 = vmax.f32 %v341, 0.0
    %v500 = vmax.f32 %v346, 0.0
    %v501 = vmax.f32 %v351, 0.0
    %v502 = vmax.f32 %v356, 0.0
    %v503 = vmax.f32 %v361, 0.0
    %v504 = vmax.f32 %v366, 0.0
    %v505 = vmax.f32 %v371, 0.0
    %v506 = vmax.f32 %v376, 0.0
    %v507 = vmax.f32 %v381, 0.0
    %v508 = vmax.f32 %v386, 0.0
    %v509 = vmax.f32 %v391, 0.0
    %v510 = vmax.f32 %v396, 0.0
    %v511 = vmax.f32 %v401, 0.0
    %v512 = vmax.f32 %v406, 0.0
    %v513 = vmax.f32 %v411, 0.0
    %v514 = vmax.f32 %v416, 0.0
    %v515 = vmax.f32 %v421, 0.0
    %v516 = vmax.f32 %v426, 0.0
    %v517 = vmax.f32 %v431, 0.0
    %v518 = vmax.f32 %v436, 0.0
    %v519 = vmax.f32 %v441, 0.0
    %v520 = vmax.f32 %v446, 0.0
    %v521 = vmax.f32 %v451, 0.0
    %v522 = vmax.f32 %v456, 0.0
    %v523 = vmax.f32 %v461, 0.0
    %v524 = vmax.f32 %v466, 0.0
    %v525 = vmax.f32 %v471, 0.0
    %v526 = vmax.f32 %v476, 0.0
    %v527 = vld [vmem:[%s3] sm:$0xff]
    %v528 = vld [vmem:[%s3 + $0x8] sm:$0xff]
    %v529 = vld [vmem:[%s3 + $0x10] sm:$0xff]
    %v530 = vld [vmem:[%s3 + $0x18] sm:$0xff]
    %s531 = scalar_lea.vmem %s3, 32
    %v532 = vld [vmem:[%s531] sm:$0xff]
    %v533 = vld [vmem:[%s531 + $0x8] sm:$0xff]
    %v534 = vld [vmem:[%s531 + $0x10] sm:$0xff]
    %v535 = vld [vmem:[%s531 + $0x18] sm:$0xff]
    %vm536 = vcmask 261120
    %v538 = vsel %vm536, %v482, 0
    %v541 = vsel %vm536, %v483, 0
    %v544 = vsel %vm536, %v484, 0
    %546 = vmatprep.subr.mxu0 0.0
    %547 = vmatpush1.msra.mxu0 %v532
    %548 = vmatprep.subr.mxu0 0.0
    %549 = vmatpush1.msra.mxu0 %v533
    %550 = vmatprep.subr.mxu0 0.0
    %551 = vmatpush1.msra.mxu0 %v534
    %552 = vmatprep.subr.mxu0 0.0
    %553 = vmatpush1.msra.mxu0 %v535
    %554 = vmatprep.subr.mxu0 0.0
    %555 = vmatpush1.msra.mxu0 0.0
    %556 = vmatprep.subr.mxu0 0.0
    %557 = vmatpush1.msra.mxu0 0.0
    %558 = vmatprep.subr.mxu0 0.0
    %559 = vmatpush1.msra.mxu0 0.0
    %560 = vmatprep.subr.mxu0 0.0
    %561 = vmatpush1.msra.mxu0 0.0
    %562 = vmatprep.subr.mxu0 0.0
    %563 = vmatpush1.msra.mxu0 0.0
    %564 = vmatprep.subr.mxu0 0.0
    %565 = vmatpush1.msra.mxu0 0.0
    %566 = vmatprep.subr.mxu0 0.0
    %567 = vmatpush1.msra.mxu0 0.0
    %568 = vmatprep.subr.mxu0 0.0
    %569 = vmatpush1.msra.mxu0 0.0
    %570 = vmatprep.subr.mxu0 0.0
    %571 = vmatpush1.msra.mxu0 0.0
    %572 = vmatprep.subr.mxu0 0.0
    %573 = vmatpush1.msra.mxu0 0.0
    %574 = vmatprep.subr.mxu0 0.0
    %575 = vmatpush1.msra.mxu0 0.0
    %576 = vmatprep.subr.mxu0 0.0
    %577 = vmatpush1.msra.mxu0 0.0
    %578 = vmatprep.subr.mxu0 0.0
    %579 = vmatpush1.msra.mxu0 0.0
    %580 = vmatprep.subr.mxu0 0.0
    %581 = vmatpush1.msra.mxu0 0.0
    %582 = vmatprep.subr.mxu0 0.0
    %583 = vmatpush1.msra.mxu0 0.0
    %584 = vmatprep.subr.mxu0 0.0
    %585 = vmatpush1.msra.mxu0 0.0
    %586 = vmatprep.subr.mxu0 0.0
    %587 = vmatpush1.msra.mxu0 0.0
    %588 = vmatprep.subr.mxu0 0.0
    %589 = vmatpush1.msra.mxu0 0.0
    %590 = vmatprep.subr.mxu0 0.0
    %591 = vmatpush1.msra.mxu0 0.0
    %592 = vmatprep.subr.mxu0 0.0
    %593 = vmatpush1.msra.mxu0 0.0
    %594 = vmatprep.subr.mxu0 0.0
    %595 = vmatpush1.msra.mxu0 0.0
    %596 = vmatprep.subr.mxu0 0.0
    %597 = vmatpush1.msra.mxu0 0.0
    %598 = vmatprep.subr.mxu0 0.0
    %599 = vmatpush1.msra.mxu0 0.0
    %600 = vmatprep.subr.mxu0 0.0
    %601 = vmatpush1.msra.mxu0 0.0
    %602 = vmatprep.subr.mxu0 0.0
    %603 = vmatpush1.msra.mxu0 0.0
    %604 = vmatprep.subr.mxu0 0.0
    %605 = vmatpush1.msra.mxu0 0.0
    %606 = vmatprep.subr.mxu0 0.0
    %607 = vmatpush1.msra.mxu0 0.0
    %608 = vmatprep.subr.mxu0 0.0
    %609 = vmatpush1.msra.mxu0 0.0
    %610 = vmatprep.mubr.f32.mxu0 0.0
    %611 = vmatmul.mubr.f32.gmra.mrb[0].mxu0 %v538
    %v612 = vpop.f32.mrb[0].mxu0
    %v613 = vadd.f32 0.0, %v612
    %v614 = vpop.f32.mrb[0].mxu0
    %615 = vmatprep.mubr.f32.mxu0 0.0
    %616 = vmatmul.mubr.f32.gmra.mrb[0].mxu0 %v541
    %v617 = vpop.f32.mrb[0].mxu0
    %v618 = vadd.f32 0.0, %v617
    %v619 = vpop.f32.mrb[0].mxu0
    %620 = vmatprep.mubr.f32.mxu0 0.0
    %621 = vmatmul.mubr.f32.gmra.mrb[0].mxu0 %v544
    %v622 = vpop.f32.mrb[0].mxu0
    %v623 = vadd.f32 0.0, %v622
    %v624 = vpop.f32.mrb[0].mxu0
    %625 = vdwg.mxu0
    %v627 = vsel %vm536, %v479, 0
    %v630 = vsel %vm536, %v480, 0
    %v633 = vsel %vm536, %v481, 0
    %635 = vmatprep.subr.mxu0 0.0
    %636 = vmatpush1.msra.mxu0 %v527
    %637 = vmatprep.subr.mxu0 0.0
    %638 = vmatpush1.msra.mxu0 %v528
    %639 = vmatprep.subr.mxu0 0.0
    %640 = vmatpush1.msra.mxu0 %v529
    %641 = vmatprep.subr.mxu0 0.0
    %642 = vmatpush1.msra.mxu0 %v530
    %643 = vmatprep.subr.mxu0 0.0
    %644 = vmatpush1.msra.mxu0 0.0
    %645 = vmatprep.subr.mxu0 0.0
    %646 = vmatpush1.msra.mxu0 0.0
    %647 = vmatprep.subr.mxu0 0.0
    %648 = vmatpush1.msra.mxu0 0.0
    %649 = vmatprep.subr.mxu0 0.0
    %650 = vmatpush1.msra.mxu0 0.0
    %651 = vmatprep.subr.mxu0 0.0
    %652 = vmatpush1.msra.mxu0 0.0
    %653 = vmatprep.subr.mxu0 0.0
    %654 = vmatpush1.msra.mxu0 0.0
    %655 = vmatprep.subr.mxu0 0.0
    %656 = vmatpush1.msra.mxu0 0.0
    %657 = vmatprep.subr.mxu0 0.0
    %658 = vmatpush1.msra.mxu0 0.0
    %659 = vmatprep.subr.mxu0 0.0
    %660 = vmatpush1.msra.mxu0 0.0
    %661 = vmatprep.subr.mxu0 0.0
    %662 = vmatpush1.msra.mxu0 0.0
    %663 = vmatprep.subr.mxu0 0.0
    %664 = vmatpush1.msra.mxu0 0.0
    %665 = vmatprep.subr.mxu0 0.0
    %666 = vmatpush1.msra.mxu0 0.0
    %667 = vmatprep.subr.mxu0 0.0
    %668 = vmatpush1.msra.mxu0 0.0
    %669 = vmatprep.subr.mxu0 0.0
    %670 = vmatpush1.msra.mxu0 0.0
    %671 = vmatprep.subr.mxu0 0.0
    %672 = vmatpush1.msra.mxu0 0.0
    %673 = vmatprep.subr.mxu0 0.0
    %674 = vmatpush1.msra.mxu0 0.0
    %675 = vmatprep.subr.mxu0 0.0
    %676 = vmatpush1.msra.mxu0 0.0
    %677 = vmatprep.subr.mxu0 0.0
    %678 = vmatpush1.msra.mxu0 0.0
    %679 = vmatprep.subr.mxu0 0.0
    %680 = vmatpush1.msra.mxu0 0.0
    %681 = vmatprep.subr.mxu0 0.0
    %682 = vmatpush1.msra.mxu0 0.0
    %683 = vmatprep.subr.mxu0 0.0
    %684 = vmatpush1.msra.mxu0 0.0
    %685 = vmatprep.subr.mxu0 0.0
    %686 = vmatpush1.msra.mxu0 0.0
    %687 = vmatprep.subr.mxu0 0.0
    %688 = vmatpush1.msra.mxu0 0.0
    %689 = vmatprep.subr.mxu0 0.0
    %690 = vmatpush1.msra.mxu0 0.0
    %691 = vmatprep.subr.mxu0 0.0
    %692 = vmatpush1.msra.mxu0 0.0
    %693 = vmatprep.subr.mxu0 0.0
    %694 = vmatpush1.msra.mxu0 0.0
    %695 = vmatprep.subr.mxu0 0.0
    %696 = vmatpush1.msra.mxu0 0.0
    %697 = vmatprep.subr.mxu0 0.0
    %698 = vmatpush1.msra.mxu0 0.0
    %699 = vmatprep.mubr.f32.mxu0 0.0
    %700 = vmatmul.mubr.f32.gmra.mrb[0].mxu0 %v627
    %v701 = vpop.f32.mrb[0].mxu0
    %v702 = vadd.f32 %v613, %v701
    %v703 = vpop.f32.mrb[0].mxu0
    %704 = vmatprep.mubr.f32.mxu0 0.0
    %705 = vmatmul.mubr.f32.gmra.mrb[0].mxu0 %v630
    %v706 = vpop.f32.mrb[0].mxu0
    %v707 = vadd.f32 %v618, %v706
    %v708 = vpop.f32.mrb[0].mxu0
    %709 = vmatprep.mubr.f32.mxu0 0.0
    %710 = vmatmul.mubr.f32.gmra.mrb[0].mxu0 %v633
    %v711 = vpop.f32.mrb[0].mxu0
    %v712 = vadd.f32 %v623, %v711
    %v713 = vpop.f32.mrb[0].mxu0
    %714 = vdwg.mxu0
    %s715 = scalar_lea.vmem %s3, 64
    %v716 = vld [vmem:[%s715] sm:$0xff]
    %v717 = vld [vmem:[%s715 + $0x8] sm:$0xff]
    %v718 = vld [vmem:[%s715 + $0x10] sm:$0xff]
    %v719 = vld [vmem:[%s715 + $0x18] sm:$0xff]
    %v721 = vsel %vm536, %v485, 0
    %v724 = vsel %vm536, %v486, 0
    %v727 = vsel %vm536, %v487, 0
    %729 = vmatprep.subr.mxu0 0.0
    %730 = vmatpush1.msra.mxu0 %v716
    %731 = vmatprep.subr.mxu0 0.0
    %732 = vmatpush1.msra.mxu0 %v717
    %733 = vmatprep.subr.mxu0 0.0
    %734 = vmatpush1.msra.mxu0 %v718
    %735 = vmatprep.subr.mxu0 0.0
    %736 = vmatpush1.msra.mxu0 %v719
    %737 = vmatprep.subr.mxu0 0.0
    %738 = vmatpush1.msra.mxu0 0.0
    %739 = vmatprep.subr.mxu0 0.0
    %740 = vmatpush1.msra.mxu0 0.0
    %741 = vmatprep.subr.mxu0 0.0
    %742 = vmatpush1.msra.mxu0 0.0
    %743 = vmatprep.subr.mxu0 0.0
    %744 = vmatpush1.msra.mxu0 0.0
    %745 = vmatprep.subr.mxu0 0.0
    %746 = vmatpush1.msra.mxu0 0.0
    %747 = vmatprep.subr.mxu0 0.0
    %748 = vmatpush1.msra.mxu0 0.0
    %749 = vmatprep.subr.mxu0 0.0
    %750 = vmatpush1.msra.mxu0 0.0
    %751 = vmatprep.subr.mxu0 0.0
    %752 = vmatpush1.msra.mxu0 0.0
    %753 = vmatprep.subr.mxu0 0.0
    %754 = vmatpush1.msra.mxu0 0.0
    %755 = vmatprep.subr.mxu0 0.0
    %756 = vmatpush1.msra.mxu0 0.0
    %757 = vmatprep.subr.mxu0 0.0
    %758 = vmatpush1.msra.mxu0 0.0
    %759 = vmatprep.subr.mxu0 0.0
    %760 = vmatpush1.msra.mxu0 0.0
    %761 = vmatprep.subr.mxu0 0.0
    %762 = vmatpush1.msra.mxu0 0.0
    %763 = vmatprep.subr.mxu0 0.0
    %764 = vmatpush1.msra.mxu0 0.0
    %765 = vmatprep.subr.mxu0 0.0
    %766 = vmatpush1.msra.mxu0 0.0
    %767 = vmatprep.subr.mxu0 0.0
    %768 = vmatpush1.msra.mxu0 0.0
    %769 = vmatprep.subr.mxu0 0.0
    %770 = vmatpush1.msra.mxu0 0.0
    %771 = vmatprep.subr.mxu0 0.0
    %772 = vmatpush1.msra.mxu0 0.0
    %773 = vmatprep.subr.mxu0 0.0
    %774 = vmatpush1.msra.mxu0 0.0
    %775 = vmatprep.subr.mxu0 0.0
    %776 = vmatpush1.msra.mxu0 0.0
    %777 = vmatprep.subr.mxu0 0.0
    %778 = vmatpush1.msra.mxu0 0.0
    %779 = vmatprep.subr.mxu0 0.0
    %780 = vmatpush1.msra.mxu0 0.0
    %781 = vmatprep.subr.mxu0 0.0
    %782 = vmatpush1.msra.mxu0 0.0
    %783 = vmatprep.subr.mxu0 0.0
    %784 = vmatpush1.msra.mxu0 0.0
    %785 = vmatprep.subr.mxu0 0.0
    %786 = vmatpush1.msra.mxu0 0.0
    %787 = vmatprep.subr.mxu0 0.0
    %788 = vmatpush1.msra.mxu0 0.0
    %789 = vmatprep.subr.mxu0 0.0
    %790 = vmatpush1.msra.mxu0 0.0
    %791 = vmatprep.subr.mxu0 0.0
    %792 = vmatpush1.msra.mxu0 0.0
    %793 = vmatprep.mubr.f32.mxu0 0.0
    %794 = vmatmul.mubr.f32.gmra.mrb[0].mxu0 %v721
    %v795 = vpop.f32.mrb[0].mxu0
    %v796 = vadd.f32 0.0, %v795
    %v797 = vpop.f32.mrb[0].mxu0
    %798 = vmatprep.mubr.f32.mxu0 0.0
    %799 = vmatmul.mubr.f32.gmra.mrb[0].mxu0 %v724
    %v800 = vpop.f32.mrb[0].mxu0
    %v801 = vadd.f32 0.0, %v800
    %v802 = vpop.f32.mrb[0].mxu0
    %803 = vmatprep.mubr.f32.mxu0 0.0
    %804 = vmatmul.mubr.f32.gmra.mrb[0].mxu0 %v727
    %v805 = vpop.f32.mrb[0].mxu0
    %v806 = vadd.f32 0.0, %v805
    %v807 = vpop.f32.mrb[0].mxu0
    %808 = vdwg.mxu0
    %v809 = vadd.f32 %v702, %v796
    %v810 = vadd.f32 %v707, %v801
    %v811 = vadd.f32 %v712, %v806
    %s812 = scalar_lea.vmem %s3, 96
    %v813 = vld [vmem:[%s812] sm:$0xff]
    %v814 = vld [vmem:[%s812 + $0x8] sm:$0xff]
    %v815 = vld [vmem:[%s812 + $0x10] sm:$0xff]
    %v816 = vld [vmem:[%s812 + $0x18] sm:$0xff]
    %v818 = vsel %vm536, %v488, 0
    %v821 = vsel %vm536, %v489, 0
    %v824 = vsel %vm536, %v490, 0
    %826 = vmatprep.subr.mxu0 0.0
    %827 = vmatpush1.msra.mxu0 %v813
    %828 = vmatprep.subr.mxu0 0.0
    %829 = vmatpush1.msra.mxu0 %v814
    %830 = vmatprep.subr.mxu0 0.0
    %831 = vmatpush1.msra.mxu0 %v815
    %832 = vmatprep.subr.mxu0 0.0
    %833 = vmatpush1.msra.mxu0 %v816
    %834 = vmatprep.subr.mxu0 0.0
    %835 = vmatpush1.msra.mxu0 0.0
    %836 = vmatprep.subr.mxu0 0.0
    %837 = vmatpush1.msra.mxu0 0.0
    %838 = vmatprep.subr.mxu0 0.0
    %839 = vmatpush1.msra.mxu0 0.0
    %840 = vmatprep.subr.mxu0 0.0
    %841 = vmatpush1.msra.mxu0 0.0
    %842 = vmatprep.subr.mxu0 0.0
    %843 = vmatpush1.msra.mxu0 0.0
    %844 = vmatprep.subr.mxu0 0.0
    %845 = vmatpush1.msra.mxu0 0.0
    %846 = vmatprep.subr.mxu0 0.0
    %847 = vmatpush1.msra.mxu0 0.0
    %848 = vmatprep.subr.mxu0 0.0
    %849 = vmatpush1.msra.mxu0 0.0
    %850 = vmatprep.subr.mxu0 0.0
    %851 = vmatpush1.msra.mxu0 0.0
    %852 = vmatprep.subr.mxu0 0.0
    %853 = vmatpush1.msra.mxu0 0.0
    %854 = vmatprep.subr.mxu0 0.0
    %855 = vmatpush1.msra.mxu0 0.0
    %856 = vmatprep.subr.mxu0 0.0
    %857 = vmatpush1.msra.mxu0 0.0
    %858 = vmatprep.subr.mxu0 0.0
    %859 = vmatpush1.msra.mxu0 0.0
    %860 = vmatprep.subr.mxu0 0.0
    %861 = vmatpush1.msra.mxu0 0.0
    %862 = vmatprep.subr.mxu0 0.0
    %863 = vmatpush1.msra.mxu0 0.0
    %864 = vmatprep.subr.mxu0 0.0
    %865 = vmatpush1.msra.mxu0 0.0
    %866 = vmatprep.subr.mxu0 0.0
    %867 = vmatpush1.msra.mxu0 0.0
    %868 = vmatprep.subr.mxu0 0.0
    %869 = vmatpush1.msra.mxu0 0.0
    %870 = vmatprep.subr.mxu0 0.0
    %871 = vmatpush1.msra.mxu0 0.0
    %872 = vmatprep.subr.mxu0 0.0
    %873 = vmatpush1.msra.mxu0 0.0
    %874 = vmatprep.subr.mxu0 0.0
    %875 = vmatpush1.msra.mxu0 0.0
    %876 = vmatprep.subr.mxu0 0.0
    %877 = vmatpush1.msra.mxu0 0.0
    %878 = vmatprep.subr.mxu0 0.0
    %879 = vmatpush1.msra.mxu0 0.0
    %880 = vmatprep.subr.mxu0 0.0
    %881 = vmatpush1.msra.mxu0 0.0
    %882 = vmatprep.subr.mxu0 0.0
    %883 = vmatpush1.msra.mxu0 0.0
    %884 = vmatprep.subr.mxu0 0.0
    %885 = vmatpush1.msra.mxu0 0.0
    %886 = vmatprep.subr.mxu0 0.0
    %887 = vmatpush1.msra.mxu0 0.0
    %888 = vmatprep.subr.mxu0 0.0
    %889 = vmatpush1.msra.mxu0 0.0
    %890 = vmatprep.mubr.f32.mxu0 0.0
    %891 = vmatmul.mubr.f32.gmra.mrb[0].mxu0 %v818
    %v892 = vpop.f32.mrb[0].mxu0
    %v893 = vadd.f32 0.0, %v892
    %v894 = vpop.f32.mrb[0].mxu0
    %895 = vmatprep.mubr.f32.mxu0 0.0
    %896 = vmatmul.mubr.f32.gmra.mrb[0].mxu0 %v821
    %v897 = vpop.f32.mrb[0].mxu0
    %v898 = vadd.f32 0.0, %v897
    %v899 = vpop.f32.mrb[0].mxu0
    %900 = vmatprep.mubr.f32.mxu0 0.0
    %901 = vmatmul.mubr.f32.gmra.mrb[0].mxu0 %v824
    %v902 = vpop.f32.mrb[0].mxu0
    %v903 = vadd.f32 0.0, %v902
    %v904 = vpop.f32.mrb[0].mxu0
    %905 = vdwg.mxu0
    %v906 = vadd.f32 %v809, %v893
    %v907 = vadd.f32 %v810, %v898
    %v908 = vadd.f32 %v811, %v903
    %s909 = scalar_lea.vmem %s3, 128
    %v910 = vld [vmem:[%s909] sm:$0xff]
    %v911 = vld [vmem:[%s909 + $0x8] sm:$0xff]
    %v912 = vld [vmem:[%s909 + $0x10] sm:$0xff]
    %v913 = vld [vmem:[%s909 + $0x18] sm:$0xff]
    %v915 = vsel %vm536, %v491, 0
    %v918 = vsel %vm536, %v492, 0
    %v921 = vsel %vm536, %v493, 0
    %923 = vmatprep.subr.mxu0 0.0
    %924 = vmatpush1.msra.mxu0 %v910
    %925 = vmatprep.subr.mxu0 0.0
    %926 = vmatpush1.msra.mxu0 %v911
    %927 = vmatprep.subr.mxu0 0.0
    %928 = vmatpush1.msra.mxu0 %v912
    %929 = vmatprep.subr.mxu0 0.0
    %930 = vmatpush1.msra.mxu0 %v913
    %931 = vmatprep.subr.mxu0 0.0
    %932 = vmatpush1.msra.mxu0 0.0
    %933 = vmatprep.subr.mxu0 0.0
    %934 = vmatpush1.msra.mxu0 0.0
    %935 = vmatprep.subr.mxu0 0.0
    %936 = vmatpush1.msra.mxu0 0.0
    %937 = vmatprep.subr.mxu0 0.0
    %938 = vmatpush1.msra.mxu0 0.0
    %939 = vmatprep.subr.mxu0 0.0
    %940 = vmatpush1.msra.mxu0 0.0
    %941 = vmatprep.subr.mxu0 0.0
    %942 = vmatpush1.msra.mxu0 0.0
    %943 = vmatprep.subr.mxu0 0.0
    %944 = vmatpush1.msra.mxu0 0.0
    %945 = vmatprep.subr.mxu0 0.0
    %946 = vmatpush1.msra.mxu0 0.0
    %947 = vmatprep.subr.mxu0 0.0
    %948 = vmatpush1.msra.mxu0 0.0
    %949 = vmatprep.subr.mxu0 0.0
    %950 = vmatpush1.msra.mxu0 0.0
    %951 = vmatprep.subr.mxu0 0.0
    %952 = vmatpush1.msra.mxu0 0.0
    %953 = vmatprep.subr.mxu0 0.0
    %954 = vmatpush1.msra.mxu0 0.0
    %955 = vmatprep.subr.mxu0 0.0
    %956 = vmatpush1.msra.mxu0 0.0
    %957 = vmatprep.subr.mxu0 0.0
    %958 = vmatpush1.msra.mxu0 0.0
    %959 = vmatprep.subr.mxu0 0.0
    %960 = vmatpush1.msra.mxu0 0.0
    %961 = vmatprep.subr.mxu0 0.0
    %962 = vmatpush1.msra.mxu0 0.0
    %963 = vmatprep.subr.mxu0 0.0
    %964 = vmatpush1.msra.mxu0 0.0
    %965 = vmatprep.subr.mxu0 0.0
    %966 = vmatpush1.msra.mxu0 0.0
    %967 = vmatprep.subr.mxu0 0.0
    %968 = vmatpush1.msra.mxu0 0.0
    %969 = vmatprep.subr.mxu0 0.0
    %970 = vmatpush1.msra.mxu0 0.0
    %971 = vmatprep.subr.mxu0 0.0
    %972 = vmatpush1.msra.mxu0 0.0
    %973 = vmatprep.subr.mxu0 0.0
    %974 = vmatpush1.msra.mxu0 0.0
    %975 = vmatprep.subr.mxu0 0.0
    %976 = vmatpush1.msra.mxu0 0.0
    %977 = vmatprep.subr.mxu0 0.0
    %978 = vmatpush1.msra.mxu0 0.0
    %979 = vmatprep.subr.mxu0 0.0
    %980 = vmatpush1.msra.mxu0 0.0
    %981 = vmatprep.subr.mxu0 0.0
    %982 = vmatpush1.msra.mxu0 0.0
    %983 = vmatprep.subr.mxu0 0.0
    %984 = vmatpush1.msra.mxu0 0.0
    %985 = vmatprep.subr.mxu0 0.0
    %986 = vmatpush1.msra.mxu0 0.0
    %987 = vmatprep.mubr.f32.mxu0 0.0
    %988 = vmatmul.mubr.f32.gmra.mrb[0].mxu0 %v915
    %v989 = vpop.f32.mrb[0].mxu0
    %v990 = vadd.f32 0.0, %v989
    %v991 = vpop.f32.mrb[0].mxu0
    %992 = vmatprep.mubr.f32.mxu0 0.0
    %993 = vmatmul.mubr.f32.gmra.mrb[0].mxu0 %v918
    %v994 = vpop.f32.mrb[0].mxu0
    %v995 = vadd.f32 0.0, %v994
    %v996 = vpop.f32.mrb[0].mxu0
    %997 = vmatprep.mubr.f32.mxu0 0.0
    %998 = vmatmul.mubr.f32.gmra.mrb[0].mxu0 %v921
    %v999 = vpop.f32.mrb[0].mxu0
    %v1000 = vadd.f32 0.0, %v999
    %v1001 = vpop.f32.mrb[0].mxu0
    %1002 = vdwg.mxu0
    %v1003 = vadd.f32 %v906, %v990
    %v1004 = vadd.f32 %v907, %v995
    %v1005 = vadd.f32 %v908, %v1000
    %s1006 = scalar_lea.vmem %s3, 160
    %v1007 = vld [vmem:[%s1006] sm:$0xff]
    %v1008 = vld [vmem:[%s1006 + $0x8] sm:$0xff]
    %v1009 = vld [vmem:[%s1006 + $0x10] sm:$0xff]
    %v1010 = vld [vmem:[%s1006 + $0x18] sm:$0xff]
    %v1012 = vsel %vm536, %v494, 0
    %v1015 = vsel %vm536, %v495, 0
    %v1018 = vsel %vm536, %v496, 0
    %1020 = vmatprep.subr.mxu0 0.0
    %1021 = vmatpush1.msra.mxu0 %v1007
    %1022 = vmatprep.subr.mxu0 0.0
    %1023 = vmatpush1.msra.mxu0 %v1008
    %1024 = vmatprep.subr.mxu0 0.0
    %1025 = vmatpush1.msra.mxu0 %v1009
    %1026 = vmatprep.subr.mxu0 0.0
    %1027 = vmatpush1.msra.mxu0 %v1010
    %1028 = vmatprep.subr.mxu0 0.0
    %1029 = vmatpush1.msra.mxu0 0.0
    %1030 = vmatprep.subr.mxu0 0.0
    %1031 = vmatpush1.msra.mxu0 0.0
    %1032 = vmatprep.subr.mxu0 0.0
    %1033 = vmatpush1.msra.mxu0 0.0
    %1034 = vmatprep.subr.mxu0 0.0
    %1035 = vmatpush1.msra.mxu0 0.0
    %1036 = vmatprep.subr.mxu0 0.0
    %1037 = vmatpush1.msra.mxu0 0.0
    %1038 = vmatprep.subr.mxu0 0.0
    %1039 = vmatpush1.msra.mxu0 0.0
    %1040 = vmatprep.subr.mxu0 0.0
    %1041 = vmatpush1.msra.mxu0 0.0
    %1042 = vmatprep.subr.mxu0 0.0
    %1043 = vmatpush1.msra.mxu0 0.0
    %1044 = vmatprep.subr.mxu0 0.0
    %1045 = vmatpush1.msra.mxu0 0.0
    %1046 = vmatprep.subr.mxu0 0.0
    %1047 = vmatpush1.msra.mxu0 0.0
    %1048 = vmatprep.subr.mxu0 0.0
    %1049 = vmatpush1.msra.mxu0 0.0
    %1050 = vmatprep.subr.mxu0 0.0
    %1051 = vmatpush1.msra.mxu0 0.0
    %1052 = vmatprep.subr.mxu0 0.0
    %1053 = vmatpush1.msra.mxu0 0.0
    %1054 = vmatprep.subr.mxu0 0.0
    %1055 = vmatpush1.msra.mxu0 0.0
    %1056 = vmatprep.subr.mxu0 0.0
    %1057 = vmatpush1.msra.mxu0 0.0
    %1058 = vmatprep.subr.mxu0 0.0
    %1059 = vmatpush1.msra.mxu0 0.0
    %1060 = vmatprep.subr.mxu0 0.0
    %1061 = vmatpush1.msra.mxu0 0.0
    %1062 = vmatprep.subr.mxu0 0.0
    %1063 = vmatpush1.msra.mxu0 0.0
    %1064 = vmatprep.subr.mxu0 0.0
    %1065 = vmatpush1.msra.mxu0 0.0
    %1066 = vmatprep.subr.mxu0 0.0
    %1067 = vmatpush1.msra.mxu0 0.0
    %1068 = vmatprep.subr.mxu0 0.0
    %1069 = vmatpush1.msra.mxu0 0.0
    %1070 = vmatprep.subr.mxu0 0.0
    %1071 = vmatpush1.msra.mxu0 0.0
    %1072 = vmatprep.subr.mxu0 0.0
    %1073 = vmatpush1.msra.mxu0 0.0
    %1074 = vmatprep.subr.mxu0 0.0
    %1075 = vmatpush1.msra.mxu0 0.0
    %1076 = vmatprep.subr.mxu0 0.0
    %1077 = vmatpush1.msra.mxu0 0.0
    %1078 = vmatprep.subr.mxu0 0.0
    %1079 = vmatpush1.msra.mxu0 0.0
    %1080 = vmatprep.subr.mxu0 0.0
    %1081 = vmatpush1.msra.mxu0 0.0
    %1082 = vmatprep.subr.mxu0 0.0
    %1083 = vmatpush1.msra.mxu0 0.0
    %1084 = vmatprep.mubr.f32.mxu0 0.0
    %1085 = vmatmul.mubr.f32.gmra.mrb[0].mxu0 %v1012
    %v1086 = vpop.f32.mrb[0].mxu0
    %v1087 = vadd.f32 0.0, %v1086
    %v1088 = vpop.f32.mrb[0].mxu0
    %1089 = vmatprep.mubr.f32.mxu0 0.0
    %1090 = vmatmul.mubr.f32.gmra.mrb[0].mxu0 %v1015
    %v1091 = vpop.f32.mrb[0].mxu0
    %v1092 = vadd.f32 0.0, %v1091
    %v1093 = vpop.f32.mrb[0].mxu0
    %1094 = vmatprep.mubr.f32.mxu0 0.0
    %1095 = vmatmul.mubr.f32.gmra.mrb[0].mxu0 %v1018
    %v1096 = vpop.f32.mrb[0].mxu0
    %v1097 = vadd.f32 0.0, %v1096
    %v1098 = vpop.f32.mrb[0].mxu0
    %1099 = vdwg.mxu0
    %v1100 = vadd.f32 %v1003, %v1087
    %v1101 = vadd.f32 %v1004, %v1092
    %v1102 = vadd.f32 %v1005, %v1097
    %s1103 = scalar_lea.vmem %s3, 192
    %v1104 = vld [vmem:[%s1103] sm:$0xff]
    %v1105 = vld [vmem:[%s1103 + $0x8] sm:$0xff]
    %v1106 = vld [vmem:[%s1103 + $0x10] sm:$0xff]
    %v1107 = vld [vmem:[%s1103 + $0x18] sm:$0xff]
    %v1109 = vsel %vm536, %v497, 0
    %v1112 = vsel %vm536, %v498, 0
    %v1115 = vsel %vm536, %v499, 0
    %1117 = vmatprep.subr.mxu0 0.0
    %1118 = vmatpush1.msra.mxu0 %v1104
    %1119 = vmatprep.subr.mxu0 0.0
    %1120 = vmatpush1.msra.mxu0 %v1105
    %1121 = vmatprep.subr.mxu0 0.0
    %1122 = vmatpush1.msra.mxu0 %v1106
    %1123 = vmatprep.subr.mxu0 0.0
    %1124 = vmatpush1.msra.mxu0 %v1107
    %1125 = vmatprep.subr.mxu0 0.0
    %1126 = vmatpush1.msra.mxu0 0.0
    %1127 = vmatprep.subr.mxu0 0.0
    %1128 = vmatpush1.msra.mxu0 0.0
    %1129 = vmatprep.subr.mxu0 0.0
    %1130 = vmatpush1.msra.mxu0 0.0
    %1131 = vmatprep.subr.mxu0 0.0
    %1132 = vmatpush1.msra.mxu0 0.0
    %1133 = vmatprep.subr.mxu0 0.0
    %1134 = vmatpush1.msra.mxu0 0.0
    %1135 = vmatprep.subr.mxu0 0.0
    %1136 = vmatpush1.msra.mxu0 0.0
    %1137 = vmatprep.subr.mxu0 0.0
    %1138 = vmatpush1.msra.mxu0 0.0
    %1139 = vmatprep.subr.mxu0 0.0
    %1140 = vmatpush1.msra.mxu0 0.0
    %1141 = vmatprep.subr.mxu0 0.0
    %1142 = vmatpush1.msra.mxu0 0.0
    %1143 = vmatprep.subr.mxu0 0.0
    %1144 = vmatpush1.msra.mxu0 0.0
    %1145 = vmatprep.subr.mxu0 0.0
    %1146 = vmatpush1.msra.mxu0 0.0
    %1147 = vmatprep.subr.mxu0 0.0
    %1148 = vmatpush1.msra.mxu0 0.0
    %1149 = vmatprep.subr.mxu0 0.0
    %1150 = vmatpush1.msra.mxu0 0.0
    %1151 = vmatprep.subr.mxu0 0.0
    %1152 = vmatpush1.msra.mxu0 0.0
    %1153 = vmatprep.subr.mxu0 0.0
    %1154 = vmatpush1.msra.mxu0 0.0
    %1155 = vmatprep.subr.mxu0 0.0
    %1156 = vmatpush1.msra.mxu0 0.0
    %1157 = vmatprep.subr.mxu0 0.0
    %1158 = vmatpush1.msra.mxu0 0.0
    %1159 = vmatprep.subr.mxu0 0.0
    %1160 = vmatpush1.msra.mxu0 0.0
    %1161 = vmatprep.subr.mxu0 0.0
    %1162 = vmatpush1.msra.mxu0 0.0
    %1163 = vmatprep.subr.mxu0 0.0
    %1164 = vmatpush1.msra.mxu0 0.0
    %1165 = vmatprep.subr.mxu0 0.0
    %1166 = vmatpush1.msra.mxu0 0.0
    %1167 = vmatprep.subr.mxu0 0.0
    %1168 = vmatpush1.msra.mxu0 0.0
    %1169 = vmatprep.subr.mxu0 0.0
    %1170 = vmatpush1.msra.mxu0 0.0
    %1171 = vmatprep.subr.mxu0 0.0
    %1172 = vmatpush1.msra.mxu0 0.0
    %1173 = vmatprep.subr.mxu0 0.0
    %1174 = vmatpush1.msra.mxu0 0.0
    %1175 = vmatprep.subr.mxu0 0.0
    %1176 = vmatpush1.msra.mxu0 0.0
    %1177 = vmatprep.subr.mxu0 0.0
    %1178 = vmatpush1.msra.mxu0 0.0
    %1179 = vmatprep.subr.mxu0 0.0
    %1180 = vmatpush1.msra.mxu0 0.0
    %1181 = vmatprep.mubr.f32.mxu0 0.0
    %1182 = vmatmul.mubr.f32.gmra.mrb[0].mxu0 %v1109
    %v1183 = vpop.f32.mrb[0].mxu0
    %v1184 = vadd.f32 0.0, %v1183
    %v1185 = vpop.f32.mrb[0].mxu0
    %1186 = vmatprep.mubr.f32.mxu0 0.0
    %1187 = vmatmul.mubr.f32.gmra.mrb[0].mxu0 %v1112
    %v1188 = vpop.f32.mrb[0].mxu0
    %v1189 = vadd.f32 0.0, %v1188
    %v1190 = vpop.f32.mrb[0].mxu0
    %1191 = vmatprep.mubr.f32.mxu0 0.0
    %1192 = vmatmul.mubr.f32.gmra.mrb[0].mxu0 %v1115
    %v1193 = vpop.f32.mrb[0].mxu0
    %v1194 = vadd.f32 0.0, %v1193
    %v1195 = vpop.f32.mrb[0].mxu0
    %1196 = vdwg.mxu0
    %v1197 = vadd.f32 %v1100, %v1184
    %v1198 = vadd.f32 %v1101, %v1189
    %v1199 = vadd.f32 %v1102, %v1194
    %s1200 = scalar_lea.vmem %s3, 224
    %v1201 = vld [vmem:[%s1200] sm:$0xff]
    %v1202 = vld [vmem:[%s1200 + $0x8] sm:$0xff]
    %v1203 = vld [vmem:[%s1200 + $0x10] sm:$0xff]
    %v1204 = vld [vmem:[%s1200 + $0x18] sm:$0xff]
    %v1206 = vsel %vm536, %v500, 0
    %v1209 = vsel %vm536, %v501, 0
    %v1212 = vsel %vm536, %v502, 0
    %1214 = vmatprep.subr.mxu0 0.0
    %1215 = vmatpush1.msra.mxu0 %v1201
    %1216 = vmatprep.subr.mxu0 0.0
    %1217 = vmatpush1.msra.mxu0 %v1202
    %1218 = vmatprep.subr.mxu0 0.0
    %1219 = vmatpush1.msra.mxu0 %v1203
    %1220 = vmatprep.subr.mxu0 0.0
    %1221 = vmatpush1.msra.mxu0 %v1204
    %1222 = vmatprep.subr.mxu0 0.0
    %1223 = vmatpush1.msra.mxu0 0.0
    %1224 = vmatprep.subr.mxu0 0.0
    %1225 = vmatpush1.msra.mxu0 0.0
    %1226 = vmatprep.subr.mxu0 0.0
    %1227 = vmatpush1.msra.mxu0 0.0
    %1228 = vmatprep.subr.mxu0 0.0
    %1229 = vmatpush1.msra.mxu0 0.0
    %1230 = vmatprep.subr.mxu0 0.0
    %1231 = vmatpush1.msra.mxu0 0.0
    %1232 = vmatprep.subr.mxu0 0.0
    %1233 = vmatpush1.msra.mxu0 0.0
    %1234 = vmatprep.subr.mxu0 0.0
    %1235 = vmatpush1.msra.mxu0 0.0
    %1236 = vmatprep.subr.mxu0 0.0
    %1237 = vmatpush1.msra.mxu0 0.0
    %1238 = vmatprep.subr.mxu0 0.0
    %1239 = vmatpush1.msra.mxu0 0.0
    %1240 = vmatprep.subr.mxu0 0.0
    %1241 = vmatpush1.msra.mxu0 0.0
    %1242 = vmatprep.subr.mxu0 0.0
    %1243 = vmatpush1.msra.mxu0 0.0
    %1244 = vmatprep.subr.mxu0 0.0
    %1245 = vmatpush1.msra.mxu0 0.0
    %1246 = vmatprep.subr.mxu0 0.0
    %1247 = vmatpush1.msra.mxu0 0.0
    %1248 = vmatprep.subr.mxu0 0.0
    %1249 = vmatpush1.msra.mxu0 0.0
    %1250 = vmatprep.subr.mxu0 0.0
    %1251 = vmatpush1.msra.mxu0 0.0
    %1252 = vmatprep.subr.mxu0 0.0
    %1253 = vmatpush1.msra.mxu0 0.0
    %1254 = vmatprep.subr.mxu0 0.0
    %1255 = vmatpush1.msra.mxu0 0.0
    %1256 = vmatprep.subr.mxu0 0.0
    %1257 = vmatpush1.msra.mxu0 0.0
    %1258 = vmatprep.subr.mxu0 0.0
    %1259 = vmatpush1.msra.mxu0 0.0
    %1260 = vmatprep.subr.mxu0 0.0
    %1261 = vmatpush1.msra.mxu0 0.0
    %1262 = vmatprep.subr.mxu0 0.0
    %1263 = vmatpush1.msra.mxu0 0.0
    %1264 = vmatprep.subr.mxu0 0.0
    %1265 = vmatpush1.msra.mxu0 0.0
    %1266 = vmatprep.subr.mxu0 0.0
    %1267 = vmatpush1.msra.mxu0 0.0
    %1268 = vmatprep.subr.mxu0 0.0
    %1269 = vmatpush1.msra.mxu0 0.0
    %1270 = vmatprep.subr.mxu0 0.0
    %1271 = vmatpush1.msra.mxu0 0.0
    %1272 = vmatprep.subr.mxu0 0.0
    %1273 = vmatpush1.msra.mxu0 0.0
    %1274 = vmatprep.subr.mxu0 0.0
    %1275 = vmatpush1.msra.mxu0 0.0
    %1276 = vmatprep.subr.mxu0 0.0
    %1277 = vmatpush1.msra.mxu0 0.0
    %1278 = vmatprep.mubr.f32.mxu0 0.0
    %1279 = vmatmul.mubr.f32.gmra.mrb[0].mxu0 %v1206
    %v1280 = vpop.f32.mrb[0].mxu0
    %v1281 = vadd.f32 0.0, %v1280
    %v1282 = vpop.f32.mrb[0].mxu0
    %1283 = vmatprep.mubr.f32.mxu0 0.0
    %1284 = vmatmul.mubr.f32.gmra.mrb[0].mxu0 %v1209
    %v1285 = vpop.f32.mrb[0].mxu0
    %v1286 = vadd.f32 0.0, %v1285
    %v1287 = vpop.f32.mrb[0].mxu0
    %1288 = vmatprep.mubr.f32.mxu0 0.0
    %1289 = vmatmul.mubr.f32.gmra.mrb[0].mxu0 %v1212
    %v1290 = vpop.f32.mrb[0].mxu0
    %v1291 = vadd.f32 0.0, %v1290
    %v1292 = vpop.f32.mrb[0].mxu0
    %1293 = vdwg.mxu0
    %v1294 = vadd.f32 %v1197, %v1281
    %v1295 = vadd.f32 %v1198, %v1286
    %v1296 = vadd.f32 %v1199, %v1291
    %s1297 = scalar_lea.vmem %s3, 256
    %v1298 = vld [vmem:[%s1297] sm:$0xff]
    %v1299 = vld [vmem:[%s1297 + $0x8] sm:$0xff]
    %v1300 = vld [vmem:[%s1297 + $0x10] sm:$0xff]
    %v1301 = vld [vmem:[%s1297 + $0x18] sm:$0xff]
    %v1303 = vsel %vm536, %v503, 0
    %v1306 = vsel %vm536, %v504, 0
    %v1309 = vsel %vm536, %v505, 0
    %1311 = vmatprep.subr.mxu0 0.0
    %1312 = vmatpush1.msra.mxu0 %v1298
    %1313 = vmatprep.subr.mxu0 0.0
    %1314 = vmatpush1.msra.mxu0 %v1299
    %1315 = vmatprep.subr.mxu0 0.0
    %1316 = vmatpush1.msra.mxu0 %v1300
    %1317 = vmatprep.subr.mxu0 0.0
    %1318 = vmatpush1.msra.mxu0 %v1301
    %1319 = vmatprep.subr.mxu0 0.0
    %1320 = vmatpush1.msra.mxu0 0.0
    %1321 = vmatprep.subr.mxu0 0.0
    %1322 = vmatpush1.msra.mxu0 0.0
    %1323 = vmatprep.subr.mxu0 0.0
    %1324 = vmatpush1.msra.mxu0 0.0
    %1325 = vmatprep.subr.mxu0 0.0
    %1326 = vmatpush1.msra.mxu0 0.0
    %1327 = vmatprep.subr.mxu0 0.0
    %1328 = vmatpush1.msra.mxu0 0.0
    %1329 = vmatprep.subr.mxu0 0.0
    %1330 = vmatpush1.msra.mxu0 0.0
    %1331 = vmatprep.subr.mxu0 0.0
    %1332 = vmatpush1.msra.mxu0 0.0
    %1333 = vmatprep.subr.mxu0 0.0
    %1334 = vmatpush1.msra.mxu0 0.0
    %1335 = vmatprep.subr.mxu0 0.0
    %1336 = vmatpush1.msra.mxu0 0.0
    %1337 = vmatprep.subr.mxu0 0.0
    %1338 = vmatpush1.msra.mxu0 0.0
    %1339 = vmatprep.subr.mxu0 0.0
    %1340 = vmatpush1.msra.mxu0 0.0
    %1341 = vmatprep.subr.mxu0 0.0
    %1342 = vmatpush1.msra.mxu0 0.0
    %1343 = vmatprep.subr.mxu0 0.0
    %1344 = vmatpush1.msra.mxu0 0.0
    %1345 = vmatprep.subr.mxu0 0.0
    %1346 = vmatpush1.msra.mxu0 0.0
    %1347 = vmatprep.subr.mxu0 0.0
    %1348 = vmatpush1.msra.mxu0 0.0
    %1349 = vmatprep.subr.mxu0 0.0
    %1350 = vmatpush1.msra.mxu0 0.0
    %1351 = vmatprep.subr.mxu0 0.0
    %1352 = vmatpush1.msra.mxu0 0.0
    %1353 = vmatprep.subr.mxu0 0.0
    %1354 = vmatpush1.msra.mxu0 0.0
    %1355 = vmatprep.subr.mxu0 0.0
    %1356 = vmatpush1.msra.mxu0 0.0
    %1357 = vmatprep.subr.mxu0 0.0
    %1358 = vmatpush1.msra.mxu0 0.0
    %1359 = vmatprep.subr.mxu0 0.0
    %1360 = vmatpush1.msra.mxu0 0.0
    %1361 = vmatprep.subr.mxu0 0.0
    %1362 = vmatpush1.msra.mxu0 0.0
    %1363 = vmatprep.subr.mxu0 0.0
    %1364 = vmatpush1.msra.mxu0 0.0
    %1365 = vmatprep.subr.mxu0 0.0
    %1366 = vmatpush1.msra.mxu0 0.0
    %1367 = vmatprep.subr.mxu0 0.0
    %1368 = vmatpush1.msra.mxu0 0.0
    %1369 = vmatprep.subr.mxu0 0.0
    %1370 = vmatpush1.msra.mxu0 0.0
    %1371 = vmatprep.subr.mxu0 0.0
    %1372 = vmatpush1.msra.mxu0 0.0
    %1373 = vmatprep.subr.mxu0 0.0
    %1374 = vmatpush1.msra.mxu0 0.0
    %1375 = vmatprep.mubr.f32.mxu0 0.0
    %1376 = vmatmul.mubr.f32.gmra.mrb[0].mxu0 %v1303
    %v1377 = vpop.f32.mrb[0].mxu0
    %v1378 = vadd.f32 0.0, %v1377
    %v1379 = vpop.f32.mrb[0].mxu0
    %1380 = vmatprep.mubr.f32.mxu0 0.0
    %1381 = vmatmul.mubr.f32.gmra.mrb[0].mxu0 %v1306
    %v1382 = vpop.f32.mrb[0].mxu0
    %v1383 = vadd.f32 0.0, %v1382
    %v1384 = vpop.f32.mrb[0].mxu0
    %1385 = vmatprep.mubr.f32.mxu0 0.0
    %1386 = vmatmul.mubr.f32.gmra.mrb[0].mxu0 %v1309
    %v1387 = vpop.f32.mrb[0].mxu0
    %v1388 = vadd.f32 0.0, %v1387
    %v1389 = vpop.f32.mrb[0].mxu0
    %1390 = vdwg.mxu0
    %v1391 = vadd.f32 %v1294, %v1378
    %v1392 = vadd.f32 %v1295, %v1383
    %v1393 = vadd.f32 %v1296, %v1388
    %s1394 = scalar_lea.vmem %s3, 288
    %v1395 = vld [vmem:[%s1394] sm:$0xff]
    %v1396 = vld [vmem:[%s1394 + $0x8] sm:$0xff]
    %v1397 = vld [vmem:[%s1394 + $0x10] sm:$0xff]
    %v1398 = vld [vmem:[%s1394 + $0x18] sm:$0xff]
    %v1400 = vsel %vm536, %v506, 0
    %v1403 = vsel %vm536, %v507, 0
    %v1406 = vsel %vm536, %v508, 0
    %1408 = vmatprep.subr.mxu0 0.0
    %1409 = vmatpush1.msra.mxu0 %v1395
    %1410 = vmatprep.subr.mxu0 0.0
    %1411 = vmatpush1.msra.mxu0 %v1396
    %1412 = vmatprep.subr.mxu0 0.0
    %1413 = vmatpush1.msra.mxu0 %v1397
    %1414 = vmatprep.subr.mxu0 0.0
    %1415 = vmatpush1.msra.mxu0 %v1398
    %1416 = vmatprep.subr.mxu0 0.0
    %1417 = vmatpush1.msra.mxu0 0.0
    %1418 = vmatprep.subr.mxu0 0.0
    %1419 = vmatpush1.msra.mxu0 0.0
    %1420 = vmatprep.subr.mxu0 0.0
    %1421 = vmatpush1.msra.mxu0 0.0
    %1422 = vmatprep.subr.mxu0 0.0
    %1423 = vmatpush1.msra.mxu0 0.0
    %1424 = vmatprep.subr.mxu0 0.0
    %1425 = vmatpush1.msra.mxu0 0.0
    %1426 = vmatprep.subr.mxu0 0.0
    %1427 = vmatpush1.msra.mxu0 0.0
    %1428 = vmatprep.subr.mxu0 0.0
    %1429 = vmatpush1.msra.mxu0 0.0
    %1430 = vmatprep.subr.mxu0 0.0
    %1431 = vmatpush1.msra.mxu0 0.0
    %1432 = vmatprep.subr.mxu0 0.0
    %1433 = vmatpush1.msra.mxu0 0.0
    %1434 = vmatprep.subr.mxu0 0.0
    %1435 = vmatpush1.msra.mxu0 0.0
    %1436 = vmatprep.subr.mxu0 0.0
    %1437 = vmatpush1.msra.mxu0 0.0
    %1438 = vmatprep.subr.mxu0 0.0
    %1439 = vmatpush1.msra.mxu0 0.0
    %1440 = vmatprep.subr.mxu0 0.0
    %1441 = vmatpush1.msra.mxu0 0.0
    %1442 = vmatprep.subr.mxu0 0.0
    %1443 = vmatpush1.msra.mxu0 0.0
    %1444 = vmatprep.subr.mxu0 0.0
    %1445 = vmatpush1.msra.mxu0 0.0
    %1446 = vmatprep.subr.mxu0 0.0
    %1447 = vmatpush1.msra.mxu0 0.0
    %1448 = vmatprep.subr.mxu0 0.0
    %1449 = vmatpush1.msra.mxu0 0.0
    %1450 = vmatprep.subr.mxu0 0.0
    %1451 = vmatpush1.msra.mxu0 0.0
    %1452 = vmatprep.subr.mxu0 0.0
    %1453 = vmatpush1.msra.mxu0 0.0
    %1454 = vmatprep.subr.mxu0 0.0
    %1455 = vmatpush1.msra.mxu0 0.0
    %1456 = vmatprep.subr.mxu0 0.0
    %1457 = vmatpush1.msra.mxu0 0.0
    %1458 = vmatprep.subr.mxu0 0.0
    %1459 = vmatpush1.msra.mxu0 0.0
    %1460 = vmatprep.subr.mxu0 0.0
    %1461 = vmatpush1.msra.mxu0 0.0
    %1462 = vmatprep.subr.mxu0 0.0
    %1463 = vmatpush1.msra.mxu0 0.0
    %1464 = vmatprep.subr.mxu0 0.0
    %1465 = vmatpush1.msra.mxu0 0.0
    %1466 = vmatprep.subr.mxu0 0.0
    %1467 = vmatpush1.msra.mxu0 0.0
    %1468 = vmatprep.subr.mxu0 0.0
    %1469 = vmatpush1.msra.mxu0 0.0
    %1470 = vmatprep.subr.mxu0 0.0
    %1471 = vmatpush1.msra.mxu0 0.0
    %1472 = vmatprep.mubr.f32.mxu0 0.0
    %1473 = vmatmul.mubr.f32.gmra.mrb[0].mxu0 %v1400
    %v1474 = vpop.f32.mrb[0].mxu0
    %v1475 = vadd.f32 0.0, %v1474
    %v1476 = vpop.f32.mrb[0].mxu0
    %1477 = vmatprep.mubr.f32.mxu0 0.0
    %1478 = vmatmul.mubr.f32.gmra.mrb[0].mxu0 %v1403
    %v1479 = vpop.f32.mrb[0].mxu0
    %v1480 = vadd.f32 0.0, %v1479
    %v1481 = vpop.f32.mrb[0].mxu0
    %1482 = vmatprep.mubr.f32.mxu0 0.0
    %1483 = vmatmul.mubr.f32.gmra.mrb[0].mxu0 %v1406
    %v1484 = vpop.f32.mrb[0].mxu0
    %v1485 = vadd.f32 0.0, %v1484
    %v1486 = vpop.f32.mrb[0].mxu0
    %1487 = vdwg.mxu0
    %v1488 = vadd.f32 %v1391, %v1475
    %v1489 = vadd.f32 %v1392, %v1480
    %v1490 = vadd.f32 %v1393, %v1485
    %s1491 = scalar_lea.vmem %s3, 320
    %v1492 = vld [vmem:[%s1491] sm:$0xff]
    %v1493 = vld [vmem:[%s1491 + $0x8] sm:$0xff]
    %v1494 = vld [vmem:[%s1491 + $0x10] sm:$0xff]
    %v1495 = vld [vmem:[%s1491 + $0x18] sm:$0xff]
    %v1497 = vsel %vm536, %v509, 0
    %v1500 = vsel %vm536, %v510, 0
    %v1503 = vsel %vm536, %v511, 0
    %1505 = vmatprep.subr.mxu0 0.0
    %1506 = vmatpush1.msra.mxu0 %v1492
    %1507 = vmatprep.subr.mxu0 0.0
    %1508 = vmatpush1.msra.mxu0 %v1493
    %1509 = vmatprep.subr.mxu0 0.0
    %1510 = vmatpush1.msra.mxu0 %v1494
    %1511 = vmatprep.subr.mxu0 0.0
    %1512 = vmatpush1.msra.mxu0 %v1495
    %1513 = vmatprep.subr.mxu0 0.0
    %1514 = vmatpush1.msra.mxu0 0.0
    %1515 = vmatprep.subr.mxu0 0.0
    %1516 = vmatpush1.msra.mxu0 0.0
    %1517 = vmatprep.subr.mxu0 0.0
    %1518 = vmatpush1.msra.mxu0 0.0
    %1519 = vmatprep.subr.mxu0 0.0
    %1520 = vmatpush1.msra.mxu0 0.0
    %1521 = vmatprep.subr.mxu0 0.0
    %1522 = vmatpush1.msra.mxu0 0.0
    %1523 = vmatprep.subr.mxu0 0.0
    %1524 = vmatpush1.msra.mxu0 0.0
    %1525 = vmatprep.subr.mxu0 0.0
    %1526 = vmatpush1.msra.mxu0 0.0
    %1527 = vmatprep.subr.mxu0 0.0
    %1528 = vmatpush1.msra.mxu0 0.0
    %1529 = vmatprep.subr.mxu0 0.0
    %1530 = vmatpush1.msra.mxu0 0.0
    %1531 = vmatprep.subr.mxu0 0.0
    %1532 = vmatpush1.msra.mxu0 0.0
    %1533 = vmatprep.subr.mxu0 0.0
    %1534 = vmatpush1.msra.mxu0 0.0
    %1535 = vmatprep.subr.mxu0 0.0
    %1536 = vmatpush1.msra.mxu0 0.0
    %1537 = vmatprep.subr.mxu0 0.0
    %1538 = vmatpush1.msra.mxu0 0.0
    %1539 = vmatprep.subr.mxu0 0.0
    %1540 = vmatpush1.msra.mxu0 0.0
    %1541 = vmatprep.subr.mxu0 0.0
    %1542 = vmatpush1.msra.mxu0 0.0
    %1543 = vmatprep.subr.mxu0 0.0
    %1544 = vmatpush1.msra.mxu0 0.0
    %1545 = vmatprep.subr.mxu0 0.0
    %1546 = vmatpush1.msra.mxu0 0.0
    %1547 = vmatprep.subr.mxu0 0.0
    %1548 = vmatpush1.msra.mxu0 0.0
    %1549 = vmatprep.subr.mxu0 0.0
    %1550 = vmatpush1.msra.mxu0 0.0
    %1551 = vmatprep.subr.mxu0 0.0
    %1552 = vmatpush1.msra.mxu0 0.0
    %1553 = vmatprep.subr.mxu0 0.0
    %1554 = vmatpush1.msra.mxu0 0.0
    %1555 = vmatprep.subr.mxu0 0.0
    %1556 = vmatpush1.msra.mxu0 0.0
    %1557 = vmatprep.subr.mxu0 0.0
    %1558 = vmatpush1.msra.mxu0 0.0
    %1559 = vmatprep.subr.mxu0 0.0
    %1560 = vmatpush1.msra.mxu0 0.0
    %1561 = vmatprep.subr.mxu0 0.0
    %1562 = vmatpush1.msra.mxu0 0.0
    %1563 = vmatprep.subr.mxu0 0.0
    %1564 = vmatpush1.msra.mxu0 0.0
    %1565 = vmatprep.subr.mxu0 0.0
    %1566 = vmatpush1.msra.mxu0 0.0
    %1567 = vmatprep.subr.mxu0 0.0
    %1568 = vmatpush1.msra.mxu0 0.0
    %1569 = vmatprep.mubr.f32.mxu0 0.0
    %1570 = vmatmul.mubr.f32.gmra.mrb[0].mxu0 %v1497
    %v1571 = vpop.f32.mrb[0].mxu0
    %v1572 = vadd.f32 0.0, %v1571
    %v1573 = vpop.f32.mrb[0].mxu0
    %1574 = vmatprep.mubr.f32.mxu0 0.0
    %1575 = vmatmul.mubr.f32.gmra.mrb[0].mxu0 %v1500
    %v1576 = vpop.f32.mrb[0].mxu0
    %v1577 = vadd.f32 0.0, %v1576
    %v1578 = vpop.f32.mrb[0].mxu0
    %1579 = vmatprep.mubr.f32.mxu0 0.0
    %1580 = vmatmul.mubr.f32.gmra.mrb[0].mxu0 %v1503
    %v1581 = vpop.f32.mrb[0].mxu0
    %v1582 = vadd.f32 0.0, %v1581
    %v1583 = vpop.f32.mrb[0].mxu0
    %1584 = vdwg.mxu0
    %v1585 = vadd.f32 %v1488, %v1572
    %v1586 = vadd.f32 %v1489, %v1577
    %v1587 = vadd.f32 %v1490, %v1582
    %s1588 = scalar_lea.vmem %s3, 352
    %v1589 = vld [vmem:[%s1588] sm:$0xff]
    %v1590 = vld [vmem:[%s1588 + $0x8] sm:$0xff]
    %v1591 = vld [vmem:[%s1588 + $0x10] sm:$0xff]
    %v1592 = vld [vmem:[%s1588 + $0x18] sm:$0xff]
    %v1594 = vsel %vm536, %v512, 0
    %v1597 = vsel %vm536, %v513, 0
    %v1600 = vsel %vm536, %v514, 0
    %1602 = vmatprep.subr.mxu0 0.0
    %1603 = vmatpush1.msra.mxu0 %v1589
    %1604 = vmatprep.subr.mxu0 0.0
    %1605 = vmatpush1.msra.mxu0 %v1590
    %1606 = vmatprep.subr.mxu0 0.0
    %1607 = vmatpush1.msra.mxu0 %v1591
    %1608 = vmatprep.subr.mxu0 0.0
    %1609 = vmatpush1.msra.mxu0 %v1592
    %1610 = vmatprep.subr.mxu0 0.0
    %1611 = vmatpush1.msra.mxu0 0.0
    %1612 = vmatprep.subr.mxu0 0.0
    %1613 = vmatpush1.msra.mxu0 0.0
    %1614 = vmatprep.subr.mxu0 0.0
    %1615 = vmatpush1.msra.mxu0 0.0
    %1616 = vmatprep.subr.mxu0 0.0
    %1617 = vmatpush1.msra.mxu0 0.0
    %1618 = vmatprep.subr.mxu0 0.0
    %1619 = vmatpush1.msra.mxu0 0.0
    %1620 = vmatprep.subr.mxu0 0.0
    %1621 = vmatpush1.msra.mxu0 0.0
    %1622 = vmatprep.subr.mxu0 0.0
    %1623 = vmatpush1.msra.mxu0 0.0
    %1624 = vmatprep.subr.mxu0 0.0
    %1625 = vmatpush1.msra.mxu0 0.0
    %1626 = vmatprep.subr.mxu0 0.0
    %1627 = vmatpush1.msra.mxu0 0.0
    %1628 = vmatprep.subr.mxu0 0.0
    %1629 = vmatpush1.msra.mxu0 0.0
    %1630 = vmatprep.subr.mxu0 0.0
    %1631 = vmatpush1.msra.mxu0 0.0
    %1632 = vmatprep.subr.mxu0 0.0
    %1633 = vmatpush1.msra.mxu0 0.0
    %1634 = vmatprep.subr.mxu0 0.0
    %1635 = vmatpush1.msra.mxu0 0.0
    %1636 = vmatprep.subr.mxu0 0.0
    %1637 = vmatpush1.msra.mxu0 0.0
    %1638 = vmatprep.subr.mxu0 0.0
    %1639 = vmatpush1.msra.mxu0 0.0
    %1640 = vmatprep.subr.mxu0 0.0
    %1641 = vmatpush1.msra.mxu0 0.0
    %1642 = vmatprep.subr.mxu0 0.0
    %1643 = vmatpush1.msra.mxu0 0.0
    %1644 = vmatprep.subr.mxu0 0.0
    %1645 = vmatpush1.msra.mxu0 0.0
    %1646 = vmatprep.subr.mxu0 0.0
    %1647 = vmatpush1.msra.mxu0 0.0
    %1648 = vmatprep.subr.mxu0 0.0
    %1649 = vmatpush1.msra.mxu0 0.0
    %1650 = vmatprep.subr.mxu0 0.0
    %1651 = vmatpush1.msra.mxu0 0.0
    %1652 = vmatprep.subr.mxu0 0.0
    %1653 = vmatpush1.msra.mxu0 0.0
    %1654 = vmatprep.subr.mxu0 0.0
    %1655 = vmatpush1.msra.mxu0 0.0
    %1656 = vmatprep.subr.mxu0 0.0
    %1657 = vmatpush1.msra.mxu0 0.0
    %1658 = vmatprep.subr.mxu0 0.0
    %1659 = vmatpush1.msra.mxu0 0.0
    %1660 = vmatprep.subr.mxu0 0.0
    %1661 = vmatpush1.msra.mxu0 0.0
    %1662 = vmatprep.subr.mxu0 0.0
    %1663 = vmatpush1.msra.mxu0 0.0
    %1664 = vmatprep.subr.mxu0 0.0
    %1665 = vmatpush1.msra.mxu0 0.0
    %1666 = vmatprep.mubr.f32.mxu0 0.0
    %1667 = vmatmul.mubr.f32.gmra.mrb[0].mxu0 %v1594
    %v1668 = vpop.f32.mrb[0].mxu0
    %v1669 = vadd.f32 0.0, %v1668
    %v1670 = vpop.f32.mrb[0].mxu0
    %1671 = vmatprep.mubr.f32.mxu0 0.0
    %1672 = vmatmul.mubr.f32.gmra.mrb[0].mxu0 %v1597
    %v1673 = vpop.f32.mrb[0].mxu0
    %v1674 = vadd.f32 0.0, %v1673
    %v1675 = vpop.f32.mrb[0].mxu0
    %1676 = vmatprep.mubr.f32.mxu0 0.0
    %1677 = vmatmul.mubr.f32.gmra.mrb[0].mxu0 %v1600
    %v1678 = vpop.f32.mrb[0].mxu0
    %v1679 = vadd.f32 0.0, %v1678
    %v1680 = vpop.f32.mrb[0].mxu0
    %1681 = vdwg.mxu0
    %v1682 = vadd.f32 %v1585, %v1669
    %v1683 = vadd.f32 %v1586, %v1674
    %v1684 = vadd.f32 %v1587, %v1679
    %s1685 = scalar_lea.vmem %s3, 384
    %v1686 = vld [vmem:[%s1685] sm:$0xff]
    %v1687 = vld [vmem:[%s1685 + $0x8] sm:$0xff]
    %v1688 = vld [vmem:[%s1685 + $0x10] sm:$0xff]
    %v1689 = vld [vmem:[%s1685 + $0x18] sm:$0xff]
    %v1691 = vsel %vm536, %v515, 0
    %v1694 = vsel %vm536, %v516, 0
    %v1697 = vsel %vm536, %v517, 0
    %1699 = vmatprep.subr.mxu0 0.0
    %1700 = vmatpush1.msra.mxu0 %v1686
    %1701 = vmatprep.subr.mxu0 0.0
    %1702 = vmatpush1.msra.mxu0 %v1687
    %1703 = vmatprep.subr.mxu0 0.0
    %1704 = vmatpush1.msra.mxu0 %v1688
    %1705 = vmatprep.subr.mxu0 0.0
    %1706 = vmatpush1.msra.mxu0 %v1689
    %1707 = vmatprep.subr.mxu0 0.0
    %1708 = vmatpush1.msra.mxu0 0.0
    %1709 = vmatprep.subr.mxu0 0.0
    %1710 = vmatpush1.msra.mxu0 0.0
    %1711 = vmatprep.subr.mxu0 0.0
    %1712 = vmatpush1.msra.mxu0 0.0
    %1713 = vmatprep.subr.mxu0 0.0
    %1714 = vmatpush1.msra.mxu0 0.0
    %1715 = vmatprep.subr.mxu0 0.0
    %1716 = vmatpush1.msra.mxu0 0.0
    %1717 = vmatprep.subr.mxu0 0.0
    %1718 = vmatpush1.msra.mxu0 0.0
    %1719 = vmatprep.subr.mxu0 0.0
    %1720 = vmatpush1.msra.mxu0 0.0
    %1721 = vmatprep.subr.mxu0 0.0
    %1722 = vmatpush1.msra.mxu0 0.0
    %1723 = vmatprep.subr.mxu0 0.0
    %1724 = vmatpush1.msra.mxu0 0.0
    %1725 = vmatprep.subr.mxu0 0.0
    %1726 = vmatpush1.msra.mxu0 0.0
    %1727 = vmatprep.subr.mxu0 0.0
    %1728 = vmatpush1.msra.mxu0 0.0
    %1729 = vmatprep.subr.mxu0 0.0
    %1730 = vmatpush1.msra.mxu0 0.0
    %1731 = vmatprep.subr.mxu0 0.0
    %1732 = vmatpush1.msra.mxu0 0.0
    %1733 = vmatprep.subr.mxu0 0.0
    %1734 = vmatpush1.msra.mxu0 0.0
    %1735 = vmatprep.subr.mxu0 0.0
    %1736 = vmatpush1.msra.mxu0 0.0
    %1737 = vmatprep.subr.mxu0 0.0
    %1738 = vmatpush1.msra.mxu0 0.0
    %1739 = vmatprep.subr.mxu0 0.0
    %1740 = vmatpush1.msra.mxu0 0.0
    %1741 = vmatprep.subr.mxu0 0.0
    %1742 = vmatpush1.msra.mxu0 0.0
    %1743 = vmatprep.subr.mxu0 0.0
    %1744 = vmatpush1.msra.mxu0 0.0
    %1745 = vmatprep.subr.mxu0 0.0
    %1746 = vmatpush1.msra.mxu0 0.0
    %1747 = vmatprep.subr.mxu0 0.0
    %1748 = vmatpush1.msra.mxu0 0.0
    %1749 = vmatprep.subr.mxu0 0.0
    %1750 = vmatpush1.msra.mxu0 0.0
    %1751 = vmatprep.subr.mxu0 0.0
    %1752 = vmatpush1.msra.mxu0 0.0
    %1753 = vmatprep.subr.mxu0 0.0
    %1754 = vmatpush1.msra.mxu0 0.0
    %1755 = vmatprep.subr.mxu0 0.0
    %1756 = vmatpush1.msra.mxu0 0.0
    %1757 = vmatprep.subr.mxu0 0.0
    %1758 = vmatpush1.msra.mxu0 0.0
    %1759 = vmatprep.subr.mxu0 0.0
    %1760 = vmatpush1.msra.mxu0 0.0
    %1761 = vmatprep.subr.mxu0 0.0
    %1762 = vmatpush1.msra.mxu0 0.0
    %1763 = vmatprep.mubr.f32.mxu0 0.0
    %1764 = vmatmul.mubr.f32.gmra.mrb[0].mxu0 %v1691
    %v1765 = vpop.f32.mrb[0].mxu0
    %v1766 = vadd.f32 0.0, %v1765
    %v1767 = vpop.f32.mrb[0].mxu0
    %1768 = vmatprep.mubr.f32.mxu0 0.0
    %1769 = vmatmul.mubr.f32.gmra.mrb[0].mxu0 %v1694
    %v1770 = vpop.f32.mrb[0].mxu0
    %v1771 = vadd.f32 0.0, %v1770
    %v1772 = vpop.f32.mrb[0].mxu0
    %1773 = vmatprep.mubr.f32.mxu0 0.0
    %1774 = vmatmul.mubr.f32.gmra.mrb[0].mxu0 %v1697
    %v1775 = vpop.f32.mrb[0].mxu0
    %v1776 = vadd.f32 0.0, %v1775
    %v1777 = vpop.f32.mrb[0].mxu0
    %1778 = vdwg.mxu0
    %v1779 = vadd.f32 %v1682, %v1766
    %v1780 = vadd.f32 %v1683, %v1771
    %v1781 = vadd.f32 %v1684, %v1776
    %s1782 = scalar_lea.vmem %s3, 416
    %v1783 = vld [vmem:[%s1782] sm:$0xff]
    %v1784 = vld [vmem:[%s1782 + $0x8] sm:$0xff]
    %v1785 = vld [vmem:[%s1782 + $0x10] sm:$0xff]
    %v1786 = vld [vmem:[%s1782 + $0x18] sm:$0xff]
    %v1788 = vsel %vm536, %v518, 0
    %v1791 = vsel %vm536, %v519, 0
    %v1794 = vsel %vm536, %v520, 0
    %1796 = vmatprep.subr.mxu0 0.0
    %1797 = vmatpush1.msra.mxu0 %v1783
    %1798 = vmatprep.subr.mxu0 0.0
    %1799 = vmatpush1.msra.mxu0 %v1784
    %1800 = vmatprep.subr.mxu0 0.0
    %1801 = vmatpush1.msra.mxu0 %v1785
    %1802 = vmatprep.subr.mxu0 0.0
    %1803 = vmatpush1.msra.mxu0 %v1786
    %1804 = vmatprep.subr.mxu0 0.0
    %1805 = vmatpush1.msra.mxu0 0.0
    %1806 = vmatprep.subr.mxu0 0.0
    %1807 = vmatpush1.msra.mxu0 0.0
    %1808 = vmatprep.subr.mxu0 0.0
    %1809 = vmatpush1.msra.mxu0 0.0
    %1810 = vmatprep.subr.mxu0 0.0
    %1811 = vmatpush1.msra.mxu0 0.0
    %1812 = vmatprep.subr.mxu0 0.0
    %1813 = vmatpush1.msra.mxu0 0.0
    %1814 = vmatprep.subr.mxu0 0.0
    %1815 = vmatpush1.msra.mxu0 0.0
    %1816 = vmatprep.subr.mxu0 0.0
    %1817 = vmatpush1.msra.mxu0 0.0
    %1818 = vmatprep.subr.mxu0 0.0
    %1819 = vmatpush1.msra.mxu0 0.0
    %1820 = vmatprep.subr.mxu0 0.0
    %1821 = vmatpush1.msra.mxu0 0.0
    %1822 = vmatprep.subr.mxu0 0.0
    %1823 = vmatpush1.msra.mxu0 0.0
    %1824 = vmatprep.subr.mxu0 0.0
    %1825 = vmatpush1.msra.mxu0 0.0
    %1826 = vmatprep.subr.mxu0 0.0
    %1827 = vmatpush1.msra.mxu0 0.0
    %1828 = vmatprep.subr.mxu0 0.0
    %1829 = vmatpush1.msra.mxu0 0.0
    %1830 = vmatprep.subr.mxu0 0.0
    %1831 = vmatpush1.msra.mxu0 0.0
    %1832 = vmatprep.subr.mxu0 0.0
    %1833 = vmatpush1.msra.mxu0 0.0
    %1834 = vmatprep.subr.mxu0 0.0
    %1835 = vmatpush1.msra.mxu0 0.0
    %1836 = vmatprep.subr.mxu0 0.0
    %1837 = vmatpush1.msra.mxu0 0.0
    %1838 = vmatprep.subr.mxu0 0.0
    %1839 = vmatpush1.msra.mxu0 0.0
    %1840 = vmatprep.subr.mxu0 0.0
    %1841 = vmatpush1.msra.mxu0 0.0
    %1842 = vmatprep.subr.mxu0 0.0
    %1843 = vmatpush1.msra.mxu0 0.0
    %1844 = vmatprep.subr.mxu0 0.0
    %1845 = vmatpush1.msra.mxu0 0.0
    %1846 = vmatprep.subr.mxu0 0.0
    %1847 = vmatpush1.msra.mxu0 0.0
    %1848 = vmatprep.subr.mxu0 0.0
    %1849 = vmatpush1.msra.mxu0 0.0
    %1850 = vmatprep.subr.mxu0 0.0
    %1851 = vmatpush1.msra.mxu0 0.0
    %1852 = vmatprep.subr.mxu0 0.0
    %1853 = vmatpush1.msra.mxu0 0.0
    %1854 = vmatprep.subr.mxu0 0.0
    %1855 = vmatpush1.msra.mxu0 0.0
    %1856 = vmatprep.subr.mxu0 0.0
    %1857 = vmatpush1.msra.mxu0 0.0
    %1858 = vmatprep.subr.mxu0 0.0
    %1859 = vmatpush1.msra.mxu0 0.0
    %1860 = vmatprep.mubr.f32.mxu0 0.0
    %1861 = vmatmul.mubr.f32.gmra.mrb[0].mxu0 %v1788
    %v1862 = vpop.f32.mrb[0].mxu0
    %v1863 = vadd.f32 0.0, %v1862
    %v1864 = vpop.f32.mrb[0].mxu0
    %1865 = vmatprep.mubr.f32.mxu0 0.0
    %1866 = vmatmul.mubr.f32.gmra.mrb[0].mxu0 %v1791
    %v1867 = vpop.f32.mrb[0].mxu0
    %v1868 = vadd.f32 0.0, %v1867
    %v1869 = vpop.f32.mrb[0].mxu0
    %1870 = vmatprep.mubr.f32.mxu0 0.0
    %1871 = vmatmul.mubr.f32.gmra.mrb[0].mxu0 %v1794
    %v1872 = vpop.f32.mrb[0].mxu0
    %v1873 = vadd.f32 0.0, %v1872
    %v1874 = vpop.f32.mrb[0].mxu0
    %1875 = vdwg.mxu0
    %v1876 = vadd.f32 %v1779, %v1863
    %v1877 = vadd.f32 %v1780, %v1868
    %v1878 = vadd.f32 %v1781, %v1873
    %s1879 = scalar_lea.vmem %s3, 448
    %v1880 = vld [vmem:[%s1879] sm:$0xff]
    %v1881 = vld [vmem:[%s1879 + $0x8] sm:$0xff]
    %v1882 = vld [vmem:[%s1879 + $0x10] sm:$0xff]
    %v1883 = vld [vmem:[%s1879 + $0x18] sm:$0xff]
    %v1885 = vsel %vm536, %v521, 0
    %v1888 = vsel %vm536, %v522, 0
    %v1891 = vsel %vm536, %v523, 0
    %1893 = vmatprep.subr.mxu0 0.0
    %1894 = vmatpush1.msra.mxu0 %v1880
    %1895 = vmatprep.subr.mxu0 0.0
    %1896 = vmatpush1.msra.mxu0 %v1881
    %1897 = vmatprep.subr.mxu0 0.0
    %1898 = vmatpush1.msra.mxu0 %v1882
    %1899 = vmatprep.subr.mxu0 0.0
    %1900 = vmatpush1.msra.mxu0 %v1883
    %1901 = vmatprep.subr.mxu0 0.0
    %1902 = vmatpush1.msra.mxu0 0.0
    %1903 = vmatprep.subr.mxu0 0.0
    %1904 = vmatpush1.msra.mxu0 0.0
    %1905 = vmatprep.subr.mxu0 0.0
    %1906 = vmatpush1.msra.mxu0 0.0
    %1907 = vmatprep.subr.mxu0 0.0
    %1908 = vmatpush1.msra.mxu0 0.0
    %1909 = vmatprep.subr.mxu0 0.0
    %1910 = vmatpush1.msra.mxu0 0.0
    %1911 = vmatprep.subr.mxu0 0.0
    %1912 = vmatpush1.msra.mxu0 0.0
    %1913 = vmatprep.subr.mxu0 0.0
    %1914 = vmatpush1.msra.mxu0 0.0
    %1915 = vmatprep.subr.mxu0 0.0
    %1916 = vmatpush1.msra.mxu0 0.0
    %1917 = vmatprep.subr.mxu0 0.0
    %1918 = vmatpush1.msra.mxu0 0.0
    %1919 = vmatprep.subr.mxu0 0.0
    %1920 = vmatpush1.msra.mxu0 0.0
    %1921 = vmatprep.subr.mxu0 0.0
    %1922 = vmatpush1.msra.mxu0 0.0
    %1923 = vmatprep.subr.mxu0 0.0
    %1924 = vmatpush1.msra.mxu0 0.0
    %1925 = vmatprep.subr.mxu0 0.0
    %1926 = vmatpush1.msra.mxu0 0.0
    %1927 = vmatprep.subr.mxu0 0.0
    %1928 = vmatpush1.msra.mxu0 0.0
    %1929 = vmatprep.subr.mxu0 0.0
    %1930 = vmatpush1.msra.mxu0 0.0
    %1931 = vmatprep.subr.mxu0 0.0
    %1932 = vmatpush1.msra.mxu0 0.0
    %1933 = vmatprep.subr.mxu0 0.0
    %1934 = vmatpush1.msra.mxu0 0.0
    %1935 = vmatprep.subr.mxu0 0.0
    %1936 = vmatpush1.msra.mxu0 0.0
    %1937 = vmatprep.subr.mxu0 0.0
    %1938 = vmatpush1.msra.mxu0 0.0
    %1939 = vmatprep.subr.mxu0 0.0
    %1940 = vmatpush1.msra.mxu0 0.0
    %1941 = vmatprep.subr.mxu0 0.0
    %1942 = vmatpush1.msra.mxu0 0.0
    %1943 = vmatprep.subr.mxu0 0.0
    %1944 = vmatpush1.msra.mxu0 0.0
    %1945 = vmatprep.subr.mxu0 0.0
    %1946 = vmatpush1.msra.mxu0 0.0
    %1947 = vmatprep.subr.mxu0 0.0
    %1948 = vmatpush1.msra.mxu0 0.0
    %1949 = vmatprep.subr.mxu0 0.0
    %1950 = vmatpush1.msra.mxu0 0.0
    %1951 = vmatprep.subr.mxu0 0.0
    %1952 = vmatpush1.msra.mxu0 0.0
    %1953 = vmatprep.subr.mxu0 0.0
    %1954 = vmatpush1.msra.mxu0 0.0
    %1955 = vmatprep.subr.mxu0 0.0
    %1956 = vmatpush1.msra.mxu0 0.0
    %1957 = vmatprep.mubr.f32.mxu0 0.0
    %1958 = vmatmul.mubr.f32.gmra.mrb[0].mxu0 %v1885
    %v1959 = vpop.f32.mrb[0].mxu0
    %v1960 = vadd.f32 0.0, %v1959
    %v1961 = vpop.f32.mrb[0].mxu0
    %1962 = vmatprep.mubr.f32.mxu0 0.0
    %1963 = vmatmul.mubr.f32.gmra.mrb[0].mxu0 %v1888
    %v1964 = vpop.f32.mrb[0].mxu0
    %v1965 = vadd.f32 0.0, %v1964
    %v1966 = vpop.f32.mrb[0].mxu0
    %1967 = vmatprep.mubr.f32.mxu0 0.0
    %1968 = vmatmul.mubr.f32.gmra.mrb[0].mxu0 %v1891
    %v1969 = vpop.f32.mrb[0].mxu0
    %v1970 = vadd.f32 0.0, %v1969
    %v1971 = vpop.f32.mrb[0].mxu0
    %1972 = vdwg.mxu0
    %v1973 = vadd.f32 %v1876, %v1960
    %v1974 = vadd.f32 %v1877, %v1965
    %v1975 = vadd.f32 %v1878, %v1970
    %s1976 = scalar_lea.vmem %s3, 480
    %v1977 = vld [vmem:[%s1976] sm:$0xff]
    %v1978 = vld [vmem:[%s1976 + $0x8] sm:$0xff]
    %v1979 = vld [vmem:[%s1976 + $0x10] sm:$0xff]
    %v1980 = vld [vmem:[%s1976 + $0x18] sm:$0xff]
    %v1982 = vsel %vm536, %v524, 0
    %v1985 = vsel %vm536, %v525, 0
    %v1988 = vsel %vm536, %v526, 0
    %1990 = vmatprep.subr.mxu0 0.0
    %1991 = vmatpush1.msra.mxu0 %v1977
    %1992 = vmatprep.subr.mxu0 0.0
    %1993 = vmatpush1.msra.mxu0 %v1978
    %1994 = vmatprep.subr.mxu0 0.0
    %1995 = vmatpush1.msra.mxu0 %v1979
    %1996 = vmatprep.subr.mxu0 0.0
    %1997 = vmatpush1.msra.mxu0 %v1980
    %1998 = vmatprep.subr.mxu0 0.0
    %1999 = vmatpush1.msra.mxu0 0.0
    %2000 = vmatprep.subr.mxu0 0.0
    %2001 = vmatpush1.msra.mxu0 0.0
    %2002 = vmatprep.subr.mxu0 0.0
    %2003 = vmatpush1.msra.mxu0 0.0
    %2004 = vmatprep.subr.mxu0 0.0
    %2005 = vmatpush1.msra.mxu0 0.0
    %2006 = vmatprep.subr.mxu0 0.0
    %2007 = vmatpush1.msra.mxu0 0.0
    %2008 = vmatprep.subr.mxu0 0.0
    %2009 = vmatpush1.msra.mxu0 0.0
    %2010 = vmatprep.subr.mxu0 0.0
    %2011 = vmatpush1.msra.mxu0 0.0
    %2012 = vmatprep.subr.mxu0 0.0
    %2013 = vmatpush1.msra.mxu0 0.0
    %2014 = vmatprep.subr.mxu0 0.0
    %2015 = vmatpush1.msra.mxu0 0.0
    %2016 = vmatprep.subr.mxu0 0.0
    %2017 = vmatpush1.msra.mxu0 0.0
    %2018 = vmatprep.subr.mxu0 0.0
    %2019 = vmatpush1.msra.mxu0 0.0
    %2020 = vmatprep.subr.mxu0 0.0
    %2021 = vmatpush1.msra.mxu0 0.0
    %2022 = vmatprep.subr.mxu0 0.0
    %2023 = vmatpush1.msra.mxu0 0.0
    %2024 = vmatprep.subr.mxu0 0.0
    %2025 = vmatpush1.msra.mxu0 0.0
    %2026 = vmatprep.subr.mxu0 0.0
    %2027 = vmatpush1.msra.mxu0 0.0
    %2028 = vmatprep.subr.mxu0 0.0
    %2029 = vmatpush1.msra.mxu0 0.0
    %2030 = vmatprep.subr.mxu0 0.0
    %2031 = vmatpush1.msra.mxu0 0.0
    %2032 = vmatprep.subr.mxu0 0.0
    %2033 = vmatpush1.msra.mxu0 0.0
    %2034 = vmatprep.subr.mxu0 0.0
    %2035 = vmatpush1.msra.mxu0 0.0
    %2036 = vmatprep.subr.mxu0 0.0
    %2037 = vmatpush1.msra.mxu0 0.0
    %2038 = vmatprep.subr.mxu0 0.0
    %2039 = vmatpush1.msra.mxu0 0.0
    %2040 = vmatprep.subr.mxu0 0.0
    %2041 = vmatpush1.msra.mxu0 0.0
    %2042 = vmatprep.subr.mxu0 0.0
    %2043 = vmatpush1.msra.mxu0 0.0
    %2044 = vmatprep.subr.mxu0 0.0
    %2045 = vmatpush1.msra.mxu0 0.0
    %2046 = vmatprep.subr.mxu0 0.0
    %2047 = vmatpush1.msra.mxu0 0.0
    %2048 = vmatprep.subr.mxu0 0.0
    %2049 = vmatpush1.msra.mxu0 0.0
    %2050 = vmatprep.subr.mxu0 0.0
    %2051 = vmatpush1.msra.mxu0 0.0
    %2052 = vmatprep.subr.mxu0 0.0
    %2053 = vmatpush1.msra.mxu0 0.0
    %2054 = vmatprep.mubr.f32.mxu0 0.0
    %2055 = vmatmul.mubr.f32.gmra.mrb[0].mxu0 %v1982
    %v2056 = vpop.f32.mrb[0].mxu0
    %v2057 = vadd.f32 0.0, %v2056
    %v2058 = vpop.f32.mrb[0].mxu0
    %2059 = vmatprep.mubr.f32.mxu0 0.0
    %2060 = vmatmul.mubr.f32.gmra.mrb[0].mxu0 %v1985
    %v2061 = vpop.f32.mrb[0].mxu0
    %v2062 = vadd.f32 0.0, %v2061
    %v2063 = vpop.f32.mrb[0].mxu0
    %2064 = vmatprep.mubr.f32.mxu0 0.0
    %2065 = vmatmul.mubr.f32.gmra.mrb[0].mxu0 %v1988
    %v2066 = vpop.f32.mrb[0].mxu0
    %v2067 = vadd.f32 0.0, %v2066
    %v2068 = vpop.f32.mrb[0].mxu0
    %2069 = vdwg.mxu0
    %v2070 = vadd.f32 %v1973, %v2057
    %v2071 = vadd.f32 %v1974, %v2062
    %v2072 = vadd.f32 %v1975, %v2067
    %v2073 = vld [vmem:[%s4] sm:$0x1]
    %v2075 = vlaneseq
    %v2076 = vshrl.u32 %v2075, 7
    %v2077 = vsub.s32 0, %v2076
    %v2078 = vrot.slane %v2073, %v2077
    %v2080 = vadd.f32 %v2070, %v2078
    %v2081 = vadd.f32 %v2071, %v2078
    %v2082 = vadd.f32 %v2072, %v2078
    %v2083 = vmax.f32 %v2080, 0.0
    %v2084 = vmax.f32 %v2081, 0.0
    %v2085 = vmax.f32 %v2082, 0.0
    %vm2086 = vcmask 516096
    %2087 = vst.msk [vmem:[#allocation2] sm:$0x1] %vm2086, %v2083
    %v2090 = vunpack.c.l.s4 1983009808
    %v2091 = vunpack.c.0.s8 %v2090
    %v2092 = vlaneseq
    %v2093 = vshrl.u32 %v2092, 7
    %v2094 = vsub.s32 %v2091, %v2093
    %v2095 = vrot.slane %v2083, %v2094
    %v2096 = vrot.slane %v2095, 7
    %v2097 = vrot.slane %v2096, 2
    %2098 = vrot.lane.b32.xlu0 %v2097, 64
    %v2099 = vpop.permute.xlu0 %2098
    %vm2101 = vcmask 1040896
    %2102 = vst.msk [vmem:[#allocation2] sm:$0x1] %vm2101, %v2099
    %v2103 = vcombine.high %v2095, %v2095
    %2105 = vst.msk [vmem:[#allocation2 + $0x2] sm:$0x1] %vm2086, %v2103
    %v2106 = vrot.slane %v2103, 7
    %v2107 = vrot.slane %v2106, 2
    %2108 = vrot.lane.b32.xlu0 %v2107, 64
    %v2109 = vpop.permute.xlu0 %2108
    %2111 = vst.msk [vmem:[#allocation2 + $0x2] sm:$0x1] %vm2101, %v2109
    %v2112 = vcombine.high %v2083, %v2083
    %v2114 = vunpack.c.l.s4 1983009808
    %v2115 = vunpack.c.0.s8 %v2114
    %v2116 = vlaneseq
    %v2117 = vshrl.u32 %v2116, 7
    %v2118 = vsub.s32 %v2115, %v2117
    %v2119 = vrot.slane %v2112, %v2118
    %2121 = vst.msk [vmem:[#allocation2 + $0x4] sm:$0x1] %vm2086, %v2119
    %v2122 = vrot.slane %v2119, 7
    %v2123 = vrot.slane %v2122, 2
    %2124 = vrot.lane.b32.xlu0 %v2123, 64
    %v2125 = vpop.permute.xlu0 %2124
    %2127 = vst.msk [vmem:[#allocation2 + $0x4] sm:$0x1] %vm2101, %v2125
    %v2128 = vcombine.high %v2119, %v2119
    %2130 = vst.msk [vmem:[#allocation2 + $0x6] sm:$0x1] %vm2086, %v2128
    %v2131 = vrot.slane %v2128, 7
    %v2132 = vrot.slane %v2131, 2
    %2133 = vrot.lane.b32.xlu0 %v2132, 64
    %v2134 = vpop.permute.xlu0 %2133
    %2136 = vst.msk [vmem:[#allocation2 + $0x6] sm:$0x1] %vm2101, %v2134
    %2137 = vst.msk [vmem:[#allocation2 + $0x8] sm:$0x1] %vm2086, %v2084
    %v2140 = vunpack.c.l.s4 1983009808
    %v2141 = vunpack.c.0.s8 %v2140
    %v2142 = vlaneseq
    %v2143 = vshrl.u32 %v2142, 7
    %v2144 = vsub.s32 %v2141, %v2143
    %v2145 = vrot.slane %v2084, %v2144
    %v2146 = vrot.slane %v2145, 7
    %v2147 = vrot.slane %v2146, 2
    %2149 = vst.msk [vmem:[#allocation2 + $0x1] sm:$0x1] %vm2086, %v2147
    %v2150 = vcombine.high %v2145, %v2145
    %2151 = vrot.lane.b32.xlu0 %v2150, 64
    %v2152 = vpop.permute.xlu0 %2151
    %2154 = vst.msk [vmem:[#allocation2 + $0x1] sm:$0x1] %vm2101, %v2152
    %v2155 = vrot.slane %v2150, 7
    %v2156 = vrot.slane %v2155, 2
    %2158 = vst.msk [vmem:[#allocation2 + $0x3] sm:$0x1] %vm2086, %v2156
    %v2159 = vcombine.high %v2084, %v2084
    %v2161 = vunpack.c.l.s4 1983009808
    %v2162 = vunpack.c.0.s8 %v2161
    %v2163 = vlaneseq
    %v2164 = vshrl.u32 %v2163, 7
    %v2165 = vsub.s32 %v2162, %v2164
    %v2166 = vrot.slane %v2159, %v2165
    %2167 = vrot.lane.b32.xlu0 %v2166, 64
    %v2168 = vpop.permute.xlu0 %2167
    %2170 = vst.msk [vmem:[#allocation2 + $0x3] sm:$0x1] %vm2101, %v2168
    %v2171 = vrot.slane %v2166, 7
    %v2172 = vrot.slane %v2171, 2
    %2174 = vst.msk [vmem:[#allocation2 + $0x5] sm:$0x1] %vm2086, %v2172
    %v2175 = vcombine.high %v2166, %v2166
    %2176 = vrot.lane.b32.xlu0 %v2175, 64
    %v2177 = vpop.permute.xlu0 %2176
    %2179 = vst.msk [vmem:[#allocation2 + $0x5] sm:$0x1] %vm2101, %v2177
    %v2180 = vrot.slane %v2175, 7
    %v2181 = vrot.slane %v2180, 2
    %2183 = vst.msk [vmem:[#allocation2 + $0x7] sm:$0x1] %vm2086, %v2181
    %v2186 = vunpack.c.l.s4 1983009808
    %v2187 = vunpack.c.0.s8 %v2186
    %v2188 = vlaneseq
    %v2189 = vshrl.u32 %v2188, 7
    %v2190 = vsub.s32 %v2187, %v2189
    %v2191 = vrot.slane %v2085, %v2190
    %2192 = vrot.lane.b32.xlu0 %v2191, 64
    %v2193 = vpop.permute.xlu0 %2192
    %2195 = vst.msk [vmem:[#allocation2 + $0x7] sm:$0x1] %vm2101, %v2193
    %v2196 = vrot.slane %v2191, 7
    %v2197 = vrot.slane %v2196, 2
    %2199 = vst.msk [vmem:[#allocation2 + $0x9] sm:$0x1] %vm2086, %v2197
    %v2200 = vld [vmem:[#allocation2] sm:$0xff]
    %v2201 = vld [vmem:[#allocation2 + $0x8] sm:$0x3]
    %v2202 = vld [vmem:[%s5] sm:$0xff]
    %v2203 = vld [vmem:[%s5 + $0x8] sm:$0xff]
    %v2204 = vld [vmem:[%s5 + $0x10] sm:$0xff]
    %v2205 = vld [vmem:[%s5 + $0x18] sm:$0xff]
    %v2206 = vld [vmem:[%s5 + $0x20] sm:$0xff]
    %v2207 = vld [vmem:[%s5 + $0x28] sm:$0xff]
    %v2208 = vld [vmem:[%s5 + $0x30] sm:$0xff]
    %v2209 = vld [vmem:[%s5 + $0x38] sm:$0xff]
    %v2210 = vld [vmem:[%s5 + $0x40] sm:$0xff]
    %v2211 = vld [vmem:[%s5 + $0x48] sm:$0xff]
    %v2212 = vld [vmem:[%s5 + $0x50] sm:$0xff]
    %v2213 = vld [vmem:[%s5 + $0x58] sm:$0xff]
    %v2214 = vld [vmem:[%s5 + $0x60] sm:$0xff]
    %v2215 = vld [vmem:[%s5 + $0x68] sm:$0xff]
    %v2216 = vld [vmem:[%s5 + $0x70] sm:$0xff]
    %v2217 = vld [vmem:[%s5 + $0x78] sm:$0xff]
    %v2218 = vld [vmem:[%s5 + $0x80] sm:$0xff]
    %v2219 = vld [vmem:[%s5 + $0x88] sm:$0xff]
    %v2220 = vld [vmem:[%s5 + $0x90] sm:$0xff]
    %v2221 = vld [vmem:[%s5 + $0x98] sm:$0xff]
    %v2222 = vld [vmem:[%s5 + $0xa0] sm:$0xff]
    %v2223 = vld [vmem:[%s5 + $0xa8] sm:$0xff]
    %v2224 = vld [vmem:[%s5 + $0xb0] sm:$0xff]
    %v2225 = vld [vmem:[%s5 + $0xb8] sm:$0xff]
    %v2226 = vld [vmem:[%s5 + $0xc0] sm:$0xff]
    %v2227 = vld [vmem:[%s5 + $0xc8] sm:$0xff]
    %v2228 = vld [vmem:[%s5 + $0xd0] sm:$0xff]
    %v2229 = vld [vmem:[%s5 + $0xd8] sm:$0xff]
    %v2230 = vld [vmem:[%s5 + $0xe0] sm:$0xff]
    %v2231 = vld [vmem:[%s5 + $0xe8] sm:$0xff]
    %v2232 = vld [vmem:[%s5 + $0xf0] sm:$0xff]
    %v2233 = vld [vmem:[%s5 + $0xf8] sm:$0xff]
    %v2234 = vld [vmem:[%s5 + $0x100] sm:$0xff]
    %v2235 = vld [vmem:[%s5 + $0x108] sm:$0xff]
    %v2236 = vld [vmem:[%s5 + $0x110] sm:$0xff]
    %v2237 = vld [vmem:[%s5 + $0x118] sm:$0xff]
    %v2238 = vld [vmem:[%s5 + $0x120] sm:$0xff]
    %v2239 = vld [vmem:[%s5 + $0x128] sm:$0xff]
    %v2240 = vld [vmem:[%s5 + $0x130] sm:$0xff]
    %v2241 = vld [vmem:[%s5 + $0x138] sm:$0xff]
    %v2242 = vld [vmem:[%s5 + $0x140] sm:$0xff]
    %v2243 = vld [vmem:[%s5 + $0x148] sm:$0xff]
    %v2244 = vld [vmem:[%s5 + $0x150] sm:$0xff]
    %v2245 = vld [vmem:[%s5 + $0x158] sm:$0xff]
    %v2246 = vld [vmem:[%s5 + $0x160] sm:$0xff]
    %v2247 = vld [vmem:[%s5 + $0x168] sm:$0xff]
    %v2248 = vld [vmem:[%s5 + $0x170] sm:$0xff]
    %v2249 = vld [vmem:[%s5 + $0x178] sm:$0xff]
    %v2250 = vld [vmem:[%s5 + $0x180] sm:$0xff]
    %v2251 = vld [vmem:[%s5 + $0x188] sm:$0xff]
    %v2252 = vld [vmem:[%s5 + $0x190] sm:$0xff]
    %v2253 = vld [vmem:[%s5 + $0x198] sm:$0xff]
    %v2254 = vld [vmem:[%s5 + $0x1a0] sm:$0xff]
    %v2255 = vld [vmem:[%s5 + $0x1a8] sm:$0xff]
    %v2256 = vld [vmem:[%s5 + $0x1b0] sm:$0xff]
    %v2257 = vld [vmem:[%s5 + $0x1b8] sm:$0xff]
    %v2258 = vld [vmem:[%s5 + $0x1c0] sm:$0xff]
    %v2259 = vld [vmem:[%s5 + $0x1c8] sm:$0xff]
    %v2260 = vld [vmem:[%s5 + $0x1d0] sm:$0xff]
    %v2261 = vld [vmem:[%s5 + $0x1d8] sm:$0xff]
    %v2262 = vld [vmem:[%s5 + $0x1e0] sm:$0xff]
    %v2263 = vld [vmem:[%s5 + $0x1e8] sm:$0xff]
    %v2264 = vld [vmem:[%s5 + $0x1f0] sm:$0xff]
    %v2265 = vld [vmem:[%s5 + $0x1f8] sm:$0xff]
    %v2266 = vld [vmem:[%s5 + $0x200] sm:$0xff]
    %v2267 = vld [vmem:[%s5 + $0x208] sm:$0xff]
    %v2268 = vld [vmem:[%s5 + $0x210] sm:$0xff]
    %v2269 = vld [vmem:[%s5 + $0x218] sm:$0xff]
    %v2270 = vld [vmem:[%s5 + $0x220] sm:$0xff]
    %v2271 = vld [vmem:[%s5 + $0x228] sm:$0xff]
    %v2272 = vld [vmem:[%s5 + $0x230] sm:$0xff]
    %v2273 = vld [vmem:[%s5 + $0x238] sm:$0xff]
    %v2274 = vld [vmem:[%s6] sm:$0x1]
    %v2276 = vlaneseq
    %v2277 = vshrl.u32 %v2276, 7
    %v2278 = vsub.s32 0, %v2277
    %v2279 = vrot.slane %v2274, %v2278
    %v2283 = vcombine.high %v2200, %v2200
    %v2285 = vunpack.c.l.s4 1983009808
    %v2286 = vunpack.c.0.s8 %v2285
    %v2287 = vlaneseq
    %v2288 = vshrl.u32 %v2287, 7
    %v2289 = vsub.s32 %v2286, %v2288
    %v2290 = vrot.slane %v2200, %v2289
    %v2292 = vunpack.c.l.s4 1983009808
    %v2293 = vunpack.c.0.s8 %v2292
    %v2294 = vlaneseq
    %v2295 = vshrl.u32 %v2294, 7
    %v2296 = vsub.s32 %v2293, %v2295
    %v2297 = vrot.slane %v2283, %v2296
    %v2298 = vcombine.high %v2290, %v2290
    %v2299 = vcombine.high %v2297, %v2297
    %v2301 = vunpack.c.l.s4 1983009808
    %v2302 = vunpack.c.0.s8 %v2301
    %v2303 = vlaneseq
    %v2304 = vshrl.u32 %v2303, 7
    %v2305 = vsub.s32 %v2302, %v2304
    %v2306 = vrot.slane %v2201, %v2305
    %vm2311 = vcmask 523264
    %v2312 = vsel %vm2311, %v2306, 0
    %2314 = vmatprep.subr.mxu0 0.0
    %2315 = vmatpush1.msra.mxu0 %v2202
    %2316 = vmatprep.subr.mxu0 0.0
    %2317 = vmatpush1.msra.mxu0 %v2203
    %2318 = vmatprep.subr.mxu0 0.0
    %2319 = vmatpush1.msra.mxu0 %v2204
    %2320 = vmatprep.subr.mxu0 0.0
    %2321 = vmatpush1.msra.mxu0 %v2205
    %2322 = vmatprep.subr.mxu0 0.0
    %2323 = vmatpush1.msra.mxu0 %v2206
    %2324 = vmatprep.subr.mxu0 0.0
    %2325 = vmatpush1.msra.mxu0 %v2207
    %2326 = vmatprep.subr.mxu0 0.0
    %2327 = vmatpush1.msra.mxu0 %v2208
    %2328 = vmatprep.subr.mxu0 0.0
    %2329 = vmatpush1.msra.mxu0 %v2209
    %2330 = vmatprep.subr.mxu0 0.0
    %2331 = vmatpush1.msra.mxu0 %v2210
    %2332 = vmatprep.subr.mxu0 0.0
    %2333 = vmatpush1.msra.mxu0 %v2211
    %2334 = vmatprep.subr.mxu0 0.0
    %2335 = vmatpush1.msra.mxu0 %v2212
    %2336 = vmatprep.subr.mxu0 0.0
    %2337 = vmatpush1.msra.mxu0 %v2213
    %2338 = vmatprep.subr.mxu0 0.0
    %2339 = vmatpush1.msra.mxu0 %v2214
    %2340 = vmatprep.subr.mxu0 0.0
    %2341 = vmatpush1.msra.mxu0 %v2215
    %2342 = vmatprep.subr.mxu0 0.0
    %2343 = vmatpush1.msra.mxu0 %v2216
    %2344 = vmatprep.subr.mxu0 0.0
    %2345 = vmatpush1.msra.mxu0 %v2217
    %2346 = vmatprep.subr.mxu0 0.0
    %2347 = vmatpush1.msra.mxu0 %v2218
    %2348 = vmatprep.subr.mxu0 0.0
    %2349 = vmatpush1.msra.mxu0 %v2219
    %2350 = vmatprep.subr.mxu0 0.0
    %2351 = vmatpush1.msra.mxu0 %v2220
    %2352 = vmatprep.subr.mxu0 0.0
    %2353 = vmatpush1.msra.mxu0 %v2221
    %2354 = vmatprep.subr.mxu0 0.0
    %2355 = vmatpush1.msra.mxu0 %v2222
    %2356 = vmatprep.subr.mxu0 0.0
    %2357 = vmatpush1.msra.mxu0 %v2223
    %2358 = vmatprep.subr.mxu0 0.0
    %2359 = vmatpush1.msra.mxu0 %v2224
    %2360 = vmatprep.subr.mxu0 0.0
    %2361 = vmatpush1.msra.mxu0 %v2225
    %2362 = vmatprep.subr.mxu0 0.0
    %2363 = vmatpush1.msra.mxu0 %v2226
    %2364 = vmatprep.subr.mxu0 0.0
    %2365 = vmatpush1.msra.mxu0 %v2227
    %2366 = vmatprep.subr.mxu0 0.0
    %2367 = vmatpush1.msra.mxu0 %v2228
    %2368 = vmatprep.subr.mxu0 0.0
    %2369 = vmatpush1.msra.mxu0 %v2229
    %2370 = vmatprep.subr.mxu0 0.0
    %2371 = vmatpush1.msra.mxu0 %v2230
    %2372 = vmatprep.subr.mxu0 0.0
    %2373 = vmatpush1.msra.mxu0 %v2231
    %2374 = vmatprep.subr.mxu0 0.0
    %2375 = vmatpush1.msra.mxu0 %v2232
    %2376 = vmatprep.subr.mxu0 0.0
    %2377 = vmatpush1.msra.mxu0 %v2233
    %2378 = vmatprep.mubr.f32.mxu0 %v2298
    %2379 = vmatmul.mubr.f32.gmra.mrb[0].mxu0 %v2290
    %v2380 = vpop.f32.mrb[0].mxu0
    %v2381 = vadd.f32 %v2279, %v2380
    %v2382 = vpop.f32.mrb[0].mxu0
    %2383 = vdwg.mxu0
    %2384 = vmatprep.subr.mxu0 0.0
    %2385 = vmatpush1.msra.mxu0 %v2234
    %2386 = vmatprep.subr.mxu0 0.0
    %2387 = vmatpush1.msra.mxu0 %v2235
    %2388 = vmatprep.subr.mxu0 0.0
    %2389 = vmatpush1.msra.mxu0 %v2236
    %2390 = vmatprep.subr.mxu0 0.0
    %2391 = vmatpush1.msra.mxu0 %v2237
    %2392 = vmatprep.subr.mxu0 0.0
    %2393 = vmatpush1.msra.mxu0 %v2238
    %2394 = vmatprep.subr.mxu0 0.0
    %2395 = vmatpush1.msra.mxu0 %v2239
    %2396 = vmatprep.subr.mxu0 0.0
    %2397 = vmatpush1.msra.mxu0 %v2240
    %2398 = vmatprep.subr.mxu0 0.0
    %2399 = vmatpush1.msra.mxu0 %v2241
    %2400 = vmatprep.subr.mxu0 0.0
    %2401 = vmatpush1.msra.mxu0 %v2242
    %2402 = vmatprep.subr.mxu0 0.0
    %2403 = vmatpush1.msra.mxu0 %v2243
    %2404 = vmatprep.subr.mxu0 0.0
    %2405 = vmatpush1.msra.mxu0 %v2244
    %2406 = vmatprep.subr.mxu0 0.0
    %2407 = vmatpush1.msra.mxu0 %v2245
    %2408 = vmatprep.subr.mxu0 0.0
    %2409 = vmatpush1.msra.mxu0 %v2246
    %2410 = vmatprep.subr.mxu0 0.0
    %2411 = vmatpush1.msra.mxu0 %v2247
    %2412 = vmatprep.subr.mxu0 0.0
    %2413 = vmatpush1.msra.mxu0 %v2248
    %2414 = vmatprep.subr.mxu0 0.0
    %2415 = vmatpush1.msra.mxu0 %v2249
    %2416 = vmatprep.subr.mxu0 0.0
    %2417 = vmatpush1.msra.mxu0 %v2250
    %2418 = vmatprep.subr.mxu0 0.0
    %2419 = vmatpush1.msra.mxu0 %v2251
    %2420 = vmatprep.subr.mxu0 0.0
    %2421 = vmatpush1.msra.mxu0 %v2252
    %2422 = vmatprep.subr.mxu0 0.0
    %2423 = vmatpush1.msra.mxu0 %v2253
    %2424 = vmatprep.subr.mxu0 0.0
    %2425 = vmatpush1.msra.mxu0 %v2254
    %2426 = vmatprep.subr.mxu0 0.0
    %2427 = vmatpush1.msra.mxu0 %v2255
    %2428 = vmatprep.subr.mxu0 0.0
    %2429 = vmatpush1.msra.mxu0 %v2256
    %2430 = vmatprep.subr.mxu0 0.0
    %2431 = vmatpush1.msra.mxu0 %v2257
    %2432 = vmatprep.subr.mxu0 0.0
    %2433 = vmatpush1.msra.mxu0 %v2258
    %2434 = vmatprep.subr.mxu0 0.0
    %2435 = vmatpush1.msra.mxu0 %v2259
    %2436 = vmatprep.subr.mxu0 0.0
    %2437 = vmatpush1.msra.mxu0 %v2260
    %2438 = vmatprep.subr.mxu0 0.0
    %2439 = vmatpush1.msra.mxu0 %v2261
    %2440 = vmatprep.subr.mxu0 0.0
    %2441 = vmatpush1.msra.mxu0 %v2262
    %2442 = vmatprep.subr.mxu0 0.0
    %2443 = vmatpush1.msra.mxu0 %v2263
    %2444 = vmatprep.subr.mxu0 0.0
    %2445 = vmatpush1.msra.mxu0 %v2264
    %2446 = vmatprep.subr.mxu0 0.0
    %2447 = vmatpush1.msra.mxu0 %v2265
    %2448 = vmatprep.mubr.f32.mxu0 %v2299
    %2449 = vmatmul.mubr.f32.gmra.mrb[0].mxu0 %v2297
    %v2450 = vpop.f32.mrb[0].mxu0
    %v2451 = vadd.f32 %v2381, %v2450
    %v2452 = vpop.f32.mrb[0].mxu0
    %2453 = vdwg.mxu0
    %2454 = vmatprep.subr.mxu0 0.0
    %2455 = vmatpush1.msra.mxu0 %v2266
    %2456 = vmatprep.subr.mxu0 0.0
    %2457 = vmatpush1.msra.mxu0 %v2267
    %2458 = vmatprep.subr.mxu0 0.0
    %2459 = vmatpush1.msra.mxu0 %v2268
    %2460 = vmatprep.subr.mxu0 0.0
    %2461 = vmatpush1.msra.mxu0 %v2269
    %2462 = vmatprep.subr.mxu0 0.0
    %2463 = vmatpush1.msra.mxu0 %v2270
    %2464 = vmatprep.subr.mxu0 0.0
    %2465 = vmatpush1.msra.mxu0 %v2271
    %2466 = vmatprep.subr.mxu0 0.0
    %2467 = vmatpush1.msra.mxu0 %v2272
    %2468 = vmatprep.subr.mxu0 0.0
    %2469 = vmatpush1.msra.mxu0 %v2273
    %2470 = vmatprep.subr.mxu0 0.0
    %2471 = vmatpush1.msra.mxu0 0.0
    %2472 = vmatprep.subr.mxu0 0.0
    %2473 = vmatpush1.msra.mxu0 0.0
    %2474 = vmatprep.subr.mxu0 0.0
    %2475 = vmatpush1.msra.mxu0 0.0
    %2476 = vmatprep.subr.mxu0 0.0
    %2477 = vmatpush1.msra.mxu0 0.0
    %2478 = vmatprep.subr.mxu0 0.0
    %2479 = vmatpush1.msra.mxu0 0.0
    %2480 = vmatprep.subr.mxu0 0.0
    %2481 = vmatpush1.msra.mxu0 0.0
    %2482 = vmatprep.subr.mxu0 0.0
    %2483 = vmatpush1.msra.mxu0 0.0
    %2484 = vmatprep.subr.mxu0 0.0
    %2485 = vmatpush1.msra.mxu0 0.0
    %2486 = vmatprep.subr.mxu0 0.0
    %2487 = vmatpush1.msra.mxu0 0.0
    %2488 = vmatprep.subr.mxu0 0.0
    %2489 = vmatpush1.msra.mxu0 0.0
    %2490 = vmatprep.subr.mxu0 0.0
    %2491 = vmatpush1.msra.mxu0 0.0
    %2492 = vmatprep.subr.mxu0 0.0
    %2493 = vmatpush1.msra.mxu0 0.0
    %2494 = vmatprep.subr.mxu0 0.0
    %2495 = vmatpush1.msra.mxu0 0.0
    %2496 = vmatprep.subr.mxu0 0.0
    %2497 = vmatpush1.msra.mxu0 0.0
    %2498 = vmatprep.subr.mxu0 0.0
    %2499 = vmatpush1.msra.mxu0 0.0
    %2500 = vmatprep.subr.mxu0 0.0
    %2501 = vmatpush1.msra.mxu0 0.0
    %2502 = vmatprep.subr.mxu0 0.0
    %2503 = vmatpush1.msra.mxu0 0.0
    %2504 = vmatprep.subr.mxu0 0.0
    %2505 = vmatpush1.msra.mxu0 0.0
    %2506 = vmatprep.subr.mxu0 0.0
    %2507 = vmatpush1.msra.mxu0 0.0
    %2508 = vmatprep.subr.mxu0 0.0
    %2509 = vmatpush1.msra.mxu0 0.0
    %2510 = vmatprep.subr.mxu0 0.0
    %2511 = vmatpush1.msra.mxu0 0.0
    %2512 = vmatprep.subr.mxu0 0.0
    %2513 = vmatpush1.msra.mxu0 0.0
    %2514 = vmatprep.subr.mxu0 0.0
    %2515 = vmatpush1.msra.mxu0 0.0
    %2516 = vmatprep.subr.mxu0 0.0
    %2517 = vmatpush1.msra.mxu0 0.0
    %2518 = vmatprep.mubr.f32.mxu0 0.0
    %2519 = vmatmul.mubr.f32.gmra.mrb[0].mxu0 %v2312
    %v2520 = vpop.f32.mrb[0].mxu0
    %v2521 = vadd.f32 %v2451, %v2520
    %v2522 = vpop.f32.mrb[0].mxu0
    %2523 = vdwg.mxu0
    %v2524 = vmax.f32 %v2521, 0.0
    %v2525 = vld [vmem:[%s7] sm:$0xff]
    %v2526 = vld [vmem:[%s7 + $0x8] sm:$0xff]
    %v2527 = vld [vmem:[%s7 + $0x10] sm:$0xff]
    %v2528 = vld [vmem:[%s7 + $0x18] sm:$0xff]
    %v2529 = vld [vmem:[%s7 + $0x20] sm:$0xff]
    %v2530 = vld [vmem:[%s7 + $0x28] sm:$0xff]
    %v2531 = vld [vmem:[%s7 + $0x30] sm:$0xff]
    %v2532 = vld [vmem:[%s7 + $0x38] sm:$0xff]
    %v2533 = vld [vmem:[%s7 + $0x40] sm:$0xff]
    %v2534 = vld [vmem:[%s7 + $0x48] sm:$0xff]
    %v2535 = vld [vmem:[%s7 + $0x50] sm:$0xff]
    %v2536 = vld [vmem:[%s7 + $0x58] sm:$0xff]
    %v2537 = vld [vmem:[%s7 + $0x60] sm:$0xff]
    %v2538 = vld [vmem:[%s7 + $0x68] sm:$0xff]
    %v2539 = vld [vmem:[%s7 + $0x70] sm:$0xff]
    %v2540 = vld [vmem:[%s7 + $0x78] sm:$0xff]
    %v2541 = vld [vmem:[%s7 + $0x80] sm:$0xff]
    %v2542 = vld [vmem:[%s7 + $0x88] sm:$0xff]
    %v2543 = vld [vmem:[%s7 + $0x90] sm:$0xff]
    %v2544 = vld [vmem:[%s7 + $0x98] sm:$0xff]
    %v2545 = vld [vmem:[%s7 + $0xa0] sm:$0xff]
    %v2546 = vld [vmem:[%s7 + $0xa8] sm:$0xff]
    %v2547 = vld [vmem:[%s7 + $0xb0] sm:$0xff]
    %v2548 = vld [vmem:[%s7 + $0xb8] sm:$0xff]
    %v2549 = vld [vmem:[%s7 + $0xc0] sm:$0xff]
    %v2550 = vld [vmem:[%s7 + $0xc8] sm:$0xff]
    %v2551 = vld [vmem:[%s7 + $0xd0] sm:$0xff]
    %v2552 = vld [vmem:[%s7 + $0xd8] sm:$0xff]
    %v2553 = vld [vmem:[%s7 + $0xe0] sm:$0xff]
    %v2554 = vld [vmem:[%s7 + $0xe8] sm:$0xff]
    %v2555 = vld [vmem:[%s7 + $0xf0] sm:$0xff]
    %v2556 = vld [vmem:[%s7 + $0xf8] sm:$0xff]
    %v2557 = vld [vmem:[%s8] sm:$0xf]
    %v2559 = vlaneseq
    %v2560 = vshrl.u32 %v2559, 7
    %v2561 = vsub.s32 0, %v2560
    %v2562 = vrot.slane %v2557, %v2561
    %v2563 = vlaneseq
    %v2564 = vshrl.u32 %v2563, 7
    %v2565 = vsub.s32 1, %v2564
    %v2566 = vrot.slane %v2557, %v2565
    %v2567 = vlaneseq
    %v2568 = vshrl.u32 %v2567, 7
    %v2569 = vsub.s32 2, %v2568
    %v2570 = vrot.slane %v2557, %v2569
    %v2571 = vlaneseq
    %v2572 = vshrl.u32 %v2571, 7
    %v2573 = vsub.s32 3, %v2572
    %v2574 = vrot.slane %v2557, %v2573
    %v2580 = vsel %vm2311, %v2524, 0
    %2582 = vmatprep.subr.mxu0 %v2526
    %2583 = vmatpush1.msra.mxu0 %v2525
    %2584 = vmatprep.subr.mxu0 %v2530
    %2585 = vmatpush1.msra.mxu0 %v2529
    %2586 = vmatprep.subr.mxu0 %v2534
    %2587 = vmatpush1.msra.mxu0 %v2533
    %2588 = vmatprep.subr.mxu0 %v2538
    %2589 = vmatpush1.msra.mxu0 %v2537
    %2590 = vmatprep.subr.mxu0 %v2542
    %2591 = vmatpush1.msra.mxu0 %v2541
    %2592 = vmatprep.subr.mxu0 %v2546
    %2593 = vmatpush1.msra.mxu0 %v2545
    %2594 = vmatprep.subr.mxu0 %v2550
    %2595 = vmatpush1.msra.mxu0 %v2549
    %2596 = vmatprep.subr.mxu0 %v2554
    %2597 = vmatpush1.msra.mxu0 %v2553
    %2598 = vmatprep.subr.mxu0 0.0
    %2599 = vmatpush1.msra.mxu0 0.0
    %2600 = vmatprep.subr.mxu0 0.0
    %2601 = vmatpush1.msra.mxu0 0.0
    %2602 = vmatprep.subr.mxu0 0.0
    %2603 = vmatpush1.msra.mxu0 0.0
    %2604 = vmatprep.subr.mxu0 0.0
    %2605 = vmatpush1.msra.mxu0 0.0
    %2606 = vmatprep.subr.mxu0 0.0
    %2607 = vmatpush1.msra.mxu0 0.0
    %2608 = vmatprep.subr.mxu0 0.0
    %2609 = vmatpush1.msra.mxu0 0.0
    %2610 = vmatprep.subr.mxu0 0.0
    %2611 = vmatpush1.msra.mxu0 0.0
    %2612 = vmatprep.subr.mxu0 0.0
    %2613 = vmatpush1.msra.mxu0 0.0
    %2614 = vmatprep.subr.mxu0 0.0
    %2615 = vmatpush1.msra.mxu0 0.0
    %2616 = vmatprep.subr.mxu0 0.0
    %2617 = vmatpush1.msra.mxu0 0.0
    %2618 = vmatprep.subr.mxu0 0.0
    %2619 = vmatpush1.msra.mxu0 0.0
    %2620 = vmatprep.subr.mxu0 0.0
    %2621 = vmatpush1.msra.mxu0 0.0
    %2622 = vmatprep.subr.mxu0 0.0
    %2623 = vmatpush1.msra.mxu0 0.0
    %2624 = vmatprep.subr.mxu0 0.0
    %2625 = vmatpush1.msra.mxu0 0.0
    %2626 = vmatprep.subr.mxu0 0.0
    %2627 = vmatpush1.msra.mxu0 0.0
    %2628 = vmatprep.subr.mxu0 0.0
    %2629 = vmatpush1.msra.mxu0 0.0
    %2630 = vmatprep.subr.mxu0 0.0
    %2631 = vmatpush1.msra.mxu0 0.0
    %2632 = vmatprep.subr.mxu0 0.0
    %2633 = vmatpush1.msra.mxu0 0.0
    %2634 = vmatprep.subr.mxu0 0.0
    %2635 = vmatpush1.msra.mxu0 0.0
    %2636 = vmatprep.subr.mxu0 0.0
    %2637 = vmatpush1.msra.mxu0 0.0
    %2638 = vmatprep.subr.mxu0 0.0
    %2639 = vmatpush1.msra.mxu0 0.0
    %2640 = vmatprep.subr.mxu0 0.0
    %2641 = vmatpush1.msra.mxu0 0.0
    %2642 = vmatprep.subr.mxu0 0.0
    %2643 = vmatpush1.msra.mxu0 0.0
    %2644 = vmatprep.subr.mxu0 0.0
    %2645 = vmatpush1.msra.mxu0 0.0
    %2646 = vmatprep.mubr.f32.mxu0 0.0
    %2647 = vmatmul.mubr.f32.gmra.mrb[0].mxu0 %v2580
    %v2648 = vpop.f32.mrb[0].mxu0
    %v2649 = vadd.f32 %v2562, %v2648
    %v2650 = vpop.f32.mrb[0].mxu0
    %v2651 = vadd.f32 %v2566, %v2650
    %2652 = vdwg.mxu0
    %2653 = vmatprep.subr.mxu0 %v2528
    %2654 = vmatpush1.msra.mxu0 %v2527
    %2655 = vmatprep.subr.mxu0 %v2532
    %2656 = vmatpush1.msra.mxu0 %v2531
    %2657 = vmatprep.subr.mxu0 %v2536
    %2658 = vmatpush1.msra.mxu0 %v2535
    %2659 = vmatprep.subr.mxu0 %v2540
    %2660 = vmatpush1.msra.mxu0 %v2539
    %2661 = vmatprep.subr.mxu0 %v2544
    %2662 = vmatpush1.msra.mxu0 %v2543
    %2663 = vmatprep.subr.mxu0 %v2548
    %2664 = vmatpush1.msra.mxu0 %v2547
    %2665 = vmatprep.subr.mxu0 %v2552
    %2666 = vmatpush1.msra.mxu0 %v2551
    %2667 = vmatprep.subr.mxu0 %v2556
    %2668 = vmatpush1.msra.mxu0 %v2555
    %2669 = vmatprep.subr.mxu0 0.0
    %2670 = vmatpush1.msra.mxu0 0.0
    %2671 = vmatprep.subr.mxu0 0.0
    %2672 = vmatpush1.msra.mxu0 0.0
    %2673 = vmatprep.subr.mxu0 0.0
    %2674 = vmatpush1.msra.mxu0 0.0
    %2675 = vmatprep.subr.mxu0 0.0
    %2676 = vmatpush1.msra.mxu0 0.0
    %2677 = vmatprep.subr.mxu0 0.0
    %2678 = vmatpush1.msra.mxu0 0.0
    %2679 = vmatprep.subr.mxu0 0.0
    %2680 = vmatpush1.msra.mxu0 0.0
    %2681 = vmatprep.subr.mxu0 0.0
    %2682 = vmatpush1.msra.mxu0 0.0
    %2683 = vmatprep.subr.mxu0 0.0
    %2684 = vmatpush1.msra.mxu0 0.0
    %2685 = vmatprep.subr.mxu0 0.0
    %2686 = vmatpush1.msra.mxu0 0.0
    %2687 = vmatprep.subr.mxu0 0.0
    %2688 = vmatpush1.msra.mxu0 0.0
    %2689 = vmatprep.subr.mxu0 0.0
    %2690 = vmatpush1.msra.mxu0 0.0
    %2691 = vmatprep.subr.mxu0 0.0
    %2692 = vmatpush1.msra.mxu0 0.0
    %2693 = vmatprep.subr.mxu0 0.0
    %2694 = vmatpush1.msra.mxu0 0.0
    %2695 = vmatprep.subr.mxu0 0.0
    %2696 = vmatpush1.msra.mxu0 0.0
    %2697 = vmatprep.subr.mxu0 0.0
    %2698 = vmatpush1.msra.mxu0 0.0
    %2699 = vmatprep.subr.mxu0 0.0
    %2700 = vmatpush1.msra.mxu0 0.0
    %2701 = vmatprep.subr.mxu0 0.0
    %2702 = vmatpush1.msra.mxu0 0.0
    %2703 = vmatprep.subr.mxu0 0.0
    %2704 = vmatpush1.msra.mxu0 0.0
    %2705 = vmatprep.subr.mxu0 0.0
    %2706 = vmatpush1.msra.mxu0 0.0
    %2707 = vmatprep.subr.mxu0 0.0
    %2708 = vmatpush1.msra.mxu0 0.0
    %2709 = vmatprep.subr.mxu0 0.0
    %2710 = vmatpush1.msra.mxu0 0.0
    %2711 = vmatprep.subr.mxu0 0.0
    %2712 = vmatpush1.msra.mxu0 0.0
    %2713 = vmatprep.subr.mxu0 0.0
    %2714 = vmatpush1.msra.mxu0 0.0
    %2715 = vmatprep.subr.mxu0 0.0
    %2716 = vmatpush1.msra.mxu0 0.0
    %2717 = vmatprep.mubr.f32.mxu0 0.0
    %2718 = vmatmul.mubr.f32.gmra.mrb[0].mxu0 %v2580
    %v2719 = vpop.f32.mrb[0].mxu0
    %v2720 = vadd.f32 %v2570, %v2719
    %v2721 = vpop.f32.mrb[0].mxu0
    %v2722 = vadd.f32 %v2574, %v2721
    %2723 = vdwg.mxu0
    %v2724 = vmax.f32 %v2649, 0.0
    %v2725 = vmax.f32 %v2651, 0.0
    %v2726 = vmax.f32 %v2720, 0.0
    %v2727 = vmax.f32 %v2722, 0.0
    %v2728 = vld [vmem:[%s9] sm:$0xff]
    %v2729 = vld [vmem:[%s9 + $0x8] sm:$0xff]
    %v2730 = vld [vmem:[%s9 + $0x10] sm:$0xff]
    %v2731 = vld [vmem:[%s9 + $0x18] sm:$0xff]
    %v2732 = vld [vmem:[%s9 + $0x20] sm:$0xff]
    %v2733 = vld [vmem:[%s9 + $0x28] sm:$0xff]
    %v2734 = vld [vmem:[%s9 + $0x30] sm:$0xff]
    %v2735 = vld [vmem:[%s9 + $0x38] sm:$0xff]
    %v2736 = vld [vmem:[%s9 + $0x40] sm:$0xff]
    %v2737 = vld [vmem:[%s9 + $0x48] sm:$0xff]
    %v2738 = vld [vmem:[%s9 + $0x50] sm:$0xff]
    %v2739 = vld [vmem:[%s9 + $0x58] sm:$0xff]
    %v2740 = vld [vmem:[%s9 + $0x60] sm:$0xff]
    %v2741 = vld [vmem:[%s9 + $0x68] sm:$0xff]
    %v2742 = vld [vmem:[%s9 + $0x70] sm:$0xff]
    %v2743 = vld [vmem:[%s9 + $0x78] sm:$0xff]
    %v2744 = vld [vmem:[%s9 + $0x80] sm:$0xff]
    %v2745 = vld [vmem:[%s9 + $0x88] sm:$0xff]
    %v2746 = vld [vmem:[%s9 + $0x90] sm:$0xff]
    %v2747 = vld [vmem:[%s9 + $0x98] sm:$0xff]
    %v2748 = vld [vmem:[%s9 + $0xa0] sm:$0xff]
    %v2749 = vld [vmem:[%s9 + $0xa8] sm:$0xff]
    %v2750 = vld [vmem:[%s9 + $0xb0] sm:$0xff]
    %v2751 = vld [vmem:[%s9 + $0xb8] sm:$0xff]
    %v2752 = vld [vmem:[%s9 + $0xc0] sm:$0xff]
    %v2753 = vld [vmem:[%s9 + $0xc8] sm:$0xff]
    %v2754 = vld [vmem:[%s9 + $0xd0] sm:$0xff]
    %v2755 = vld [vmem:[%s9 + $0xd8] sm:$0xff]
    %v2756 = vld [vmem:[%s9 + $0xe0] sm:$0xff]
    %v2757 = vld [vmem:[%s9 + $0xe8] sm:$0xff]
    %v2758 = vld [vmem:[%s9 + $0xf0] sm:$0xff]
    %v2759 = vld [vmem:[%s9 + $0xf8] sm:$0xff]
    %v2760 = vld [vmem:[%s9 + $0x100] sm:$0xff]
    %v2761 = vld [vmem:[%s9 + $0x108] sm:$0xff]
    %v2762 = vld [vmem:[%s9 + $0x110] sm:$0xff]
    %v2763 = vld [vmem:[%s9 + $0x118] sm:$0xff]
    %v2764 = vld [vmem:[%s9 + $0x120] sm:$0xff]
    %v2765 = vld [vmem:[%s9 + $0x128] sm:$0xff]
    %v2766 = vld [vmem:[%s9 + $0x130] sm:$0xff]
    %v2767 = vld [vmem:[%s9 + $0x138] sm:$0xff]
    %v2768 = vld [vmem:[%s9 + $0x140] sm:$0xff]
    %v2769 = vld [vmem:[%s9 + $0x148] sm:$0xff]
    %v2770 = vld [vmem:[%s9 + $0x150] sm:$0xff]
    %v2771 = vld [vmem:[%s9 + $0x158] sm:$0xff]
    %v2772 = vld [vmem:[%s9 + $0x160] sm:$0xff]
    %v2773 = vld [vmem:[%s9 + $0x168] sm:$0xff]
    %v2774 = vld [vmem:[%s9 + $0x170] sm:$0xff]
    %v2775 = vld [vmem:[%s9 + $0x178] sm:$0xff]
    %v2776 = vld [vmem:[%s9 + $0x180] sm:$0xff]
    %v2777 = vld [vmem:[%s9 + $0x188] sm:$0xff]
    %v2778 = vld [vmem:[%s9 + $0x190] sm:$0xff]
    %v2779 = vld [vmem:[%s9 + $0x198] sm:$0xff]
    %v2780 = vld [vmem:[%s9 + $0x1a0] sm:$0xff]
    %v2781 = vld [vmem:[%s9 + $0x1a8] sm:$0xff]
    %v2782 = vld [vmem:[%s9 + $0x1b0] sm:$0xff]
    %v2783 = vld [vmem:[%s9 + $0x1b8] sm:$0xff]
    %v2784 = vld [vmem:[%s9 + $0x1c0] sm:$0xff]
    %v2785 = vld [vmem:[%s9 + $0x1c8] sm:$0xff]
    %v2786 = vld [vmem:[%s9 + $0x1d0] sm:$0xff]
    %v2787 = vld [vmem:[%s9 + $0x1d8] sm:$0xff]
    %v2788 = vld [vmem:[%s9 + $0x1e0] sm:$0xff]
    %v2789 = vld [vmem:[%s9 + $0x1e8] sm:$0xff]
    %v2790 = vld [vmem:[%s9 + $0x1f0] sm:$0xff]
    %v2791 = vld [vmem:[%s9 + $0x1f8] sm:$0xff]
    %v2792 = vld [vmem:[%s10] sm:$0x1]
    %v2794 = vlaneseq
    %v2795 = vshrl.u32 %v2794, 7
    %v2796 = vsub.s32 0, %v2795
    %v2797 = vrot.slane %v2792, %v2796
    %2799 = vmatprep.subr.mxu0 0.0
    %2800 = vmatpush1.msra.mxu0 %v2728
    %2801 = vmatprep.subr.mxu0 0.0
    %2802 = vmatpush1.msra.mxu0 %v2729
    %2803 = vmatprep.subr.mxu0 0.0
    %2804 = vmatpush1.msra.mxu0 %v2730
    %2805 = vmatprep.subr.mxu0 0.0
    %2806 = vmatpush1.msra.mxu0 %v2731
    %2807 = vmatprep.subr.mxu0 0.0
    %2808 = vmatpush1.msra.mxu0 %v2732
    %2809 = vmatprep.subr.mxu0 0.0
    %2810 = vmatpush1.msra.mxu0 %v2733
    %2811 = vmatprep.subr.mxu0 0.0
    %2812 = vmatpush1.msra.mxu0 %v2734
    %2813 = vmatprep.subr.mxu0 0.0
    %2814 = vmatpush1.msra.mxu0 %v2735
    %2815 = vmatprep.subr.mxu0 0.0
    %2816 = vmatpush1.msra.mxu0 %v2736
    %2817 = vmatprep.subr.mxu0 0.0
    %2818 = vmatpush1.msra.mxu0 %v2737
    %2819 = vmatprep.subr.mxu0 0.0
    %2820 = vmatpush1.msra.mxu0 %v2738
    %2821 = vmatprep.subr.mxu0 0.0
    %2822 = vmatpush1.msra.mxu0 %v2739
    %2823 = vmatprep.subr.mxu0 0.0
    %2824 = vmatpush1.msra.mxu0 %v2740
    %2825 = vmatprep.subr.mxu0 0.0
    %2826 = vmatpush1.msra.mxu0 %v2741
    %2827 = vmatprep.subr.mxu0 0.0
    %2828 = vmatpush1.msra.mxu0 %v2742
    %2829 = vmatprep.subr.mxu0 0.0
    %2830 = vmatpush1.msra.mxu0 %v2743
    %2831 = vmatprep.subr.mxu0 0.0
    %2832 = vmatpush1.msra.mxu0 %v2744
    %2833 = vmatprep.subr.mxu0 0.0
    %2834 = vmatpush1.msra.mxu0 %v2745
    %2835 = vmatprep.subr.mxu0 0.0
    %2836 = vmatpush1.msra.mxu0 %v2746
    %2837 = vmatprep.subr.mxu0 0.0
    %2838 = vmatpush1.msra.mxu0 %v2747
    %2839 = vmatprep.subr.mxu0 0.0
    %2840 = vmatpush1.msra.mxu0 %v2748
    %2841 = vmatprep.subr.mxu0 0.0
    %2842 = vmatpush1.msra.mxu0 %v2749
    %2843 = vmatprep.subr.mxu0 0.0
    %2844 = vmatpush1.msra.mxu0 %v2750
    %2845 = vmatprep.subr.mxu0 0.0
    %2846 = vmatpush1.msra.mxu0 %v2751
    %2847 = vmatprep.subr.mxu0 0.0
    %2848 = vmatpush1.msra.mxu0 %v2752
    %2849 = vmatprep.subr.mxu0 0.0
    %2850 = vmatpush1.msra.mxu0 %v2753
    %2851 = vmatprep.subr.mxu0 0.0
    %2852 = vmatpush1.msra.mxu0 %v2754
    %2853 = vmatprep.subr.mxu0 0.0
    %2854 = vmatpush1.msra.mxu0 %v2755
    %2855 = vmatprep.subr.mxu0 0.0
    %2856 = vmatpush1.msra.mxu0 %v2756
    %2857 = vmatprep.subr.mxu0 0.0
    %2858 = vmatpush1.msra.mxu0 %v2757
    %2859 = vmatprep.subr.mxu0 0.0
    %2860 = vmatpush1.msra.mxu0 %v2758
    %2861 = vmatprep.subr.mxu0 0.0
    %2862 = vmatpush1.msra.mxu0 %v2759
    %2863 = vmatprep.mubr.f32.mxu0 %v2725
    %2864 = vmatmul.mubr.f32.gmra.mrb[0].mxu0 %v2724
    %v2865 = vpop.f32.mrb[0].mxu0
    %v2866 = vadd.f32 %v2797, %v2865
    %v2867 = vpop.f32.mrb[0].mxu0
    %2868 = vdwg.mxu0
    %2869 = vmatprep.subr.mxu0 0.0
    %2870 = vmatpush1.msra.mxu0 %v2760
    %2871 = vmatprep.subr.mxu0 0.0
    %2872 = vmatpush1.msra.mxu0 %v2761
    %2873 = vmatprep.subr.mxu0 0.0
    %2874 = vmatpush1.msra.mxu0 %v2762
    %2875 = vmatprep.subr.mxu0 0.0
    %2876 = vmatpush1.msra.mxu0 %v2763
    %2877 = vmatprep.subr.mxu0 0.0
    %2878 = vmatpush1.msra.mxu0 %v2764
    %2879 = vmatprep.subr.mxu0 0.0
    %2880 = vmatpush1.msra.mxu0 %v2765
    %2881 = vmatprep.subr.mxu0 0.0
    %2882 = vmatpush1.msra.mxu0 %v2766
    %2883 = vmatprep.subr.mxu0 0.0
    %2884 = vmatpush1.msra.mxu0 %v2767
    %2885 = vmatprep.subr.mxu0 0.0
    %2886 = vmatpush1.msra.mxu0 %v2768
    %2887 = vmatprep.subr.mxu0 0.0
    %2888 = vmatpush1.msra.mxu0 %v2769
    %2889 = vmatprep.subr.mxu0 0.0
    %2890 = vmatpush1.msra.mxu0 %v2770
    %2891 = vmatprep.subr.mxu0 0.0
    %2892 = vmatpush1.msra.mxu0 %v2771
    %2893 = vmatprep.subr.mxu0 0.0
    %2894 = vmatpush1.msra.mxu0 %v2772
    %2895 = vmatprep.subr.mxu0 0.0
    %2896 = vmatpush1.msra.mxu0 %v2773
    %2897 = vmatprep.subr.mxu0 0.0
    %2898 = vmatpush1.msra.mxu0 %v2774
    %2899 = vmatprep.subr.mxu0 0.0
    %2900 = vmatpush1.msra.mxu0 %v2775
    %2901 = vmatprep.subr.mxu0 0.0
    %2902 = vmatpush1.msra.mxu0 %v2776
    %2903 = vmatprep.subr.mxu0 0.0
    %2904 = vmatpush1.msra.mxu0 %v2777
    %2905 = vmatprep.subr.mxu0 0.0
    %2906 = vmatpush1.msra.mxu0 %v2778
    %2907 = vmatprep.subr.mxu0 0.0
    %2908 = vmatpush1.msra.mxu0 %v2779
    %2909 = vmatprep.subr.mxu0 0.0
    %2910 = vmatpush1.msra.mxu0 %v2780
    %2911 = vmatprep.subr.mxu0 0.0
    %2912 = vmatpush1.msra.mxu0 %v2781
    %2913 = vmatprep.subr.mxu0 0.0
    %2914 = vmatpush1.msra.mxu0 %v2782
    %2915 = vmatprep.subr.mxu0 0.0
    %2916 = vmatpush1.msra.mxu0 %v2783
    %2917 = vmatprep.subr.mxu0 0.0
    %2918 = vmatpush1.msra.mxu0 %v2784
    %2919 = vmatprep.subr.mxu0 0.0
    %2920 = vmatpush1.msra.mxu0 %v2785
    %2921 = vmatprep.subr.mxu0 0.0
    %2922 = vmatpush1.msra.mxu0 %v2786
    %2923 = vmatprep.subr.mxu0 0.0
    %2924 = vmatpush1.msra.mxu0 %v2787
    %2925 = vmatprep.subr.mxu0 0.0
    %2926 = vmatpush1.msra.mxu0 %v2788
    %2927 = vmatprep.subr.mxu0 0.0
    %2928 = vmatpush1.msra.mxu0 %v2789
    %2929 = vmatprep.subr.mxu0 0.0
    %2930 = vmatpush1.msra.mxu0 %v2790
    %2931 = vmatprep.subr.mxu0 0.0
    %2932 = vmatpush1.msra.mxu0 %v2791
    %2933 = vmatprep.mubr.f32.mxu0 %v2727
    %2934 = vmatmul.mubr.f32.gmra.mrb[0].mxu0 %v2726
    %v2935 = vpop.f32.mrb[0].mxu0
    %v2936 = vadd.f32 %v2866, %v2935
    %v2937 = vpop.f32.mrb[0].mxu0
    %2938 = vdwg.mxu0
    %2939 = vst [vmem:[#allocation3] sm:$0x3] %v2936
    // Predicated region
    $region46: #{dqn_forward_fused.1} parent=1 // pred_check
      _
    $region47: #{dqn_forward_fused.1} parent=1 // pred_check_branch
      %2941 = sbr.rel (0) target = $region49
    $region48: #{dqn_forward_fused.1} parent=1 // pred_region
      %s2943 = ssub.s32 32, 32
      %2944 = vsyncadd [#allocation4], %s2943
      %s2946 = sshll.u32 [#allocation3], 4
      %s2947 = int_to_ptr.vmem [resolvable:$true] %s2946
      %2949 = dma.vmem_to_hbm [thread:$0]  %s2947, 32, %s11, [#allocation4]
    $region49: #{dqn_forward_fused.1} parent=1 // pred_fallthru
      _
    // Predicated region
    $region50: #{dqn_forward_fused.1} parent=1 // pred_check
      _
    $region51: #{dqn_forward_fused.1} parent=1 // pred_check_branch
      %2951 = sbr.rel (0) target = $region53
    $region52: #{dqn_forward_fused.1} parent=1 // pred_region
      %2952 = dma.done [#allocation4], 32
    $region53: #{dqn_forward_fused.1} parent=1 // pred_fallthru
      _
    %2953 = vsyncpa [#allocation4], 1

</llo_original>
